<compile_context>
chip_gen: v7x
topology: tpu7x:2x2x1
jax: 0.10.0
libtpu: 0.0.40
codegen_flags: <defaults>
</compile_context>

<pallas_src>
import numpy as np

import jax
import jax.numpy as jnp
from jax import lax
from jax.experimental import pallas as pl
from jax.experimental.pallas import tpu as pltpu

# Hyper-parameters fixed by the PyTorch module definition.
K1 = 6       # conv       = Conv1d(C, 1, 6)
S1 = 3       # maxpool    = MaxPool1d(3, 3)
K2 = 4       # conv2      = Conv1d(1, 1, 4)
S2 = 2       # maxpool2   = MaxPool1d(2, 2)
KC = 6       # conv_class = Conv1d(1, n_classes, 6)
KB = 10      # convBig    = Conv1d(C, 2C, 10, stride=10, groups=C)
T100 = 50    # 100 Hz sample length (the length the classifier head is built for)
T1000 = 500  # 1000 Hz sample length (embedding path)
LANE = 128

_HI = lax.Precision.HIGHEST   # Mosaic dot lowering supports DEFAULT / HIGHEST only.


def _round_up(x, m):
    return ((x + m - 1) // m) * m


def _head_dims(t1):
    l1 = t1 - K1 + 1               # conv output length
    sm1 = l1 - S1 + 1              # sliding-max-3 length
    p1 = (l1 - S1) // S1 + 1       # maxpool(3,3) output length
    l2 = p1 - K2 + 1               # conv2 output length
    sm2 = l2 - S2 + 1              # sliding-max-2 length
    p2 = (l2 - S2) // S2 + 1       # maxpool2(2,2) output length
    f = p2 - KC + 1                # conv_class output length
    assert f >= 1, "input too short for the FullyConv_Embedding head"
    return dict(L1=l1, SM1=sm1, P1=p1, L2=l2, SM2=sm2, P2=p2, F=f)


_D = _head_dims(T100)


# ---------------------------------------------------------------------------
# Kernels
# ---------------------------------------------------------------------------
def _classifier_tail(h1, conv2_mat, cls_mat, cls_bias):
    """conv -> maxpool -> conv2 -> maxpool2 -> conv_class, batched over sublanes.

    h1: (TB, L1) first-conv output (all biases folded into cls_bias).  Each maxpool is
    a sliding max over contiguous lane slices; its stride-k downsample is folded into
    the next weight matrix, so each conv is one MXU matmul with M = TB.
    """
    sm1, sm2 = _D['SM1'], _D['SM2']
    m1 = h1[:, 0:sm1]
    for s in range(1, S1):
        m1 = jnp.maximum(m1, h1[:, s:s + sm1])
    h2 = jnp.dot(m1, conv2_mat, precision=_HI, preferred_element_type=jnp.float32)
    m2 = h2[:, 0:sm2]
    for s in range(1, S2):
        m2 = jnp.maximum(m2, h2[:, s:s + sm2])
    return jnp.dot(m2, cls_mat, precision=_HI,
                   preferred_element_type=jnp.float32) + cls_bias


def _net_kernel(x_ref, w1_ref, conv2_ref, cls_ref, clsb_ref, out_ref):
    """100 Hz path.  x block: (TB, C*50); first conv = one im2col matmul (M = TB)."""
    h1 = jnp.dot(x_ref[...], w1_ref[...], precision=_HI,
                 preferred_element_type=jnp.float32)
    out_ref[...] = _classifier_tail(h1, conv2_ref[...], cls_ref[...], clsb_ref[...])


def _embed_kernel(xt_ref, wb0_ref, wb1_ref, bb0_ref, bb1_ref,
                  w1e0_ref, w1e1_ref, conv2_ref, cls_ref, clsb_ref, out_ref):
    """1000 Hz path.  xt block: (KB, TB, C*50) with xt[k, b, c*50+p] = x[b, c, 10p+k]."""

    def branch(wb_ref, bb_ref, w1e_ref):
        # Decimated depthwise convBig (stride == kernel == 10): only the 50 kept
        # outputs are ever computed (KB slab FMAs, no shifted slices).
        acc = xt_ref[0] * wb_ref[0:1, :] + bb_ref[...]
        for k in range(1, KB):
            acc = acc + xt_ref[k] * wb_ref[k:k + 1, :]
        # Softsign with the reciprocal on the EUP slot.
        s = acc * pl.reciprocal(1.0 + jnp.abs(acc), approx=True)
        # The (B,2C,50)->(B,2,C,50) view, the 1x1 Conv2d mix (a0/a1) and the first
        # classifier conv are all folded into one host-built matrix per filter bank.
        return jnp.dot(s, w1e_ref[...], precision=_HI,
                       preferred_element_type=jnp.float32)

    # Filter bank 0 is produced and fully consumed before filter bank 1 is built.
    h1 = branch(wb0_ref, bb0_ref, w1e0_ref) + branch(wb1_ref, bb1_ref, w1e1_ref)
    out_ref[...] = _classifier_tail(h1, conv2_ref[...], cls_ref[...], clsb_ref[...])


# ---------------------------------------------------------------------------
# One-time parameter packing (host-side numpy; no per-call transposes)
# ---------------------------------------------------------------------------
def prepare_params(params):
    f32 = np.float32
    w1 = np.asarray(params['w1'], f32)[0]            # (C, K1)
    b1 = float(np.asarray(params['b1'], f32)[0])
    w2 = np.asarray(params['w2'], f32)[0, 0]         # (K2,)
    b2 = float(np.asarray(params['b2'], f32)[0])
    wc = np.asarray(params['wc'], f32)                # (NCLS, 1, KC)
    bc = np.asarray(params['bc'], f32)                # (NCLS,)
    wB = np.asarray(params['wB'], f32)[:, 0, :]       # (2C, KB)
    bB = np.asarray(params['bB'], f32)                # (2C,)
    w2d = np.asarray(params['w2d'], f32)
    a0, a1 = float(w2d[0, 0, 0, 0]), float(w2d[0, 1, 0, 0])
    b2d = float(np.asarray(params['b2d'], f32)[0])

    C = w1.shape[0]
    NCLS = wc.shape[0]
    L1, SM1, L2, SM2, F = _D['L1'], _D['SM1'], _D['L2'], _D['SM2'], _D['F']
    Tn = T100
    taus = np.arange(L1)

    # First classifier conv as an im2col band matrix:
    #   h1[tau] = sum_{c,k} w1[c,k] * x[c, tau+k],  x flattened as feature c*50+t.
    w1_mat = np.zeros((C * Tn, L1), f32)
    for c in range(C):
        for k in range(K1):
            w1_mat[c * Tn + taus + k, taus] += w1[c, k]

    # Embed path: coefficient of softsign(filter-j output of input channel c) in h1.
    #   g[m,t] = a0*softsign(y[m,t]) + a1*softsign(y[C+m,t]) + b2d,
    #   y[u]   = filter u%2 of input channel u//2 (grouped-conv channel order).
    w1e = [np.zeros((C * Tn, L1), f32) for _ in range(2)]
    for m in range(C):
        for coef, u in ((a0, m), (a1, C + m)):
            j, c = u % 2, u // 2
            for k in range(K1):
                w1e[j][c * Tn + taus + k, taus] += coef * w1[m, k]

    # conv2 with the maxpool(3,3) stride-3 downsample folded in: (SM1, L2).
    conv2_mat = np.zeros((SM1, L2), f32)
    t2 = np.arange(L2)
    for k in range(K2):
        conv2_mat[S1 * (t2 + k), t2] += w2[k]

    # conv_class with the maxpool2(2,2) stride-2 downsample folded in, lane padded to
    # a 128-wide slab so the output store is unmasked.
    out_cols = NCLS * F
    out_pad = _round_up(out_cols, LANE)
    cls_mat = np.zeros((SM2, out_pad), f32)
    fs = np.arange(F)
    for n in range(NCLS):
        for j in range(KC):
            cls_mat[S2 * (fs + j), n * F + fs] += wc[n, 0, j]

    # All biases folded into one post-matmul row (constants commute with max):
    #   out[n,f] += bc[n] + (h1_const * sum(w2) + b2) * sum_j wc[n,0,j]
    sum_w2 = float(w2.sum())
    sum_wc = wc[:, 0, :].sum(axis=1)                  # (NCLS,)

    def head_bias(h1_const):
        bias = np.zeros((1, out_pad), f32)
        c2 = h1_const * sum_w2 + b2
        for n in range(NCLS):
            bias[0, n * F:(n + 1) * F] = bc[n] + c2 * sum_wc[n]
        return bias

    clsb_net = head_bias(b1)
    clsb_emb = head_bias(b1 + b2d * float(w1.sum()))

    # convBig weights / biases broadcast to the decimated feature layout (c*50+p).
    wb_exp = np.zeros((2, KB, C * Tn), f32)
    bb_row = np.zeros((2, 1, C * Tn), f32)
    for c in range(C):
        for j in range(2):
            wb_exp[j, :, c * Tn:(c + 1) * Tn] = wB[2 * c + j][:, None]
            bb_row[j, 0, c * Tn:(c + 1) * Tn] = bB[2 * c + j]

    jx = jnp.asarray
    return dict(C=C, NCLS=NCLS, F=F, out_cols=out_cols, out_pad=out_pad,
                w1_mat=jx(w1_mat), w1e0=jx(w1e[0]), w1e1=jx(w1e[1]),
                conv2_mat=jx(conv2_mat), cls_mat=jx(cls_mat),
                clsb_net=jx(clsb_net), clsb_emb=jx(clsb_emb),
                wb0=jx(wb_exp[0]), wb1=jx(wb_exp[1]),
                bb0=jx(bb_row[0]), bb1=jx(bb_row[1]))


# ---------------------------------------------------------------------------
# Forward wrapper
# ---------------------------------------------------------------------------
def _pick_tb(b, cap):
    """Batch tile = M / sublane dim of every matmul: a multiple of 8 sublanes, capped
    for VMEM, and sized so the grid keeps >=2 parallel steps when the batch allows
    (v7x has two TensorCores)."""
    cap = max(8, (cap // 8) * 8)
    return int(min(cap, _round_up(max(1, (b + 1) // 2), 8)))


def _full_spec(a):
    nd = a.ndim
    return pl.BlockSpec(a.shape, lambda i, _nd=nd: (0,) * _nd)


def fully_conv_embedding_forward(x, pp, *, tb_net=256, tb_emb=64):
    """Forward pass.  x: (B, C, 50) for 100 Hz samples, (B, C, 500) for 1000 Hz.

    tb_net / tb_emb cap the batch tile.  The default of 64 for the 1000 Hz path keeps
    the double-buffered (KB, TB, C*50) input block inside v5e's 16 MiB scoped-VMEM
    default; on v6e (128 MiB) it can be raised to 128-256 for fuller MXU rows, on v7x
    (64 MiB physical) keep it <=128.
    """
    B, C, T = x.shape
    assert C == pp['C']
    x = x.astype(jnp.float32)
    out_pad = pp['out_pad']
    ct = C * T100

    if T == T1000:
        tb = _pick_tb(B, tb_emb)
        bpad = _round_up(B, tb)
        # Expose the stride-10 phase axis once, wrapper side:
        #   xt[k, b, c*50 + p] = x[b, c, 10p + k]
        xt = x.reshape(B, C, T100, KB).transpose(3, 0, 1, 2).reshape(KB, B, ct)
        if bpad != B:
            xt = jnp.pad(xt, ((0, 0), (0, bpad - B), (0, 0)))
        kern = _embed_kernel
        args = (xt, pp['wb0'], pp['wb1'], pp['bb0'], pp['bb1'],
                pp['w1e0'], pp['w1e1'], pp['conv2_mat'], pp['cls_mat'], pp['clsb_emb'])
        in_specs = [pl.BlockSpec((KB, tb, ct), lambda i: (0, i, 0))]
        in_specs += [_full_spec(a) for a in args[1:]]
    elif T == T100:
        tb = _pick_tb(B, tb_net)
        bpad = _round_up(B, tb)
        xf = x.reshape(B, ct)
        if bpad != B:
            xf = jnp.pad(xf, ((0, bpad - B), (0, 0)))
        kern = _net_kernel
        args = (xf, pp['w1_mat'], pp['conv2_mat'], pp['cls_mat'], pp['clsb_net'])
        in_specs = [pl.BlockSpec((tb, ct), lambda i: (i, 0))]
        in_specs += [_full_spec(a) for a in args[1:]]
    else:
        raise ValueError("FullyConv_Embedding expects 50-point (100 Hz) or "
                         "500-point (1000 Hz) inputs")

    out = pl.pallas_call(
        kern,
        out_shape=jax.ShapeDtypeStruct((bpad, out_pad), jnp.float32),
        grid=(bpad // tb,),
        in_specs=in_specs,
        out_specs=pl.BlockSpec((tb, out_pad), lambda i: (i, 0)),
        compiler_params=pltpu.CompilerParams(dimension_semantics=("parallel",)),
    )(*args)

    out = out[:B, :pp['out_cols']].reshape(B, pp['NCLS'], pp['F'])
    return jnp.squeeze(out)   # matches the PyTorch x.squeeze_()


# ---------------------------------------------------------------------------
# Pure-JAX reference (mirrors the PyTorch module exactly)
# ---------------------------------------------------------------------------
def reference_forward(x, params):
    f32 = jnp.float32
    x = x.astype(f32)
    B, C, T = x.shape
    dn = ('NCW', 'OIW', 'NCW')
    hp = lax.Precision.HIGHEST
    if T == T1000:
        y = lax.conv_general_dilated(x, params['wB'].astype(f32), (KB,), 'VALID',
                                     dimension_numbers=dn, feature_group_count=C,
                                     precision=hp)
        y = y + params['bB'].astype(f32)[None, :, None]            # (B, 2C, 50)
        z = y.reshape(B, 2, C, y.shape[-1])
        s = z / (1.0 + jnp.abs(z))                                 # Softsign
        w2d = params['w2d'].astype(f32)
        x = (w2d[0, 0, 0, 0] * s[:, 0] + w2d[0, 1, 0, 0] * s[:, 1]
             + params['b2d'].astype(f32)[0])                       # (B, C, 50)
    h = lax.conv_general_dilated(x, params['w1'].astype(f32), (1,), 'VALID',
                                 dimension_numbers=dn, precision=hp)
    h = h + params['b1'].astype(f32)[None, :, None]
    p1 = (h.shape[-1] - S1) // S1 + 1
    h = h[:, :, :p1 * S1].reshape(B, 1, p1, S1).max(axis=-1)
    h = lax.conv_general_dilated(h, params['w2'].astype(f32), (1,), 'VALID',
                                 dimension_numbers=dn, precision=hp)
    h = h + params['b2'].astype(f32)[None, :, None]
    p2 = (h.shape[-1] - S2) // S2 + 1
    h = h[:, :, :p2 * S2].reshape(B, 1, p2, S2).max(axis=-1)
    out = lax.conv_general_dilated(h, params['wc'].astype(f32), (1,), 'VALID',
                                   dimension_numbers=dn, precision=hp)
    out = out + params['bc'].astype(f32)[None, :, None]
    return jnp.squeeze(out)


# ---------------------------------------------------------------------------
if __name__ == "__main__":
    B, C, NCLS = 5, 28, 2          # B=5 also exercises the batch-tile padding path

    key = jax.random.PRNGKey(0)
    ks = jax.random.split(key, 12)

    def u(k, shape, fan_in):
        b = 1.0 / (fan_in ** 0.5)
        return jax.random.uniform(k, shape, jnp.float32, -b, b)

    params = dict(
        wB=u(ks[0], (2 * C, 1, KB), KB), bB=u(ks[1], (2 * C,), KB),       # convBig
        w2d=u(ks[2], (1, 2, 1, 1), 2), b2d=u(ks[3], (1,), 2),             # convBig2
        w1=u(ks[4], (1, C, K1), C * K1), b1=u(ks[5], (1,), C * K1),       # conv
        w2=u(ks[6], (1, 1, K2), K2), b2=u(ks[7], (1,), K2),               # conv2
        wc=u(ks[8], (NCLS, 1, KC), KC), bc=u(ks[9], (NCLS,), KC),         # conv_class
    )
    pp = prepare_params(params)

    x100 = jax.random.normal(ks[10], (B, C, T100), jnp.float32)    # 100 Hz sample
    x1000 = jax.random.normal(ks[11], (B, C, T1000), jnp.float32)  # 1000 Hz sample

    out100 = jax.block_until_ready(fully_conv_embedding_forward(x100, pp))
    out1000 = jax.block_until_ready(fully_conv_embedding_forward(x1000, pp))

    ref100 = reference_forward(x100, params)
    ref1000 = reference_forward(x1000, params)

    assert out100.shape == ref100.shape == (B, NCLS)
    assert out1000.shape == ref1000.shape == (B, NCLS)
    assert jnp.allclose(out100, ref100, atol=1e-3, rtol=1e-3), (out100, ref100)
    assert jnp.allclose(out1000, ref1000, atol=1e-3, rtol=1e-3), (out1000, ref1000)

    print("KERNEL_OK")
</pallas_src>

<mosaic_0001>
module attributes {stable_mosaic.version = 11 : i64} {
  func.func @_net_kernel(%arg0: i32, %arg1: memref<8x1400xf32, #tpu.memory_space<vmem>>, %arg2: memref<1400x45xf32, #tpu.memory_space<vmem>>, %arg3: memref<43x12xf32, #tpu.memory_space<vmem>>, %arg4: memref<11x128xf32, #tpu.memory_space<vmem>>, %arg5: memref<1x128xf32, #tpu.memory_space<vmem>>, %arg6: memref<8x128xf32, #tpu.memory_space<vmem>>) attributes {dimension_semantics = [#tpu.dimension_semantics<parallel>], iteration_bounds = array<i64: 1>, scalar_prefetch = 0 : i64, scratch_operands = 0 : i64, tpu.core_type = #tpu.core_type<tc>, window_params = [{transform_indices = @transform_0, window_bounds = array<i64: 8, 1400>}, {pipeline_mode = #tpu.pipeline_mode<synchronous>, transform_indices = @transform_1, window_bounds = array<i64: 1400, 45>}, {pipeline_mode = #tpu.pipeline_mode<synchronous>, transform_indices = @transform_2, window_bounds = array<i64: 43, 12>}, {pipeline_mode = #tpu.pipeline_mode<synchronous>, transform_indices = @transform_3, window_bounds = array<i64: 11, 128>}, {pipeline_mode = #tpu.pipeline_mode<synchronous>, transform_indices = @transform_4, window_bounds = array<i64: 1, 128>}, {transform_indices = @transform_5, window_bounds = array<i64: 8, 128>}]} {
    %c0 = arith.constant 0 : index
    %c0_0 = arith.constant 0 : index
    %0 = vector.load %arg1[%c0, %c0_0] : memref<8x1400xf32, #tpu.memory_space<vmem>>, vector<8x1400xf32>
    %c0_1 = arith.constant 0 : index
    %c0_2 = arith.constant 0 : index
    %1 = vector.load %arg2[%c0_1, %c0_2] : memref<1400x45xf32, #tpu.memory_space<vmem>>, vector<1400x45xf32>
    %cst = arith.constant dense<0.000000e+00> : vector<8x45xf32>
    %2 = tpu.matmul %0, %1, %cst {dimension_numbers = #tpu.dot_dimension_numbers<[1], [0], [0], [1], [0, 0, 1, 1], [], []>, precision = #tpu.contract_precision<fp32>} : vector<8x1400xf32>, vector<1400x45xf32>, vector<8x45xf32> -> vector<8x45xf32>
    %c0_3 = arith.constant 0 : index
    %c0_4 = arith.constant 0 : index
    %3 = vector.load %arg3[%c0_3, %c0_4] : memref<43x12xf32, #tpu.memory_space<vmem>>, vector<43x12xf32>
    %c0_5 = arith.constant 0 : index
    %c0_6 = arith.constant 0 : index
    %4 = vector.load %arg4[%c0_5, %c0_6] : memref<11x128xf32, #tpu.memory_space<vmem>>, vector<11x128xf32>
    %c0_7 = arith.constant 0 : index
    %c0_8 = arith.constant 0 : index
    %5 = vector.load %arg5[%c0_7, %c0_8] : memref<1x128xf32, #tpu.memory_space<vmem>>, vector<1x128xf32>
    %6 = vector.extract_strided_slice %2 {offsets = [0, 0], sizes = [8, 43], strides = [1, 1]} : vector<8x45xf32> to vector<8x43xf32>
    %7 = vector.extract_strided_slice %2 {offsets = [0, 1], sizes = [8, 43], strides = [1, 1]} : vector<8x45xf32> to vector<8x43xf32>
    %8 = arith.maximumf %6, %7 : vector<8x43xf32>
    %9 = vector.extract_strided_slice %2 {offsets = [0, 2], sizes = [8, 43], strides = [1, 1]} : vector<8x45xf32> to vector<8x43xf32>
    %10 = arith.maximumf %8, %9 : vector<8x43xf32>
    %cst_9 = arith.constant dense<0.000000e+00> : vector<8x12xf32>
    %11 = tpu.matmul %10, %3, %cst_9 {dimension_numbers = #tpu.dot_dimension_numbers<[1], [0], [0], [1], [0, 0, 1, 1], [], []>, precision = #tpu.contract_precision<fp32>} : vector<8x43xf32>, vector<43x12xf32>, vector<8x12xf32> -> vector<8x12xf32>
    %12 = vector.extract_strided_slice %11 {offsets = [0, 0], sizes = [8, 11], strides = [1, 1]} : vector<8x12xf32> to vector<8x11xf32>
    %13 = vector.extract_strided_slice %11 {offsets = [0, 1], sizes = [8, 11], strides = [1, 1]} : vector<8x12xf32> to vector<8x11xf32>
    %14 = arith.maximumf %12, %13 : vector<8x11xf32>
    %cst_10 = arith.constant dense<0.000000e+00> : vector<8x128xf32>
    %15 = tpu.matmul %14, %4, %cst_10 {dimension_numbers = #tpu.dot_dimension_numbers<[1], [0], [0], [1], [0, 0, 1, 1], [], []>, precision = #tpu.contract_precision<fp32>} : vector<8x11xf32>, vector<11x128xf32>, vector<8x128xf32> -> vector<8x128xf32>
    %16 = vector.broadcast %5 : vector<1x128xf32> to vector<8x128xf32>
    %17 = arith.addf %15, %16 : vector<8x128xf32>
    %c0_11 = arith.constant 0 : index
    %c0_12 = arith.constant 0 : index
    %18 = vector.load %arg6[%c0_11, %c0_12] : memref<8x128xf32, #tpu.memory_space<vmem>>, vector<8x128xf32>
    tpu.vector_store %arg6[%c0_11, %c0_12], %17 {strides = array<i32>} : memref<8x128xf32, #tpu.memory_space<vmem>>, vector<8x128xf32>,
    return
  }
  func.func @transform_0(%arg0: i32) -> (i32, i32) {
    %c0_i32 = arith.constant 0 : i32
    %c0_i32_0 = arith.constant 0 : i32
    return %arg0, %c0_i32 : i32, i32
  }
  func.func @transform_1(%arg0: i32) -> (i32, i32) {
    %c0_i32 = arith.constant 0 : i32
    %c0_i32_0 = arith.constant 0 : i32
    %c0_i32_1 = arith.constant 0 : i32
    return %c0_i32, %c0_i32_0 : i32, i32
  }
  func.func @transform_2(%arg0: i32) -> (i32, i32) {
    %c0_i32 = arith.constant 0 : i32
    %c0_i32_0 = arith.constant 0 : i32
    %c0_i32_1 = arith.constant 0 : i32
    return %c0_i32, %c0_i32_0 : i32, i32
  }
  func.func @transform_3(%arg0: i32) -> (i32, i32) {
    %c0_i32 = arith.constant 0 : i32
    %c0_i32_0 = arith.constant 0 : i32
    %c0_i32_1 = arith.constant 0 : i32
    return %c0_i32, %c0_i32_0 : i32, i32
  }
  func.func @transform_4(%arg0: i32) -> (i32, i32) {
    %c0_i32 = arith.constant 0 : i32
    %c0_i32_0 = arith.constant 0 : i32
    %c0_i32_1 = arith.constant 0 : i32
    return %c0_i32, %c0_i32_0 : i32, i32
  }
  func.func @transform_5(%arg0: i32) -> (i32, i32) {
    %c0_i32 = arith.constant 0 : i32
    %c0_i32_0 = arith.constant 0 : i32
    return %arg0, %c0_i32 : i32, i32
  }
}

</mosaic_0001>

<llo_original>
// kernel: tpu_custom_call.1
$region0: #{tpu_custom_call.1}
  #allocation0 [shape = 'u32[]', space=smem, size = 0x4, offset = 0x4, fixed_abs, tag = 'smem constant byte address 0x4 - core index']
  #allocation1 [shape = 'u32[144,128]{1,0:T(1,128)}', space=vmem, size = 0x12000, scoped, tag = 'internal scratch']
  %s0 = inlined_call_operand.vmem [shape: f32[8,1400], index: 0, kind: input, shape index: {}]
  %s1 = inlined_call_operand.vmem [shape: f32[1400,45], index: 1, kind: input, shape index: {}]
  %s2 = inlined_call_operand.vmem [shape: f32[43,12], index: 2, kind: input, shape index: {}]
  %s3 = inlined_call_operand.vmem [shape: f32[11,128], index: 3, kind: input, shape index: {}]
  %s4 = inlined_call_operand.vmem [shape: f32[1,128], index: 4, kind: input, shape index: {}]
  %s5 = inlined_call_operand.hbm [shape: f32[8,128], index: 5, kind: output, shape index: {}]
  %s6 = sld [smem:[#allocation0]]
  $region30: #{tpu_custom_call.1} parent=0
    _
  %s8 = ssub.s32 1, %s6
  %s9 = scalar_select 0, %s8, %s6
  $region1: #{tpu_custom_call.1} parent=0
    #allocation2 [shape = 'u8[4096]{0}', space=vmem, size = 0x1000, scoped, tag = 'output window, operand 0, single buffered']
    #allocation3 [shape = 's32[1]{0}', space=sflag, size = 0x4, scoped, tag = 'scoped memory for tpu_custom_call.1']
    %10 = vsyncpa [#allocation3], 0
    // Predicated region
    $region2: #{tpu_custom_call.1} parent=1 // pred_check
      _
    $region3: #{tpu_custom_call.1} parent=1 // pred_check_branch
      %12 = sbr.rel (0) target = $region5
    $region4: #{tpu_custom_call.1} parent=1 // pred_region
      _
    $region5: #{tpu_custom_call.1} parent=1 // pred_fallthru
      _
    // Predicated region
    $region6: #{tpu_custom_call.1} parent=1 // pred_check
      _
    $region7: #{tpu_custom_call.1} parent=1 // pred_check_branch
      %14 = sbr.rel (0) target = $region9
    $region8: #{tpu_custom_call.1} parent=1 // pred_region
      _
    $region9: #{tpu_custom_call.1} parent=1 // pred_fallthru
      _
    // Predicated region
    $region10: #{tpu_custom_call.1} parent=1 // pred_check
      _
    $region11: #{tpu_custom_call.1} parent=1 // pred_check_branch
      %16 = sbr.rel (0) target = $region13
    $region12: #{tpu_custom_call.1} parent=1 // pred_region
      _
    $region13: #{tpu_custom_call.1} parent=1 // pred_fallthru
      _
    // Predicated region
    $region14: #{tpu_custom_call.1} parent=1 // pred_check
      _
    $region15: #{tpu_custom_call.1} parent=1 // pred_check_branch
      %18 = sbr.rel (0) target = $region17
    $region16: #{tpu_custom_call.1} parent=1 // pred_region
      _
    $region17: #{tpu_custom_call.1} parent=1 // pred_fallthru
      _
    // Predicated region
    $region18: #{tpu_custom_call.1} parent=1 // pred_check
      _
    $region19: #{tpu_custom_call.1} parent=1 // pred_check_branch
      %20 = sbr.rel (0) target = $region21
    $region20: #{tpu_custom_call.1} parent=1 // pred_region
      _
    $region21: #{tpu_custom_call.1} parent=1 // pred_fallthru
      _
    %v21 = vld [vmem:[%s0] sm:$0xff]
    %v22 = vld [vmem:[%s0 + $0x8] sm:$0xff]
    %v23 = vld [vmem:[%s0 + $0x10] sm:$0xff]
    %v24 = vld [vmem:[%s0 + $0x18] sm:$0xff]
    %v25 = vld [vmem:[%s0 + $0x20] sm:$0xff]
    %v26 = vld [vmem:[%s0 + $0x28] sm:$0xff]
    %v27 = vld [vmem:[%s0 + $0x30] sm:$0xff]
    %v28 = vld [vmem:[%s0 + $0x38] sm:$0xff]
    %v29 = vld [vmem:[%s0 + $0x40] sm:$0xff]
    %v30 = vld [vmem:[%s0 + $0x48] sm:$0xff]
    %v31 = vld [vmem:[%s0 + $0x50] sm:$0xff]
    %v32 = vld [vmem:[%s1] sm:$0xff]
    %v33 = vld [vmem:[%s1 + $0x8] sm:$0xff]
    %v34 = vld [vmem:[%s1 + $0x10] sm:$0xff]
    %v35 = vld [vmem:[%s1 + $0x18] sm:$0xff]
    %v36 = vld [vmem:[%s1 + $0x20] sm:$0xff]
    %v37 = vld [vmem:[%s1 + $0x28] sm:$0xff]
    %v38 = vld [vmem:[%s1 + $0x30] sm:$0xff]
    %v39 = vld [vmem:[%s1 + $0x38] sm:$0xff]
    %v40 = vld [vmem:[%s1 + $0x40] sm:$0xff]
    %v41 = vld [vmem:[%s1 + $0x48] sm:$0xff]
    %v42 = vld [vmem:[%s1 + $0x50] sm:$0xff]
    %v43 = vld [vmem:[%s1 + $0x58] sm:$0xff]
    %v44 = vld [vmem:[%s1 + $0x60] sm:$0xff]
    %v45 = vld [vmem:[%s1 + $0x68] sm:$0xff]
    %v46 = vld [vmem:[%s1 + $0x70] sm:$0xff]
    %v47 = vld [vmem:[%s1 + $0x78] sm:$0xff]
    %v48 = vld [vmem:[%s1 + $0x80] sm:$0xff]
    %v49 = vld [vmem:[%s1 + $0x88] sm:$0xff]
    %v50 = vld [vmem:[%s1 + $0x90] sm:$0xff]
    %v51 = vld [vmem:[%s1 + $0x98] sm:$0xff]
    %v52 = vld [vmem:[%s1 + $0xa0] sm:$0xff]
    %v53 = vld [vmem:[%s1 + $0xa8] sm:$0xff]
    %v54 = vld [vmem:[%s1 + $0xb0] sm:$0xff]
    %v55 = vld [vmem:[%s1 + $0xb8] sm:$0xff]
    %v56 = vld [vmem:[%s1 + $0xc0] sm:$0xff]
    %v57 = vld [vmem:[%s1 + $0xc8] sm:$0xff]
    %v58 = vld [vmem:[%s1 + $0xd0] sm:$0xff]
    %v59 = vld [vmem:[%s1 + $0xd8] sm:$0xff]
    %v60 = vld [vmem:[%s1 + $0xe0] sm:$0xff]
    %v61 = vld [vmem:[%s1 + $0xe8] sm:$0xff]
    %v62 = vld [vmem:[%s1 + $0xf0] sm:$0xff]
    %v63 = vld [vmem:[%s1 + $0xf8] sm:$0xff]
    %v64 = vld [vmem:[%s1 + $0x100] sm:$0xff]
    %v65 = vld [vmem:[%s1 + $0x108] sm:$0xff]
    %v66 = vld [vmem:[%s1 + $0x110] sm:$0xff]
    %v67 = vld [vmem:[%s1 + $0x118] sm:$0xff]
    %v68 = vld [vmem:[%s1 + $0x120] sm:$0xff]
    %v69 = vld [vmem:[%s1 + $0x128] sm:$0xff]
    %v70 = vld [vmem:[%s1 + $0x130] sm:$0xff]
    %v71 = vld [vmem:[%s1 + $0x138] sm:$0xff]
    %v72 = vld [vmem:[%s1 + $0x140] sm:$0xff]
    %v73 = vld [vmem:[%s1 + $0x148] sm:$0xff]
    %v74 = vld [vmem:[%s1 + $0x150] sm:$0xff]
    %v75 = vld [vmem:[%s1 + $0x158] sm:$0xff]
    %v76 = vld [vmem:[%s1 + $0x160] sm:$0xff]
    %v77 = vld [vmem:[%s1 + $0x168] sm:$0xff]
    %v78 = vld [vmem:[%s1 + $0x170] sm:$0xff]
    %v79 = vld [vmem:[%s1 + $0x178] sm:$0xff]
    %v80 = vld [vmem:[%s1 + $0x180] sm:$0xff]
    %v81 = vld [vmem:[%s1 + $0x188] sm:$0xff]
    %v82 = vld [vmem:[%s1 + $0x190] sm:$0xff]
    %v83 = vld [vmem:[%s1 + $0x198] sm:$0xff]
    %v84 = vld [vmem:[%s1 + $0x1a0] sm:$0xff]
    %v85 = vld [vmem:[%s1 + $0x1a8] sm:$0xff]
    %v86 = vld [vmem:[%s1 + $0x1b0] sm:$0xff]
    %v87 = vld [vmem:[%s1 + $0x1b8] sm:$0xff]
    %v88 = vld [vmem:[%s1 + $0x1c0] sm:$0xff]
    %v89 = vld [vmem:[%s1 + $0x1c8] sm:$0xff]
    %v90 = vld [vmem:[%s1 + $0x1d0] sm:$0xff]
    %v91 = vld [vmem:[%s1 + $0x1d8] sm:$0xff]
    %v92 = vld [vmem:[%s1 + $0x1e0] sm:$0xff]
    %v93 = vld [vmem:[%s1 + $0x1e8] sm:$0xff]
    %v94 = vld [vmem:[%s1 + $0x1f0] sm:$0xff]
    %v95 = vld [vmem:[%s1 + $0x1f8] sm:$0xff]
    %v96 = vld [vmem:[%s1 + $0x200] sm:$0xff]
    %v97 = vld [vmem:[%s1 + $0x208] sm:$0xff]
    %v98 = vld [vmem:[%s1 + $0x210] sm:$0xff]
    %v99 = vld [vmem:[%s1 + $0x218] sm:$0xff]
    %v100 = vld [vmem:[%s1 + $0x220] sm:$0xff]
    %v101 = vld [vmem:[%s1 + $0x228] sm:$0xff]
    %v102 = vld [vmem:[%s1 + $0x230] sm:$0xff]
    %v103 = vld [vmem:[%s1 + $0x238] sm:$0xff]
    %v104 = vld [vmem:[%s1 + $0x240] sm:$0xff]
    %v105 = vld [vmem:[%s1 + $0x248] sm:$0xff]
    %v106 = vld [vmem:[%s1 + $0x250] sm:$0xff]
    %v107 = vld [vmem:[%s1 + $0x258] sm:$0xff]
    %v108 = vld [vmem:[%s1 + $0x260] sm:$0xff]
    %v109 = vld [vmem:[%s1 + $0x268] sm:$0xff]
    %v110 = vld [vmem:[%s1 + $0x270] sm:$0xff]
    %v111 = vld [vmem:[%s1 + $0x278] sm:$0xff]
    %v112 = vld [vmem:[%s1 + $0x280] sm:$0xff]
    %v113 = vld [vmem:[%s1 + $0x288] sm:$0xff]
    %v114 = vld [vmem:[%s1 + $0x290] sm:$0xff]
    %v115 = vld [vmem:[%s1 + $0x298] sm:$0xff]
    %v116 = vld [vmem:[%s1 + $0x2a0] sm:$0xff]
    %v117 = vld [vmem:[%s1 + $0x2a8] sm:$0xff]
    %v118 = vld [vmem:[%s1 + $0x2b0] sm:$0xff]
    %v119 = vld [vmem:[%s1 + $0x2b8] sm:$0xff]
    %v120 = vld [vmem:[%s1 + $0x2c0] sm:$0xff]
    %v121 = vld [vmem:[%s1 + $0x2c8] sm:$0xff]
    %v122 = vld [vmem:[%s1 + $0x2d0] sm:$0xff]
    %v123 = vld [vmem:[%s1 + $0x2d8] sm:$0xff]
    %v124 = vld [vmem:[%s1 + $0x2e0] sm:$0xff]
    %v125 = vld [vmem:[%s1 + $0x2e8] sm:$0xff]
    %v126 = vld [vmem:[%s1 + $0x2f0] sm:$0xff]
    %v127 = vld [vmem:[%s1 + $0x2f8] sm:$0xff]
    %v128 = vld [vmem:[%s1 + $0x300] sm:$0xff]
    %v129 = vld [vmem:[%s1 + $0x308] sm:$0xff]
    %v130 = vld [vmem:[%s1 + $0x310] sm:$0xff]
    %v131 = vld [vmem:[%s1 + $0x318] sm:$0xff]
    %v132 = vld [vmem:[%s1 + $0x320] sm:$0xff]
    %v133 = vld [vmem:[%s1 + $0x328] sm:$0xff]
    %v134 = vld [vmem:[%s1 + $0x330] sm:$0xff]
    %v135 = vld [vmem:[%s1 + $0x338] sm:$0xff]
    %v136 = vld [vmem:[%s1 + $0x340] sm:$0xff]
    %v137 = vld [vmem:[%s1 + $0x348] sm:$0xff]
    %v138 = vld [vmem:[%s1 + $0x350] sm:$0xff]
    %v139 = vld [vmem:[%s1 + $0x358] sm:$0xff]
    %v140 = vld [vmem:[%s1 + $0x360] sm:$0xff]
    %v141 = vld [vmem:[%s1 + $0x368] sm:$0xff]
    %v142 = vld [vmem:[%s1 + $0x370] sm:$0xff]
    %v143 = vld [vmem:[%s1 + $0x378] sm:$0xff]
    %v144 = vld [vmem:[%s1 + $0x380] sm:$0xff]
    %v145 = vld [vmem:[%s1 + $0x388] sm:$0xff]
    %v146 = vld [vmem:[%s1 + $0x390] sm:$0xff]
    %v147 = vld [vmem:[%s1 + $0x398] sm:$0xff]
    %v148 = vld [vmem:[%s1 + $0x3a0] sm:$0xff]
    %v149 = vld [vmem:[%s1 + $0x3a8] sm:$0xff]
    %v150 = vld [vmem:[%s1 + $0x3b0] sm:$0xff]
    %v151 = vld [vmem:[%s1 + $0x3b8] sm:$0xff]
    %v152 = vld [vmem:[%s1 + $0x3c0] sm:$0xff]
    %v153 = vld [vmem:[%s1 + $0x3c8] sm:$0xff]
    %v154 = vld [vmem:[%s1 + $0x3d0] sm:$0xff]
    %v155 = vld [vmem:[%s1 + $0x3d8] sm:$0xff]
    %v156 = vld [vmem:[%s1 + $0x3e0] sm:$0xff]
    %v157 = vld [vmem:[%s1 + $0x3e8] sm:$0xff]
    %v158 = vld [vmem:[%s1 + $0x3f0] sm:$0xff]
    %v159 = vld [vmem:[%s1 + $0x3f8] sm:$0xff]
    %v160 = vld [vmem:[%s1 + $0x400] sm:$0xff]
    %v161 = vld [vmem:[%s1 + $0x408] sm:$0xff]
    %v162 = vld [vmem:[%s1 + $0x410] sm:$0xff]
    %v163 = vld [vmem:[%s1 + $0x418] sm:$0xff]
    %v164 = vld [vmem:[%s1 + $0x420] sm:$0xff]
    %v165 = vld [vmem:[%s1 + $0x428] sm:$0xff]
    %v166 = vld [vmem:[%s1 + $0x430] sm:$0xff]
    %v167 = vld [vmem:[%s1 + $0x438] sm:$0xff]
    %v168 = vld [vmem:[%s1 + $0x440] sm:$0xff]
    %v169 = vld [vmem:[%s1 + $0x448] sm:$0xff]
    %v170 = vld [vmem:[%s1 + $0x450] sm:$0xff]
    %v171 = vld [vmem:[%s1 + $0x458] sm:$0xff]
    %v172 = vld [vmem:[%s1 + $0x460] sm:$0xff]
    %v173 = vld [vmem:[%s1 + $0x468] sm:$0xff]
    %v174 = vld [vmem:[%s1 + $0x470] sm:$0xff]
    %v175 = vld [vmem:[%s1 + $0x478] sm:$0xff]
    %v176 = vld [vmem:[%s1 + $0x480] sm:$0xff]
    %v177 = vld [vmem:[%s1 + $0x488] sm:$0xff]
    %v178 = vld [vmem:[%s1 + $0x490] sm:$0xff]
    %v179 = vld [vmem:[%s1 + $0x498] sm:$0xff]
    %v180 = vld [vmem:[%s1 + $0x4a0] sm:$0xff]
    %v181 = vld [vmem:[%s1 + $0x4a8] sm:$0xff]
    %v182 = vld [vmem:[%s1 + $0x4b0] sm:$0xff]
    %v183 = vld [vmem:[%s1 + $0x4b8] sm:$0xff]
    %v184 = vld [vmem:[%s1 + $0x4c0] sm:$0xff]
    %v185 = vld [vmem:[%s1 + $0x4c8] sm:$0xff]
    %v186 = vld [vmem:[%s1 + $0x4d0] sm:$0xff]
    %v187 = vld [vmem:[%s1 + $0x4d8] sm:$0xff]
    %v188 = vld [vmem:[%s1 + $0x4e0] sm:$0xff]
    %v189 = vld [vmem:[%s1 + $0x4e8] sm:$0xff]
    %v190 = vld [vmem:[%s1 + $0x4f0] sm:$0xff]
    %v191 = vld [vmem:[%s1 + $0x4f8] sm:$0xff]
    %v192 = vld [vmem:[%s1 + $0x500] sm:$0xff]
    %v193 = vld [vmem:[%s1 + $0x508] sm:$0xff]
    %v194 = vld [vmem:[%s1 + $0x510] sm:$0xff]
    %v195 = vld [vmem:[%s1 + $0x518] sm:$0xff]
    %v196 = vld [vmem:[%s1 + $0x520] sm:$0xff]
    %v197 = vld [vmem:[%s1 + $0x528] sm:$0xff]
    %v198 = vld [vmem:[%s1 + $0x530] sm:$0xff]
    %v199 = vld [vmem:[%s1 + $0x538] sm:$0xff]
    %v200 = vld [vmem:[%s1 + $0x540] sm:$0xff]
    %v201 = vld [vmem:[%s1 + $0x548] sm:$0xff]
    %v202 = vld [vmem:[%s1 + $0x550] sm:$0xff]
    %v203 = vld [vmem:[%s1 + $0x558] sm:$0xff]
    %v204 = vld [vmem:[%s1 + $0x560] sm:$0xff]
    %v205 = vld [vmem:[%s1 + $0x568] sm:$0xff]
    %v206 = vld [vmem:[%s1 + $0x570] sm:$0xff]
    %vm207 = vcmask 982016
    %v209 = vsel %vm207, %v31, 0
    %211 = vmatprep.subr.mxu0 0.0
    %v212 = vand.u32 %v32, 4294901760
    %213 = vmatpush1.msra.mxu0 %v212
    %214 = vmatprep.subr.mxu0 0.0
    %v215 = vand.u32 %v33, 4294901760
    %216 = vmatpush1.msra.mxu0 %v215
    %217 = vmatprep.subr.mxu0 0.0
    %v218 = vand.u32 %v34, 4294901760
    %219 = vmatpush1.msra.mxu0 %v218
    %220 = vmatprep.subr.mxu0 0.0
    %v221 = vand.u32 %v35, 4294901760
    %222 = vmatpush1.msra.mxu0 %v221
    %223 = vmatprep.subr.mxu0 0.0
    %v224 = vand.u32 %v36, 4294901760
    %225 = vmatpush1.msra.mxu0 %v224
    %226 = vmatprep.subr.mxu0 0.0
    %v227 = vand.u32 %v37, 4294901760
    %228 = vmatpush1.msra.mxu0 %v227
    %229 = vmatprep.subr.mxu0 0.0
    %v230 = vand.u32 %v38, 4294901760
    %231 = vmatpush1.msra.mxu0 %v230
    %232 = vmatprep.subr.mxu0 0.0
    %v233 = vand.u32 %v39, 4294901760
    %234 = vmatpush1.msra.mxu0 %v233
    %235 = vmatprep.subr.mxu0 0.0
    %v236 = vand.u32 %v40, 4294901760
    %237 = vmatpush1.msra.mxu0 %v236
    %238 = vmatprep.subr.mxu0 0.0
    %v239 = vand.u32 %v41, 4294901760
    %240 = vmatpush1.msra.mxu0 %v239
    %241 = vmatprep.subr.mxu0 0.0
    %v242 = vand.u32 %v42, 4294901760
    %243 = vmatpush1.msra.mxu0 %v242
    %244 = vmatprep.subr.mxu0 0.0
    %v245 = vand.u32 %v43, 4294901760
    %246 = vmatpush1.msra.mxu0 %v245
    %247 = vmatprep.subr.mxu0 0.0
    %v248 = vand.u32 %v44, 4294901760
    %249 = vmatpush1.msra.mxu0 %v248
    %250 = vmatprep.subr.mxu0 0.0
    %v251 = vand.u32 %v45, 4294901760
    %252 = vmatpush1.msra.mxu0 %v251
    %253 = vmatprep.subr.mxu0 0.0
    %v254 = vand.u32 %v46, 4294901760
    %255 = vmatpush1.msra.mxu0 %v254
    %256 = vmatprep.subr.mxu0 0.0
    %v257 = vand.u32 %v47, 4294901760
    %258 = vmatpush1.msra.mxu0 %v257
    %259 = vmatprep.subr.mxu0 0.0
    %v260 = vand.u32 %v48, 4294901760
    %261 = vmatpush1.msra.mxu0 %v260
    %262 = vmatprep.subr.mxu0 0.0
    %v263 = vand.u32 %v49, 4294901760
    %264 = vmatpush1.msra.mxu0 %v263
    %265 = vmatprep.subr.mxu0 0.0
    %v266 = vand.u32 %v50, 4294901760
    %267 = vmatpush1.msra.mxu0 %v266
    %268 = vmatprep.subr.mxu0 0.0
    %v269 = vand.u32 %v51, 4294901760
    %270 = vmatpush1.msra.mxu0 %v269
    %271 = vmatprep.subr.mxu0 0.0
    %v272 = vand.u32 %v52, 4294901760
    %273 = vmatpush1.msra.mxu0 %v272
    %274 = vmatprep.subr.mxu0 0.0
    %v275 = vand.u32 %v53, 4294901760
    %276 = vmatpush1.msra.mxu0 %v275
    %277 = vmatprep.subr.mxu0 0.0
    %v278 = vand.u32 %v54, 4294901760
    %279 = vmatpush1.msra.mxu0 %v278
    %280 = vmatprep.subr.mxu0 0.0
    %v281 = vand.u32 %v55, 4294901760
    %282 = vmatpush1.msra.mxu0 %v281
    %283 = vmatprep.subr.mxu0 0.0
    %v284 = vand.u32 %v56, 4294901760
    %285 = vmatpush1.msra.mxu0 %v284
    %286 = vmatprep.subr.mxu0 0.0
    %v287 = vand.u32 %v57, 4294901760
    %288 = vmatpush1.msra.mxu0 %v287
    %289 = vmatprep.subr.mxu0 0.0
    %v290 = vand.u32 %v58, 4294901760
    %291 = vmatpush1.msra.mxu0 %v290
    %292 = vmatprep.subr.mxu0 0.0
    %v293 = vand.u32 %v59, 4294901760
    %294 = vmatpush1.msra.mxu0 %v293
    %295 = vmatprep.subr.mxu0 0.0
    %v296 = vand.u32 %v60, 4294901760
    %297 = vmatpush1.msra.mxu0 %v296
    %298 = vmatprep.subr.mxu0 0.0
    %v299 = vand.u32 %v61, 4294901760
    %300 = vmatpush1.msra.mxu0 %v299
    %301 = vmatprep.subr.mxu0 0.0
    %v302 = vand.u32 %v62, 4294901760
    %303 = vmatpush1.msra.mxu0 %v302
    %304 = vmatprep.subr.mxu0 0.0
    %v305 = vand.u32 %v63, 4294901760
    %306 = vmatpush1.msra.mxu0 %v305
    %v307 = vand.u32 %v22, 4294901760
    %v308 = vsub.f32 %v22, %v307
    %v309 = vand.u32 %v308, 4294901760
    %v310 = vsub.f32 %v308, %v309
    %v311 = vand.u32 %v310, 4294901760
    %312 = vmatprep.mubr.f32.mxu0 %v311
    %v313 = vand.u32 %v21, 4294901760
    %v314 = vsub.f32 %v21, %v313
    %v315 = vand.u32 %v314, 4294901760
    %v316 = vsub.f32 %v314, %v315
    %v317 = vand.u32 %v316, 4294901760
    %318 = vmatmul.mubr.f32.gmra.mrb[0].mxu0 %v317
    %v319 = vpop.f32.mrb[0].mxu0
    %v320 = vadd.f32 0.0, %v319
    %v321 = vpop.f32.mrb[0].mxu0
    %322 = vdwg.mxu0
    %323 = vmatprep.subr.mxu0 0.0
    %v324 = vand.u32 %v32, 4294901760
    %v325 = vsub.f32 %v32, %v324
    %v326 = vand.u32 %v325, 4294901760
    %v327 = vsub.f32 %v325, %v326
    %v328 = vand.u32 %v327, 4294901760
    %329 = vmatpush1.msra.mxu0 %v328
    %330 = vmatprep.subr.mxu0 0.0
    %v331 = vand.u32 %v33, 4294901760
    %v332 = vsub.f32 %v33, %v331
    %v333 = vand.u32 %v332, 4294901760
    %v334 = vsub.f32 %v332, %v333
    %v335 = vand.u32 %v334, 4294901760
    %336 = vmatpush1.msra.mxu0 %v335
    %337 = vmatprep.subr.mxu0 0.0
    %v338 = vand.u32 %v34, 4294901760
    %v339 = vsub.f32 %v34, %v338
    %v340 = vand.u32 %v339, 4294901760
    %v341 = vsub.f32 %v339, %v340
    %v342 = vand.u32 %v341, 4294901760
    %343 = vmatpush1.msra.mxu0 %v342
    %344 = vmatprep.subr.mxu0 0.0
    %v345 = vand.u32 %v35, 4294901760
    %v346 = vsub.f32 %v35, %v345
    %v347 = vand.u32 %v346, 4294901760
    %v348 = vsub.f32 %v346, %v347
    %v349 = vand.u32 %v348, 4294901760
    %350 = vmatpush1.msra.mxu0 %v349
    %351 = vmatprep.subr.mxu0 0.0
    %v352 = vand.u32 %v36, 4294901760
    %v353 = vsub.f32 %v36, %v352
    %v354 = vand.u32 %v353, 4294901760
    %v355 = vsub.f32 %v353, %v354
    %v356 = vand.u32 %v355, 4294901760
    %357 = vmatpush1.msra.mxu0 %v356
    %358 = vmatprep.subr.mxu0 0.0
    %v359 = vand.u32 %v37, 4294901760
    %v360 = vsub.f32 %v37, %v359
    %v361 = vand.u32 %v360, 4294901760
    %v362 = vsub.f32 %v360, %v361
    %v363 = vand.u32 %v362, 4294901760
    %364 = vmatpush1.msra.mxu0 %v363
    %365 = vmatprep.subr.mxu0 0.0
    %v366 = vand.u32 %v38, 4294901760
    %v367 = vsub.f32 %v38, %v366
    %v368 = vand.u32 %v367, 4294901760
    %v369 = vsub.f32 %v367, %v368
    %v370 = vand.u32 %v369, 4294901760
    %371 = vmatpush1.msra.mxu0 %v370
    %372 = vmatprep.subr.mxu0 0.0
    %v373 = vand.u32 %v39, 4294901760
    %v374 = vsub.f32 %v39, %v373
    %v375 = vand.u32 %v374, 4294901760
    %v376 = vsub.f32 %v374, %v375
    %v377 = vand.u32 %v376, 4294901760
    %378 = vmatpush1.msra.mxu0 %v377
    %379 = vmatprep.subr.mxu0 0.0
    %v380 = vand.u32 %v40, 4294901760
    %v381 = vsub.f32 %v40, %v380
    %v382 = vand.u32 %v381, 4294901760
    %v383 = vsub.f32 %v381, %v382
    %v384 = vand.u32 %v383, 4294901760
    %385 = vmatpush1.msra.mxu0 %v384
    %386 = vmatprep.subr.mxu0 0.0
    %v387 = vand.u32 %v41, 4294901760
    %v388 = vsub.f32 %v41, %v387
    %v389 = vand.u32 %v388, 4294901760
    %v390 = vsub.f32 %v388, %v389
    %v391 = vand.u32 %v390, 4294901760
    %392 = vmatpush1.msra.mxu0 %v391
    %393 = vmatprep.subr.mxu0 0.0
    %v394 = vand.u32 %v42, 4294901760
    %v395 = vsub.f32 %v42, %v394
    %v396 = vand.u32 %v395, 4294901760
    %v397 = vsub.f32 %v395, %v396
    %v398 = vand.u32 %v397, 4294901760
    %399 = vmatpush1.msra.mxu0 %v398
    %400 = vmatprep.subr.mxu0 0.0
    %v401 = vand.u32 %v43, 4294901760
    %v402 = vsub.f32 %v43, %v401
    %v403 = vand.u32 %v402, 4294901760
    %v404 = vsub.f32 %v402, %v403
    %v405 = vand.u32 %v404, 4294901760
    %406 = vmatpush1.msra.mxu0 %v405
    %407 = vmatprep.subr.mxu0 0.0
    %v408 = vand.u32 %v44, 4294901760
    %v409 = vsub.f32 %v44, %v408
    %v410 = vand.u32 %v409, 4294901760
    %v411 = vsub.f32 %v409, %v410
    %v412 = vand.u32 %v411, 4294901760
    %413 = vmatpush1.msra.mxu0 %v412
    %414 = vmatprep.subr.mxu0 0.0
    %v415 = vand.u32 %v45, 4294901760
    %v416 = vsub.f32 %v45, %v415
    %v417 = vand.u32 %v416, 4294901760
    %v418 = vsub.f32 %v416, %v417
    %v419 = vand.u32 %v418, 4294901760
    %420 = vmatpush1.msra.mxu0 %v419
    %421 = vmatprep.subr.mxu0 0.0
    %v422 = vand.u32 %v46, 4294901760
    %v423 = vsub.f32 %v46, %v422
    %v424 = vand.u32 %v423, 4294901760
    %v425 = vsub.f32 %v423, %v424
    %v426 = vand.u32 %v425, 4294901760
    %427 = vmatpush1.msra.mxu0 %v426
    %428 = vmatprep.subr.mxu0 0.0
    %v429 = vand.u32 %v47, 4294901760
    %v430 = vsub.f32 %v47, %v429
    %v431 = vand.u32 %v430, 4294901760
    %v432 = vsub.f32 %v430, %v431
    %v433 = vand.u32 %v432, 4294901760
    %434 = vmatpush1.msra.mxu0 %v433
    %435 = vmatprep.subr.mxu0 0.0
    %v436 = vand.u32 %v48, 4294901760
    %v437 = vsub.f32 %v48, %v436
    %v438 = vand.u32 %v437, 4294901760
    %v439 = vsub.f32 %v437, %v438
    %v440 = vand.u32 %v439, 4294901760
    %441 = vmatpush1.msra.mxu0 %v440
    %442 = vmatprep.subr.mxu0 0.0
    %v443 = vand.u32 %v49, 4294901760
    %v444 = vsub.f32 %v49, %v443
    %v445 = vand.u32 %v444, 4294901760
    %v446 = vsub.f32 %v444, %v445
    %v447 = vand.u32 %v446, 4294901760
    %448 = vmatpush1.msra.mxu0 %v447
    %449 = vmatprep.subr.mxu0 0.0
    %v450 = vand.u32 %v50, 4294901760
    %v451 = vsub.f32 %v50, %v450
    %v452 = vand.u32 %v451, 4294901760
    %v453 = vsub.f32 %v451, %v452
    %v454 = vand.u32 %v453, 4294901760
    %455 = vmatpush1.msra.mxu0 %v454
    %456 = vmatprep.subr.mxu0 0.0
    %v457 = vand.u32 %v51, 4294901760
    %v458 = vsub.f32 %v51, %v457
    %v459 = vand.u32 %v458, 4294901760
    %v460 = vsub.f32 %v458, %v459
    %v461 = vand.u32 %v460, 4294901760
    %462 = vmatpush1.msra.mxu0 %v461
    %463 = vmatprep.subr.mxu0 0.0
    %v464 = vand.u32 %v52, 4294901760
    %v465 = vsub.f32 %v52, %v464
    %v466 = vand.u32 %v465, 4294901760
    %v467 = vsub.f32 %v465, %v466
    %v468 = vand.u32 %v467, 4294901760
    %469 = vmatpush1.msra.mxu0 %v468
    %470 = vmatprep.subr.mxu0 0.0
    %v471 = vand.u32 %v53, 4294901760
    %v472 = vsub.f32 %v53, %v471
    %v473 = vand.u32 %v472, 4294901760
    %v474 = vsub.f32 %v472, %v473
    %v475 = vand.u32 %v474, 4294901760
    %476 = vmatpush1.msra.mxu0 %v475
    %477 = vmatprep.subr.mxu0 0.0
    %v478 = vand.u32 %v54, 4294901760
    %v479 = vsub.f32 %v54, %v478
    %v480 = vand.u32 %v479, 4294901760
    %v481 = vsub.f32 %v479, %v480
    %v482 = vand.u32 %v481, 4294901760
    %483 = vmatpush1.msra.mxu0 %v482
    %484 = vmatprep.subr.mxu0 0.0
    %v485 = vand.u32 %v55, 4294901760
    %v486 = vsub.f32 %v55, %v485
    %v487 = vand.u32 %v486, 4294901760
    %v488 = vsub.f32 %v486, %v487
    %v489 = vand.u32 %v488, 4294901760
    %490 = vmatpush1.msra.mxu0 %v489
    %491 = vmatprep.subr.mxu0 0.0
    %v492 = vand.u32 %v56, 4294901760
    %v493 = vsub.f32 %v56, %v492
    %v494 = vand.u32 %v493, 4294901760
    %v495 = vsub.f32 %v493, %v494
    %v496 = vand.u32 %v495, 4294901760
    %497 = vmatpush1.msra.mxu0 %v496
    %498 = vmatprep.subr.mxu0 0.0
    %v499 = vand.u32 %v57, 4294901760
    %v500 = vsub.f32 %v57, %v499
    %v501 = vand.u32 %v500, 4294901760
    %v502 = vsub.f32 %v500, %v501
    %v503 = vand.u32 %v502, 4294901760
    %504 = vmatpush1.msra.mxu0 %v503
    %505 = vmatprep.subr.mxu0 0.0
    %v506 = vand.u32 %v58, 4294901760
    %v507 = vsub.f32 %v58, %v506
    %v508 = vand.u32 %v507, 4294901760
    %v509 = vsub.f32 %v507, %v508
    %v510 = vand.u32 %v509, 4294901760
    %511 = vmatpush1.msra.mxu0 %v510
    %512 = vmatprep.subr.mxu0 0.0
    %v513 = vand.u32 %v59, 4294901760
    %v514 = vsub.f32 %v59, %v513
    %v515 = vand.u32 %v514, 4294901760
    %v516 = vsub.f32 %v514, %v515
    %v517 = vand.u32 %v516, 4294901760
    %518 = vmatpush1.msra.mxu0 %v517
    %519 = vmatprep.subr.mxu0 0.0
    %v520 = vand.u32 %v60, 4294901760
    %v521 = vsub.f32 %v60, %v520
    %v522 = vand.u32 %v521, 4294901760
    %v523 = vsub.f32 %v521, %v522
    %v524 = vand.u32 %v523, 4294901760
    %525 = vmatpush1.msra.mxu0 %v524
    %526 = vmatprep.subr.mxu0 0.0
    %v527 = vand.u32 %v61, 4294901760
    %v528 = vsub.f32 %v61, %v527
    %v529 = vand.u32 %v528, 4294901760
    %v530 = vsub.f32 %v528, %v529
    %v531 = vand.u32 %v530, 4294901760
    %532 = vmatpush1.msra.mxu0 %v531
    %533 = vmatprep.subr.mxu0 0.0
    %v534 = vand.u32 %v62, 4294901760
    %v535 = vsub.f32 %v62, %v534
    %v536 = vand.u32 %v535, 4294901760
    %v537 = vsub.f32 %v535, %v536
    %v538 = vand.u32 %v537, 4294901760
    %539 = vmatpush1.msra.mxu0 %v538
    %540 = vmatprep.subr.mxu0 0.0
    %v541 = vand.u32 %v63, 4294901760
    %v542 = vsub.f32 %v63, %v541
    %v543 = vand.u32 %v542, 4294901760
    %v544 = vsub.f32 %v542, %v543
    %v545 = vand.u32 %v544, 4294901760
    %546 = vmatpush1.msra.mxu0 %v545
    %v547 = vand.u32 %v22, 4294901760
    %548 = vmatprep.mubr.f32.mxu0 %v547
    %v549 = vand.u32 %v21, 4294901760
    %550 = vmatmul.mubr.f32.gmra.mrb[0].mxu0 %v549
    %v551 = vpop.f32.mrb[0].mxu0
    %v552 = vadd.f32 %v320, %v551
    %v553 = vpop.f32.mrb[0].mxu0
    %554 = vdwg.mxu0
    %555 = vmatprep.subr.mxu0 0.0
    %v556 = vand.u32 %v32, 4294901760
    %v557 = vsub.f32 %v32, %v556
    %558 = vmatpush1.msra.mxu0 %v557
    %559 = vmatprep.subr.mxu0 0.0
    %v560 = vand.u32 %v33, 4294901760
    %v561 = vsub.f32 %v33, %v560
    %562 = vmatpush1.msra.mxu0 %v561
    %563 = vmatprep.subr.mxu0 0.0
    %v564 = vand.u32 %v34, 4294901760
    %v565 = vsub.f32 %v34, %v564
    %566 = vmatpush1.msra.mxu0 %v565
    %567 = vmatprep.subr.mxu0 0.0
    %v568 = vand.u32 %v35, 4294901760
    %v569 = vsub.f32 %v35, %v568
    %570 = vmatpush1.msra.mxu0 %v569
    %571 = vmatprep.subr.mxu0 0.0
    %v572 = vand.u32 %v36, 4294901760
    %v573 = vsub.f32 %v36, %v572
    %574 = vmatpush1.msra.mxu0 %v573
    %575 = vmatprep.subr.mxu0 0.0
    %v576 = vand.u32 %v37, 4294901760
    %v577 = vsub.f32 %v37, %v576
    %578 = vmatpush1.msra.mxu0 %v577
    %579 = vmatprep.subr.mxu0 0.0
    %v580 = vand.u32 %v38, 4294901760
    %v581 = vsub.f32 %v38, %v580
    %582 = vmatpush1.msra.mxu0 %v581
    %583 = vmatprep.subr.mxu0 0.0
    %v584 = vand.u32 %v39, 4294901760
    %v585 = vsub.f32 %v39, %v584
    %586 = vmatpush1.msra.mxu0 %v585
    %587 = vmatprep.subr.mxu0 0.0
    %v588 = vand.u32 %v40, 4294901760
    %v589 = vsub.f32 %v40, %v588
    %590 = vmatpush1.msra.mxu0 %v589
    %591 = vmatprep.subr.mxu0 0.0
    %v592 = vand.u32 %v41, 4294901760
    %v593 = vsub.f32 %v41, %v592
    %594 = vmatpush1.msra.mxu0 %v593
    %595 = vmatprep.subr.mxu0 0.0
    %v596 = vand.u32 %v42, 4294901760
    %v597 = vsub.f32 %v42, %v596
    %598 = vmatpush1.msra.mxu0 %v597
    %599 = vmatprep.subr.mxu0 0.0
    %v600 = vand.u32 %v43, 4294901760
    %v601 = vsub.f32 %v43, %v600
    %602 = vmatpush1.msra.mxu0 %v601
    %603 = vmatprep.subr.mxu0 0.0
    %v604 = vand.u32 %v44, 4294901760
    %v605 = vsub.f32 %v44, %v604
    %606 = vmatpush1.msra.mxu0 %v605
    %607 = vmatprep.subr.mxu0 0.0
    %v608 = vand.u32 %v45, 4294901760
    %v609 = vsub.f32 %v45, %v608
    %610 = vmatpush1.msra.mxu0 %v609
    %611 = vmatprep.subr.mxu0 0.0
    %v612 = vand.u32 %v46, 4294901760
    %v613 = vsub.f32 %v46, %v612
    %614 = vmatpush1.msra.mxu0 %v613
    %615 = vmatprep.subr.mxu0 0.0
    %v616 = vand.u32 %v47, 4294901760
    %v617 = vsub.f32 %v47, %v616
    %618 = vmatpush1.msra.mxu0 %v617
    %619 = vmatprep.subr.mxu0 0.0
    %v620 = vand.u32 %v48, 4294901760
    %v621 = vsub.f32 %v48, %v620
    %622 = vmatpush1.msra.mxu0 %v621
    %623 = vmatprep.subr.mxu0 0.0
    %v624 = vand.u32 %v49, 4294901760
    %v625 = vsub.f32 %v49, %v624
    %626 = vmatpush1.msra.mxu0 %v625
    %627 = vmatprep.subr.mxu0 0.0
    %v628 = vand.u32 %v50, 4294901760
    %v629 = vsub.f32 %v50, %v628
    %630 = vmatpush1.msra.mxu0 %v629
    %631 = vmatprep.subr.mxu0 0.0
    %v632 = vand.u32 %v51, 4294901760
    %v633 = vsub.f32 %v51, %v632
    %634 = vmatpush1.msra.mxu0 %v633
    %635 = vmatprep.subr.mxu0 0.0
    %v636 = vand.u32 %v52, 4294901760
    %v637 = vsub.f32 %v52, %v636
    %638 = vmatpush1.msra.mxu0 %v637
    %639 = vmatprep.subr.mxu0 0.0
    %v640 = vand.u32 %v53, 4294901760
    %v641 = vsub.f32 %v53, %v640
    %642 = vmatpush1.msra.mxu0 %v641
    %643 = vmatprep.subr.mxu0 0.0
    %v644 = vand.u32 %v54, 4294901760
    %v645 = vsub.f32 %v54, %v644
    %646 = vmatpush1.msra.mxu0 %v645
    %647 = vmatprep.subr.mxu0 0.0
    %v648 = vand.u32 %v55, 4294901760
    %v649 = vsub.f32 %v55, %v648
    %650 = vmatpush1.msra.mxu0 %v649
    %651 = vmatprep.subr.mxu0 0.0
    %v652 = vand.u32 %v56, 4294901760
    %v653 = vsub.f32 %v56, %v652
    %654 = vmatpush1.msra.mxu0 %v653
    %655 = vmatprep.subr.mxu0 0.0
    %v656 = vand.u32 %v57, 4294901760
    %v657 = vsub.f32 %v57, %v656
    %658 = vmatpush1.msra.mxu0 %v657
    %659 = vmatprep.subr.mxu0 0.0
    %v660 = vand.u32 %v58, 4294901760
    %v661 = vsub.f32 %v58, %v660
    %662 = vmatpush1.msra.mxu0 %v661
    %663 = vmatprep.subr.mxu0 0.0
    %v664 = vand.u32 %v59, 4294901760
    %v665 = vsub.f32 %v59, %v664
    %666 = vmatpush1.msra.mxu0 %v665
    %667 = vmatprep.subr.mxu0 0.0
    %v668 = vand.u32 %v60, 4294901760
    %v669 = vsub.f32 %v60, %v668
    %670 = vmatpush1.msra.mxu0 %v669
    %671 = vmatprep.subr.mxu0 0.0
    %v672 = vand.u32 %v61, 4294901760
    %v673 = vsub.f32 %v61, %v672
    %674 = vmatpush1.msra.mxu0 %v673
    %675 = vmatprep.subr.mxu0 0.0
    %v676 = vand.u32 %v62, 4294901760
    %v677 = vsub.f32 %v62, %v676
    %678 = vmatpush1.msra.mxu0 %v677
    %679 = vmatprep.subr.mxu0 0.0
    %v680 = vand.u32 %v63, 4294901760
    %v681 = vsub.f32 %v63, %v680
    %682 = vmatpush1.msra.mxu0 %v681
    %v683 = vand.u32 %v22, 4294901760
    %v684 = vsub.f32 %v22, %v683
    %685 = vmatprep.mubr.f32.mxu0 %v684
    %v686 = vand.u32 %v21, 4294901760
    %v687 = vsub.f32 %v21, %v686
    %688 = vmatmul.mubr.f32.gmra.mrb[0].mxu0 %v687
    %v689 = vpop.f32.mrb[0].mxu0
    %v690 = vadd.f32 %v552, %v689
    %v691 = vpop.f32.mrb[0].mxu0
    %692 = vdwg.mxu0
    %693 = vmatprep.subr.mxu0 0.0
    %v694 = vand.u32 %v32, 4294901760
    %695 = vmatpush1.msra.mxu0 %v694
    %696 = vmatprep.subr.mxu0 0.0
    %v697 = vand.u32 %v33, 4294901760
    %698 = vmatpush1.msra.mxu0 %v697
    %699 = vmatprep.subr.mxu0 0.0
    %v700 = vand.u32 %v34, 4294901760
    %701 = vmatpush1.msra.mxu0 %v700
    %702 = vmatprep.subr.mxu0 0.0
    %v703 = vand.u32 %v35, 4294901760
    %704 = vmatpush1.msra.mxu0 %v703
    %705 = vmatprep.subr.mxu0 0.0
    %v706 = vand.u32 %v36, 4294901760
    %707 = vmatpush1.msra.mxu0 %v706
    %708 = vmatprep.subr.mxu0 0.0
    %v709 = vand.u32 %v37, 4294901760
    %710 = vmatpush1.msra.mxu0 %v709
    %711 = vmatprep.subr.mxu0 0.0
    %v712 = vand.u32 %v38, 4294901760
    %713 = vmatpush1.msra.mxu0 %v712
    %714 = vmatprep.subr.mxu0 0.0
    %v715 = vand.u32 %v39, 4294901760
    %716 = vmatpush1.msra.mxu0 %v715
    %717 = vmatprep.subr.mxu0 0.0
    %v718 = vand.u32 %v40, 4294901760
    %719 = vmatpush1.msra.mxu0 %v718
    %720 = vmatprep.subr.mxu0 0.0
    %v721 = vand.u32 %v41, 4294901760
    %722 = vmatpush1.msra.mxu0 %v721
    %723 = vmatprep.subr.mxu0 0.0
    %v724 = vand.u32 %v42, 4294901760
    %725 = vmatpush1.msra.mxu0 %v724
    %726 = vmatprep.subr.mxu0 0.0
    %v727 = vand.u32 %v43, 4294901760
    %728 = vmatpush1.msra.mxu0 %v727
    %729 = vmatprep.subr.mxu0 0.0
    %v730 = vand.u32 %v44, 4294901760
    %731 = vmatpush1.msra.mxu0 %v730
    %732 = vmatprep.subr.mxu0 0.0
    %v733 = vand.u32 %v45, 4294901760
    %734 = vmatpush1.msra.mxu0 %v733
    %735 = vmatprep.subr.mxu0 0.0
    %v736 = vand.u32 %v46, 4294901760
    %737 = vmatpush1.msra.mxu0 %v736
    %738 = vmatprep.subr.mxu0 0.0
    %v739 = vand.u32 %v47, 4294901760
    %740 = vmatpush1.msra.mxu0 %v739
    %741 = vmatprep.subr.mxu0 0.0
    %v742 = vand.u32 %v48, 4294901760
    %743 = vmatpush1.msra.mxu0 %v742
    %744 = vmatprep.subr.mxu0 0.0
    %v745 = vand.u32 %v49, 4294901760
    %746 = vmatpush1.msra.mxu0 %v745
    %747 = vmatprep.subr.mxu0 0.0
    %v748 = vand.u32 %v50, 4294901760
    %749 = vmatpush1.msra.mxu0 %v748
    %750 = vmatprep.subr.mxu0 0.0
    %v751 = vand.u32 %v51, 4294901760
    %752 = vmatpush1.msra.mxu0 %v751
    %753 = vmatprep.subr.mxu0 0.0
    %v754 = vand.u32 %v52, 4294901760
    %755 = vmatpush1.msra.mxu0 %v754
    %756 = vmatprep.subr.mxu0 0.0
    %v757 = vand.u32 %v53, 4294901760
    %758 = vmatpush1.msra.mxu0 %v757
    %759 = vmatprep.subr.mxu0 0.0
    %v760 = vand.u32 %v54, 4294901760
    %761 = vmatpush1.msra.mxu0 %v760
    %762 = vmatprep.subr.mxu0 0.0
    %v763 = vand.u32 %v55, 4294901760
    %764 = vmatpush1.msra.mxu0 %v763
    %765 = vmatprep.subr.mxu0 0.0
    %v766 = vand.u32 %v56, 4294901760
    %767 = vmatpush1.msra.mxu0 %v766
    %768 = vmatprep.subr.mxu0 0.0
    %v769 = vand.u32 %v57, 4294901760
    %770 = vmatpush1.msra.mxu0 %v769
    %771 = vmatprep.subr.mxu0 0.0
    %v772 = vand.u32 %v58, 4294901760
    %773 = vmatpush1.msra.mxu0 %v772
    %774 = vmatprep.subr.mxu0 0.0
    %v775 = vand.u32 %v59, 4294901760
    %776 = vmatpush1.msra.mxu0 %v775
    %777 = vmatprep.subr.mxu0 0.0
    %v778 = vand.u32 %v60, 4294901760
    %779 = vmatpush1.msra.mxu0 %v778
    %780 = vmatprep.subr.mxu0 0.0
    %v781 = vand.u32 %v61, 4294901760
    %782 = vmatpush1.msra.mxu0 %v781
    %783 = vmatprep.subr.mxu0 0.0
    %v784 = vand.u32 %v62, 4294901760
    %785 = vmatpush1.msra.mxu0 %v784
    %786 = vmatprep.subr.mxu0 0.0
    %v787 = vand.u32 %v63, 4294901760
    %788 = vmatpush1.msra.mxu0 %v787
    %v789 = vand.u32 %v22, 4294901760
    %v790 = vsub.f32 %v22, %v789
    %v791 = vand.u32 %v790, 4294901760
    %792 = vmatprep.mubr.f32.mxu0 %v791
    %v793 = vand.u32 %v21, 4294901760
    %v794 = vsub.f32 %v21, %v793
    %v795 = vand.u32 %v794, 4294901760
    %796 = vmatmul.mubr.f32.gmra.mrb[0].mxu0 %v795
    %v797 = vpop.f32.mrb[0].mxu0
    %v798 = vadd.f32 %v690, %v797
    %v799 = vpop.f32.mrb[0].mxu0
    %800 = vdwg.mxu0
    %801 = vmatprep.subr.mxu0 0.0
    %v802 = vand.u32 %v32, 4294901760
    %v803 = vsub.f32 %v32, %v802
    %v804 = vand.u32 %v803, 4294901760
    %805 = vmatpush1.msra.mxu0 %v804
    %806 = vmatprep.subr.mxu0 0.0
    %v807 = vand.u32 %v33, 4294901760
    %v808 = vsub.f32 %v33, %v807
    %v809 = vand.u32 %v808, 4294901760
    %810 = vmatpush1.msra.mxu0 %v809
    %811 = vmatprep.subr.mxu0 0.0
    %v812 = vand.u32 %v34, 4294901760
    %v813 = vsub.f32 %v34, %v812
    %v814 = vand.u32 %v813, 4294901760
    %815 = vmatpush1.msra.mxu0 %v814
    %816 = vmatprep.subr.mxu0 0.0
    %v817 = vand.u32 %v35, 4294901760
    %v818 = vsub.f32 %v35, %v817
    %v819 = vand.u32 %v818, 4294901760
    %820 = vmatpush1.msra.mxu0 %v819
    %821 = vmatprep.subr.mxu0 0.0
    %v822 = vand.u32 %v36, 4294901760
    %v823 = vsub.f32 %v36, %v822
    %v824 = vand.u32 %v823, 4294901760
    %825 = vmatpush1.msra.mxu0 %v824
    %826 = vmatprep.subr.mxu0 0.0
    %v827 = vand.u32 %v37, 4294901760
    %v828 = vsub.f32 %v37, %v827
    %v829 = vand.u32 %v828, 4294901760
    %830 = vmatpush1.msra.mxu0 %v829
    %831 = vmatprep.subr.mxu0 0.0
    %v832 = vand.u32 %v38, 4294901760
    %v833 = vsub.f32 %v38, %v832
    %v834 = vand.u32 %v833, 4294901760
    %835 = vmatpush1.msra.mxu0 %v834
    %836 = vmatprep.subr.mxu0 0.0
    %v837 = vand.u32 %v39, 4294901760
    %v838 = vsub.f32 %v39, %v837
    %v839 = vand.u32 %v838, 4294901760
    %840 = vmatpush1.msra.mxu0 %v839
    %841 = vmatprep.subr.mxu0 0.0
    %v842 = vand.u32 %v40, 4294901760
    %v843 = vsub.f32 %v40, %v842
    %v844 = vand.u32 %v843, 4294901760
    %845 = vmatpush1.msra.mxu0 %v844
    %846 = vmatprep.subr.mxu0 0.0
    %v847 = vand.u32 %v41, 4294901760
    %v848 = vsub.f32 %v41, %v847
    %v849 = vand.u32 %v848, 4294901760
    %850 = vmatpush1.msra.mxu0 %v849
    %851 = vmatprep.subr.mxu0 0.0
    %v852 = vand.u32 %v42, 4294901760
    %v853 = vsub.f32 %v42, %v852
    %v854 = vand.u32 %v853, 4294901760
    %855 = vmatpush1.msra.mxu0 %v854
    %856 = vmatprep.subr.mxu0 0.0
    %v857 = vand.u32 %v43, 4294901760
    %v858 = vsub.f32 %v43, %v857
    %v859 = vand.u32 %v858, 4294901760
    %860 = vmatpush1.msra.mxu0 %v859
    %861 = vmatprep.subr.mxu0 0.0
    %v862 = vand.u32 %v44, 4294901760
    %v863 = vsub.f32 %v44, %v862
    %v864 = vand.u32 %v863, 4294901760
    %865 = vmatpush1.msra.mxu0 %v864
    %866 = vmatprep.subr.mxu0 0.0
    %v867 = vand.u32 %v45, 4294901760
    %v868 = vsub.f32 %v45, %v867
    %v869 = vand.u32 %v868, 4294901760
    %870 = vmatpush1.msra.mxu0 %v869
    %871 = vmatprep.subr.mxu0 0.0
    %v872 = vand.u32 %v46, 4294901760
    %v873 = vsub.f32 %v46, %v872
    %v874 = vand.u32 %v873, 4294901760
    %875 = vmatpush1.msra.mxu0 %v874
    %876 = vmatprep.subr.mxu0 0.0
    %v877 = vand.u32 %v47, 4294901760
    %v878 = vsub.f32 %v47, %v877
    %v879 = vand.u32 %v878, 4294901760
    %880 = vmatpush1.msra.mxu0 %v879
    %881 = vmatprep.subr.mxu0 0.0
    %v882 = vand.u32 %v48, 4294901760
    %v883 = vsub.f32 %v48, %v882
    %v884 = vand.u32 %v883, 4294901760
    %885 = vmatpush1.msra.mxu0 %v884
    %886 = vmatprep.subr.mxu0 0.0
    %v887 = vand.u32 %v49, 4294901760
    %v888 = vsub.f32 %v49, %v887
    %v889 = vand.u32 %v888, 4294901760
    %890 = vmatpush1.msra.mxu0 %v889
    %891 = vmatprep.subr.mxu0 0.0
    %v892 = vand.u32 %v50, 4294901760
    %v893 = vsub.f32 %v50, %v892
    %v894 = vand.u32 %v893, 4294901760
    %895 = vmatpush1.msra.mxu0 %v894
    %896 = vmatprep.subr.mxu0 0.0
    %v897 = vand.u32 %v51, 4294901760
    %v898 = vsub.f32 %v51, %v897
    %v899 = vand.u32 %v898, 4294901760
    %900 = vmatpush1.msra.mxu0 %v899
    %901 = vmatprep.subr.mxu0 0.0
    %v902 = vand.u32 %v52, 4294901760
    %v903 = vsub.f32 %v52, %v902
    %v904 = vand.u32 %v903, 4294901760
    %905 = vmatpush1.msra.mxu0 %v904
    %906 = vmatprep.subr.mxu0 0.0
    %v907 = vand.u32 %v53, 4294901760
    %v908 = vsub.f32 %v53, %v907
    %v909 = vand.u32 %v908, 4294901760
    %910 = vmatpush1.msra.mxu0 %v909
    %911 = vmatprep.subr.mxu0 0.0
    %v912 = vand.u32 %v54, 4294901760
    %v913 = vsub.f32 %v54, %v912
    %v914 = vand.u32 %v913, 4294901760
    %915 = vmatpush1.msra.mxu0 %v914
    %916 = vmatprep.subr.mxu0 0.0
    %v917 = vand.u32 %v55, 4294901760
    %v918 = vsub.f32 %v55, %v917
    %v919 = vand.u32 %v918, 4294901760
    %920 = vmatpush1.msra.mxu0 %v919
    %921 = vmatprep.subr.mxu0 0.0
    %v922 = vand.u32 %v56, 4294901760
    %v923 = vsub.f32 %v56, %v922
    %v924 = vand.u32 %v923, 4294901760
    %925 = vmatpush1.msra.mxu0 %v924
    %926 = vmatprep.subr.mxu0 0.0
    %v927 = vand.u32 %v57, 4294901760
    %v928 = vsub.f32 %v57, %v927
    %v929 = vand.u32 %v928, 4294901760
    %930 = vmatpush1.msra.mxu0 %v929
    %931 = vmatprep.subr.mxu0 0.0
    %v932 = vand.u32 %v58, 4294901760
    %v933 = vsub.f32 %v58, %v932
    %v934 = vand.u32 %v933, 4294901760
    %935 = vmatpush1.msra.mxu0 %v934
    %936 = vmatprep.subr.mxu0 0.0
    %v937 = vand.u32 %v59, 4294901760
    %v938 = vsub.f32 %v59, %v937
    %v939 = vand.u32 %v938, 4294901760
    %940 = vmatpush1.msra.mxu0 %v939
    %941 = vmatprep.subr.mxu0 0.0
    %v942 = vand.u32 %v60, 4294901760
    %v943 = vsub.f32 %v60, %v942
    %v944 = vand.u32 %v943, 4294901760
    %945 = vmatpush1.msra.mxu0 %v944
    %946 = vmatprep.subr.mxu0 0.0
    %v947 = vand.u32 %v61, 4294901760
    %v948 = vsub.f32 %v61, %v947
    %v949 = vand.u32 %v948, 4294901760
    %950 = vmatpush1.msra.mxu0 %v949
    %951 = vmatprep.subr.mxu0 0.0
    %v952 = vand.u32 %v62, 4294901760
    %v953 = vsub.f32 %v62, %v952
    %v954 = vand.u32 %v953, 4294901760
    %955 = vmatpush1.msra.mxu0 %v954
    %956 = vmatprep.subr.mxu0 0.0
    %v957 = vand.u32 %v63, 4294901760
    %v958 = vsub.f32 %v63, %v957
    %v959 = vand.u32 %v958, 4294901760
    %960 = vmatpush1.msra.mxu0 %v959
    %v961 = vand.u32 %v22, 4294901760
    %962 = vmatprep.mubr.f32.mxu0 %v961
    %v963 = vand.u32 %v21, 4294901760
    %964 = vmatmul.mubr.f32.gmra.mrb[0].mxu0 %v963
    %v965 = vpop.f32.mrb[0].mxu0
    %v966 = vadd.f32 %v798, %v965
    %v967 = vpop.f32.mrb[0].mxu0
    %968 = vdwg.mxu0
    %969 = vmatprep.subr.mxu0 0.0
    %v970 = vand.u32 %v32, 4294901760
    %971 = vmatpush1.msra.mxu0 %v970
    %972 = vmatprep.subr.mxu0 0.0
    %v973 = vand.u32 %v33, 4294901760
    %974 = vmatpush1.msra.mxu0 %v973
    %975 = vmatprep.subr.mxu0 0.0
    %v976 = vand.u32 %v34, 4294901760
    %977 = vmatpush1.msra.mxu0 %v976
    %978 = vmatprep.subr.mxu0 0.0
    %v979 = vand.u32 %v35, 4294901760
    %980 = vmatpush1.msra.mxu0 %v979
    %981 = vmatprep.subr.mxu0 0.0
    %v982 = vand.u32 %v36, 4294901760
    %983 = vmatpush1.msra.mxu0 %v982
    %984 = vmatprep.subr.mxu0 0.0
    %v985 = vand.u32 %v37, 4294901760
    %986 = vmatpush1.msra.mxu0 %v985
    %987 = vmatprep.subr.mxu0 0.0
    %v988 = vand.u32 %v38, 4294901760
    %989 = vmatpush1.msra.mxu0 %v988
    %990 = vmatprep.subr.mxu0 0.0
    %v991 = vand.u32 %v39, 4294901760
    %992 = vmatpush1.msra.mxu0 %v991
    %993 = vmatprep.subr.mxu0 0.0
    %v994 = vand.u32 %v40, 4294901760
    %995 = vmatpush1.msra.mxu0 %v994
    %996 = vmatprep.subr.mxu0 0.0
    %v997 = vand.u32 %v41, 4294901760
    %998 = vmatpush1.msra.mxu0 %v997
    %999 = vmatprep.subr.mxu0 0.0
    %v1000 = vand.u32 %v42, 4294901760
    %1001 = vmatpush1.msra.mxu0 %v1000
    %1002 = vmatprep.subr.mxu0 0.0
    %v1003 = vand.u32 %v43, 4294901760
    %1004 = vmatpush1.msra.mxu0 %v1003
    %1005 = vmatprep.subr.mxu0 0.0
    %v1006 = vand.u32 %v44, 4294901760
    %1007 = vmatpush1.msra.mxu0 %v1006
    %1008 = vmatprep.subr.mxu0 0.0
    %v1009 = vand.u32 %v45, 4294901760
    %1010 = vmatpush1.msra.mxu0 %v1009
    %1011 = vmatprep.subr.mxu0 0.0
    %v1012 = vand.u32 %v46, 4294901760
    %1013 = vmatpush1.msra.mxu0 %v1012
    %1014 = vmatprep.subr.mxu0 0.0
    %v1015 = vand.u32 %v47, 4294901760
    %1016 = vmatpush1.msra.mxu0 %v1015
    %1017 = vmatprep.subr.mxu0 0.0
    %v1018 = vand.u32 %v48, 4294901760
    %1019 = vmatpush1.msra.mxu0 %v1018
    %1020 = vmatprep.subr.mxu0 0.0
    %v1021 = vand.u32 %v49, 4294901760
    %1022 = vmatpush1.msra.mxu0 %v1021
    %1023 = vmatprep.subr.mxu0 0.0
    %v1024 = vand.u32 %v50, 4294901760
    %1025 = vmatpush1.msra.mxu0 %v1024
    %1026 = vmatprep.subr.mxu0 0.0
    %v1027 = vand.u32 %v51, 4294901760
    %1028 = vmatpush1.msra.mxu0 %v1027
    %1029 = vmatprep.subr.mxu0 0.0
    %v1030 = vand.u32 %v52, 4294901760
    %1031 = vmatpush1.msra.mxu0 %v1030
    %1032 = vmatprep.subr.mxu0 0.0
    %v1033 = vand.u32 %v53, 4294901760
    %1034 = vmatpush1.msra.mxu0 %v1033
    %1035 = vmatprep.subr.mxu0 0.0
    %v1036 = vand.u32 %v54, 4294901760
    %1037 = vmatpush1.msra.mxu0 %v1036
    %1038 = vmatprep.subr.mxu0 0.0
    %v1039 = vand.u32 %v55, 4294901760
    %1040 = vmatpush1.msra.mxu0 %v1039
    %1041 = vmatprep.subr.mxu0 0.0
    %v1042 = vand.u32 %v56, 4294901760
    %1043 = vmatpush1.msra.mxu0 %v1042
    %1044 = vmatprep.subr.mxu0 0.0
    %v1045 = vand.u32 %v57, 4294901760
    %1046 = vmatpush1.msra.mxu0 %v1045
    %1047 = vmatprep.subr.mxu0 0.0
    %v1048 = vand.u32 %v58, 4294901760
    %1049 = vmatpush1.msra.mxu0 %v1048
    %1050 = vmatprep.subr.mxu0 0.0
    %v1051 = vand.u32 %v59, 4294901760
    %1052 = vmatpush1.msra.mxu0 %v1051
    %1053 = vmatprep.subr.mxu0 0.0
    %v1054 = vand.u32 %v60, 4294901760
    %1055 = vmatpush1.msra.mxu0 %v1054
    %1056 = vmatprep.subr.mxu0 0.0
    %v1057 = vand.u32 %v61, 4294901760
    %1058 = vmatpush1.msra.mxu0 %v1057
    %1059 = vmatprep.subr.mxu0 0.0
    %v1060 = vand.u32 %v62, 4294901760
    %1061 = vmatpush1.msra.mxu0 %v1060
    %1062 = vmatprep.subr.mxu0 0.0
    %v1063 = vand.u32 %v63, 4294901760
    %1064 = vmatpush1.msra.mxu0 %v1063
    %v1065 = vand.u32 %v22, 4294901760
    %1066 = vmatprep.mubr.f32.mxu0 %v1065
    %v1067 = vand.u32 %v21, 4294901760
    %1068 = vmatmul.mubr.f32.gmra.mrb[0].mxu0 %v1067
    %v1069 = vpop.f32.mrb[0].mxu0
    %v1070 = vadd.f32 %v966, %v1069
    %v1071 = vpop.f32.mrb[0].mxu0
    %1072 = vdwg.mxu0
    %1073 = vmatprep.subr.mxu0 0.0
    %v1074 = vand.u32 %v64, 4294901760
    %1075 = vmatpush1.msra.mxu0 %v1074
    %1076 = vmatprep.subr.mxu0 0.0
    %v1077 = vand.u32 %v65, 4294901760
    %1078 = vmatpush1.msra.mxu0 %v1077
    %1079 = vmatprep.subr.mxu0 0.0
    %v1080 = vand.u32 %v66, 4294901760
    %1081 = vmatpush1.msra.mxu0 %v1080
    %1082 = vmatprep.subr.mxu0 0.0
    %v1083 = vand.u32 %v67, 4294901760
    %1084 = vmatpush1.msra.mxu0 %v1083
    %1085 = vmatprep.subr.mxu0 0.0
    %v1086 = vand.u32 %v68, 4294901760
    %1087 = vmatpush1.msra.mxu0 %v1086
    %1088 = vmatprep.subr.mxu0 0.0
    %v1089 = vand.u32 %v69, 4294901760
    %1090 = vmatpush1.msra.mxu0 %v1089
    %1091 = vmatprep.subr.mxu0 0.0
    %v1092 = vand.u32 %v70, 4294901760
    %1093 = vmatpush1.msra.mxu0 %v1092
    %1094 = vmatprep.subr.mxu0 0.0
    %v1095 = vand.u32 %v71, 4294901760
    %1096 = vmatpush1.msra.mxu0 %v1095
    %1097 = vmatprep.subr.mxu0 0.0
    %v1098 = vand.u32 %v72, 4294901760
    %1099 = vmatpush1.msra.mxu0 %v1098
    %1100 = vmatprep.subr.mxu0 0.0
    %v1101 = vand.u32 %v73, 4294901760
    %1102 = vmatpush1.msra.mxu0 %v1101
    %1103 = vmatprep.subr.mxu0 0.0
    %v1104 = vand.u32 %v74, 4294901760
    %1105 = vmatpush1.msra.mxu0 %v1104
    %1106 = vmatprep.subr.mxu0 0.0
    %v1107 = vand.u32 %v75, 4294901760
    %1108 = vmatpush1.msra.mxu0 %v1107
    %1109 = vmatprep.subr.mxu0 0.0
    %v1110 = vand.u32 %v76, 4294901760
    %1111 = vmatpush1.msra.mxu0 %v1110
    %1112 = vmatprep.subr.mxu0 0.0
    %v1113 = vand.u32 %v77, 4294901760
    %1114 = vmatpush1.msra.mxu0 %v1113
    %1115 = vmatprep.subr.mxu0 0.0
    %v1116 = vand.u32 %v78, 4294901760
    %1117 = vmatpush1.msra.mxu0 %v1116
    %1118 = vmatprep.subr.mxu0 0.0
    %v1119 = vand.u32 %v79, 4294901760
    %1120 = vmatpush1.msra.mxu0 %v1119
    %1121 = vmatprep.subr.mxu0 0.0
    %v1122 = vand.u32 %v80, 4294901760
    %1123 = vmatpush1.msra.mxu0 %v1122
    %1124 = vmatprep.subr.mxu0 0.0
    %v1125 = vand.u32 %v81, 4294901760
    %1126 = vmatpush1.msra.mxu0 %v1125
    %1127 = vmatprep.subr.mxu0 0.0
    %v1128 = vand.u32 %v82, 4294901760
    %1129 = vmatpush1.msra.mxu0 %v1128
    %1130 = vmatprep.subr.mxu0 0.0
    %v1131 = vand.u32 %v83, 4294901760
    %1132 = vmatpush1.msra.mxu0 %v1131
    %1133 = vmatprep.subr.mxu0 0.0
    %v1134 = vand.u32 %v84, 4294901760
    %1135 = vmatpush1.msra.mxu0 %v1134
    %1136 = vmatprep.subr.mxu0 0.0
    %v1137 = vand.u32 %v85, 4294901760
    %1138 = vmatpush1.msra.mxu0 %v1137
    %1139 = vmatprep.subr.mxu0 0.0
    %v1140 = vand.u32 %v86, 4294901760
    %1141 = vmatpush1.msra.mxu0 %v1140
    %1142 = vmatprep.subr.mxu0 0.0
    %v1143 = vand.u32 %v87, 4294901760
    %1144 = vmatpush1.msra.mxu0 %v1143
    %1145 = vmatprep.subr.mxu0 0.0
    %v1146 = vand.u32 %v88, 4294901760
    %1147 = vmatpush1.msra.mxu0 %v1146
    %1148 = vmatprep.subr.mxu0 0.0
    %v1149 = vand.u32 %v89, 4294901760
    %1150 = vmatpush1.msra.mxu0 %v1149
    %1151 = vmatprep.subr.mxu0 0.0
    %v1152 = vand.u32 %v90, 4294901760
    %1153 = vmatpush1.msra.mxu0 %v1152
    %1154 = vmatprep.subr.mxu0 0.0
    %v1155 = vand.u32 %v91, 4294901760
    %1156 = vmatpush1.msra.mxu0 %v1155
    %1157 = vmatprep.subr.mxu0 0.0
    %v1158 = vand.u32 %v92, 4294901760
    %1159 = vmatpush1.msra.mxu0 %v1158
    %1160 = vmatprep.subr.mxu0 0.0
    %v1161 = vand.u32 %v93, 4294901760
    %1162 = vmatpush1.msra.mxu0 %v1161
    %1163 = vmatprep.subr.mxu0 0.0
    %v1164 = vand.u32 %v94, 4294901760
    %1165 = vmatpush1.msra.mxu0 %v1164
    %1166 = vmatprep.subr.mxu0 0.0
    %v1167 = vand.u32 %v95, 4294901760
    %1168 = vmatpush1.msra.mxu0 %v1167
    %v1169 = vand.u32 %v24, 4294901760
    %v1170 = vsub.f32 %v24, %v1169
    %v1171 = vand.u32 %v1170, 4294901760
    %v1172 = vsub.f32 %v1170, %v1171
    %v1173 = vand.u32 %v1172, 4294901760
    %1174 = vmatprep.mubr.f32.mxu0 %v1173
    %v1175 = vand.u32 %v23, 4294901760
    %v1176 = vsub.f32 %v23, %v1175
    %v1177 = vand.u32 %v1176, 4294901760
    %v1178 = vsub.f32 %v1176, %v1177
    %v1179 = vand.u32 %v1178, 4294901760
    %1180 = vmatmul.mubr.f32.gmra.mrb[0].mxu0 %v1179
    %v1181 = vpop.f32.mrb[0].mxu0
    %v1182 = vadd.f32 %v1070, %v1181
    %v1183 = vpop.f32.mrb[0].mxu0
    %1184 = vdwg.mxu0
    %1185 = vmatprep.subr.mxu0 0.0
    %v1186 = vand.u32 %v64, 4294901760
    %v1187 = vsub.f32 %v64, %v1186
    %v1188 = vand.u32 %v1187, 4294901760
    %v1189 = vsub.f32 %v1187, %v1188
    %v1190 = vand.u32 %v1189, 4294901760
    %1191 = vmatpush1.msra.mxu0 %v1190
    %1192 = vmatprep.subr.mxu0 0.0
    %v1193 = vand.u32 %v65, 4294901760
    %v1194 = vsub.f32 %v65, %v1193
    %v1195 = vand.u32 %v1194, 4294901760
    %v1196 = vsub.f32 %v1194, %v1195
    %v1197 = vand.u32 %v1196, 4294901760
    %1198 = vmatpush1.msra.mxu0 %v1197
    %1199 = vmatprep.subr.mxu0 0.0
    %v1200 = vand.u32 %v66, 4294901760
    %v1201 = vsub.f32 %v66, %v1200
    %v1202 = vand.u32 %v1201, 4294901760
    %v1203 = vsub.f32 %v1201, %v1202
    %v1204 = vand.u32 %v1203, 4294901760
    %1205 = vmatpush1.msra.mxu0 %v1204
    %1206 = vmatprep.subr.mxu0 0.0
    %v1207 = vand.u32 %v67, 4294901760
    %v1208 = vsub.f32 %v67, %v1207
    %v1209 = vand.u32 %v1208, 4294901760
    %v1210 = vsub.f32 %v1208, %v1209
    %v1211 = vand.u32 %v1210, 4294901760
    %1212 = vmatpush1.msra.mxu0 %v1211
    %1213 = vmatprep.subr.mxu0 0.0
    %v1214 = vand.u32 %v68, 4294901760
    %v1215 = vsub.f32 %v68, %v1214
    %v1216 = vand.u32 %v1215, 4294901760
    %v1217 = vsub.f32 %v1215, %v1216
    %v1218 = vand.u32 %v1217, 4294901760
    %1219 = vmatpush1.msra.mxu0 %v1218
    %1220 = vmatprep.subr.mxu0 0.0
    %v1221 = vand.u32 %v69, 4294901760
    %v1222 = vsub.f32 %v69, %v1221
    %v1223 = vand.u32 %v1222, 4294901760
    %v1224 = vsub.f32 %v1222, %v1223
    %v1225 = vand.u32 %v1224, 4294901760
    %1226 = vmatpush1.msra.mxu0 %v1225
    %1227 = vmatprep.subr.mxu0 0.0
    %v1228 = vand.u32 %v70, 4294901760
    %v1229 = vsub.f32 %v70, %v1228
    %v1230 = vand.u32 %v1229, 4294901760
    %v1231 = vsub.f32 %v1229, %v1230
    %v1232 = vand.u32 %v1231, 4294901760
    %1233 = vmatpush1.msra.mxu0 %v1232
    %1234 = vmatprep.subr.mxu0 0.0
    %v1235 = vand.u32 %v71, 4294901760
    %v1236 = vsub.f32 %v71, %v1235
    %v1237 = vand.u32 %v1236, 4294901760
    %v1238 = vsub.f32 %v1236, %v1237
    %v1239 = vand.u32 %v1238, 4294901760
    %1240 = vmatpush1.msra.mxu0 %v1239
    %1241 = vmatprep.subr.mxu0 0.0
    %v1242 = vand.u32 %v72, 4294901760
    %v1243 = vsub.f32 %v72, %v1242
    %v1244 = vand.u32 %v1243, 4294901760
    %v1245 = vsub.f32 %v1243, %v1244
    %v1246 = vand.u32 %v1245, 4294901760
    %1247 = vmatpush1.msra.mxu0 %v1246
    %1248 = vmatprep.subr.mxu0 0.0
    %v1249 = vand.u32 %v73, 4294901760
    %v1250 = vsub.f32 %v73, %v1249
    %v1251 = vand.u32 %v1250, 4294901760
    %v1252 = vsub.f32 %v1250, %v1251
    %v1253 = vand.u32 %v1252, 4294901760
    %1254 = vmatpush1.msra.mxu0 %v1253
    %1255 = vmatprep.subr.mxu0 0.0
    %v1256 = vand.u32 %v74, 4294901760
    %v1257 = vsub.f32 %v74, %v1256
    %v1258 = vand.u32 %v1257, 4294901760
    %v1259 = vsub.f32 %v1257, %v1258
    %v1260 = vand.u32 %v1259, 4294901760
    %1261 = vmatpush1.msra.mxu0 %v1260
    %1262 = vmatprep.subr.mxu0 0.0
    %v1263 = vand.u32 %v75, 4294901760
    %v1264 = vsub.f32 %v75, %v1263
    %v1265 = vand.u32 %v1264, 4294901760
    %v1266 = vsub.f32 %v1264, %v1265
    %v1267 = vand.u32 %v1266, 4294901760
    %1268 = vmatpush1.msra.mxu0 %v1267
    %1269 = vmatprep.subr.mxu0 0.0
    %v1270 = vand.u32 %v76, 4294901760
    %v1271 = vsub.f32 %v76, %v1270
    %v1272 = vand.u32 %v1271, 4294901760
    %v1273 = vsub.f32 %v1271, %v1272
    %v1274 = vand.u32 %v1273, 4294901760
    %1275 = vmatpush1.msra.mxu0 %v1274
    %1276 = vmatprep.subr.mxu0 0.0
    %v1277 = vand.u32 %v77, 4294901760
    %v1278 = vsub.f32 %v77, %v1277
    %v1279 = vand.u32 %v1278, 4294901760
    %v1280 = vsub.f32 %v1278, %v1279
    %v1281 = vand.u32 %v1280, 4294901760
    %1282 = vmatpush1.msra.mxu0 %v1281
    %1283 = vmatprep.subr.mxu0 0.0
    %v1284 = vand.u32 %v78, 4294901760
    %v1285 = vsub.f32 %v78, %v1284
    %v1286 = vand.u32 %v1285, 4294901760
    %v1287 = vsub.f32 %v1285, %v1286
    %v1288 = vand.u32 %v1287, 4294901760
    %1289 = vmatpush1.msra.mxu0 %v1288
    %1290 = vmatprep.subr.mxu0 0.0
    %v1291 = vand.u32 %v79, 4294901760
    %v1292 = vsub.f32 %v79, %v1291
    %v1293 = vand.u32 %v1292, 4294901760
    %v1294 = vsub.f32 %v1292, %v1293
    %v1295 = vand.u32 %v1294, 4294901760
    %1296 = vmatpush1.msra.mxu0 %v1295
    %1297 = vmatprep.subr.mxu0 0.0
    %v1298 = vand.u32 %v80, 4294901760
    %v1299 = vsub.f32 %v80, %v1298
    %v1300 = vand.u32 %v1299, 4294901760
    %v1301 = vsub.f32 %v1299, %v1300
    %v1302 = vand.u32 %v1301, 4294901760
    %1303 = vmatpush1.msra.mxu0 %v1302
    %1304 = vmatprep.subr.mxu0 0.0
    %v1305 = vand.u32 %v81, 4294901760
    %v1306 = vsub.f32 %v81, %v1305
    %v1307 = vand.u32 %v1306, 4294901760
    %v1308 = vsub.f32 %v1306, %v1307
    %v1309 = vand.u32 %v1308, 4294901760
    %1310 = vmatpush1.msra.mxu0 %v1309
    %1311 = vmatprep.subr.mxu0 0.0
    %v1312 = vand.u32 %v82, 4294901760
    %v1313 = vsub.f32 %v82, %v1312
    %v1314 = vand.u32 %v1313, 4294901760
    %v1315 = vsub.f32 %v1313, %v1314
    %v1316 = vand.u32 %v1315, 4294901760
    %1317 = vmatpush1.msra.mxu0 %v1316
    %1318 = vmatprep.subr.mxu0 0.0
    %v1319 = vand.u32 %v83, 4294901760
    %v1320 = vsub.f32 %v83, %v1319
    %v1321 = vand.u32 %v1320, 4294901760
    %v1322 = vsub.f32 %v1320, %v1321
    %v1323 = vand.u32 %v1322, 4294901760
    %1324 = vmatpush1.msra.mxu0 %v1323
    %1325 = vmatprep.subr.mxu0 0.0
    %v1326 = vand.u32 %v84, 4294901760
    %v1327 = vsub.f32 %v84, %v1326
    %v1328 = vand.u32 %v1327, 4294901760
    %v1329 = vsub.f32 %v1327, %v1328
    %v1330 = vand.u32 %v1329, 4294901760
    %1331 = vmatpush1.msra.mxu0 %v1330
    %1332 = vmatprep.subr.mxu0 0.0
    %v1333 = vand.u32 %v85, 4294901760
    %v1334 = vsub.f32 %v85, %v1333
    %v1335 = vand.u32 %v1334, 4294901760
    %v1336 = vsub.f32 %v1334, %v1335
    %v1337 = vand.u32 %v1336, 4294901760
    %1338 = vmatpush1.msra.mxu0 %v1337
    %1339 = vmatprep.subr.mxu0 0.0
    %v1340 = vand.u32 %v86, 4294901760
    %v1341 = vsub.f32 %v86, %v1340
    %v1342 = vand.u32 %v1341, 4294901760
    %v1343 = vsub.f32 %v1341, %v1342
    %v1344 = vand.u32 %v1343, 4294901760
    %1345 = vmatpush1.msra.mxu0 %v1344
    %1346 = vmatprep.subr.mxu0 0.0
    %v1347 = vand.u32 %v87, 4294901760
    %v1348 = vsub.f32 %v87, %v1347
    %v1349 = vand.u32 %v1348, 4294901760
    %v1350 = vsub.f32 %v1348, %v1349
    %v1351 = vand.u32 %v1350, 4294901760
    %1352 = vmatpush1.msra.mxu0 %v1351
    %1353 = vmatprep.subr.mxu0 0.0
    %v1354 = vand.u32 %v88, 4294901760
    %v1355 = vsub.f32 %v88, %v1354
    %v1356 = vand.u32 %v1355, 4294901760
    %v1357 = vsub.f32 %v1355, %v1356
    %v1358 = vand.u32 %v1357, 4294901760
    %1359 = vmatpush1.msra.mxu0 %v1358
    %1360 = vmatprep.subr.mxu0 0.0
    %v1361 = vand.u32 %v89, 4294901760
    %v1362 = vsub.f32 %v89, %v1361
    %v1363 = vand.u32 %v1362, 4294901760
    %v1364 = vsub.f32 %v1362, %v1363
    %v1365 = vand.u32 %v1364, 4294901760
    %1366 = vmatpush1.msra.mxu0 %v1365
    %1367 = vmatprep.subr.mxu0 0.0
    %v1368 = vand.u32 %v90, 4294901760
    %v1369 = vsub.f32 %v90, %v1368
    %v1370 = vand.u32 %v1369, 4294901760
    %v1371 = vsub.f32 %v1369, %v1370
    %v1372 = vand.u32 %v1371, 4294901760
    %1373 = vmatpush1.msra.mxu0 %v1372
    %1374 = vmatprep.subr.mxu0 0.0
    %v1375 = vand.u32 %v91, 4294901760
    %v1376 = vsub.f32 %v91, %v1375
    %v1377 = vand.u32 %v1376, 4294901760
    %v1378 = vsub.f32 %v1376, %v1377
    %v1379 = vand.u32 %v1378, 4294901760
    %1380 = vmatpush1.msra.mxu0 %v1379
    %1381 = vmatprep.subr.mxu0 0.0
    %v1382 = vand.u32 %v92, 4294901760
    %v1383 = vsub.f32 %v92, %v1382
    %v1384 = vand.u32 %v1383, 4294901760
    %v1385 = vsub.f32 %v1383, %v1384
    %v1386 = vand.u32 %v1385, 4294901760
    %1387 = vmatpush1.msra.mxu0 %v1386
    %1388 = vmatprep.subr.mxu0 0.0
    %v1389 = vand.u32 %v93, 4294901760
    %v1390 = vsub.f32 %v93, %v1389
    %v1391 = vand.u32 %v1390, 4294901760
    %v1392 = vsub.f32 %v1390, %v1391
    %v1393 = vand.u32 %v1392, 4294901760
    %1394 = vmatpush1.msra.mxu0 %v1393
    %1395 = vmatprep.subr.mxu0 0.0
    %v1396 = vand.u32 %v94, 4294901760
    %v1397 = vsub.f32 %v94, %v1396
    %v1398 = vand.u32 %v1397, 4294901760
    %v1399 = vsub.f32 %v1397, %v1398
    %v1400 = vand.u32 %v1399, 4294901760
    %1401 = vmatpush1.msra.mxu0 %v1400
    %1402 = vmatprep.subr.mxu0 0.0
    %v1403 = vand.u32 %v95, 4294901760
    %v1404 = vsub.f32 %v95, %v1403
    %v1405 = vand.u32 %v1404, 4294901760
    %v1406 = vsub.f32 %v1404, %v1405
    %v1407 = vand.u32 %v1406, 4294901760
    %1408 = vmatpush1.msra.mxu0 %v1407
    %v1409 = vand.u32 %v24, 4294901760
    %1410 = vmatprep.mubr.f32.mxu0 %v1409
    %v1411 = vand.u32 %v23, 4294901760
    %1412 = vmatmul.mubr.f32.gmra.mrb[0].mxu0 %v1411
    %v1413 = vpop.f32.mrb[0].mxu0
    %v1414 = vadd.f32 %v1182, %v1413
    %v1415 = vpop.f32.mrb[0].mxu0
    %1416 = vdwg.mxu0
    %1417 = vmatprep.subr.mxu0 0.0
    %v1418 = vand.u32 %v64, 4294901760
    %v1419 = vsub.f32 %v64, %v1418
    %1420 = vmatpush1.msra.mxu0 %v1419
    %1421 = vmatprep.subr.mxu0 0.0
    %v1422 = vand.u32 %v65, 4294901760
    %v1423 = vsub.f32 %v65, %v1422
    %1424 = vmatpush1.msra.mxu0 %v1423
    %1425 = vmatprep.subr.mxu0 0.0
    %v1426 = vand.u32 %v66, 4294901760
    %v1427 = vsub.f32 %v66, %v1426
    %1428 = vmatpush1.msra.mxu0 %v1427
    %1429 = vmatprep.subr.mxu0 0.0
    %v1430 = vand.u32 %v67, 4294901760
    %v1431 = vsub.f32 %v67, %v1430
    %1432 = vmatpush1.msra.mxu0 %v1431
    %1433 = vmatprep.subr.mxu0 0.0
    %v1434 = vand.u32 %v68, 4294901760
    %v1435 = vsub.f32 %v68, %v1434
    %1436 = vmatpush1.msra.mxu0 %v1435
    %1437 = vmatprep.subr.mxu0 0.0
    %v1438 = vand.u32 %v69, 4294901760
    %v1439 = vsub.f32 %v69, %v1438
    %1440 = vmatpush1.msra.mxu0 %v1439
    %1441 = vmatprep.subr.mxu0 0.0
    %v1442 = vand.u32 %v70, 4294901760
    %v1443 = vsub.f32 %v70, %v1442
    %1444 = vmatpush1.msra.mxu0 %v1443
    %1445 = vmatprep.subr.mxu0 0.0
    %v1446 = vand.u32 %v71, 4294901760
    %v1447 = vsub.f32 %v71, %v1446
    %1448 = vmatpush1.msra.mxu0 %v1447
    %1449 = vmatprep.subr.mxu0 0.0
    %v1450 = vand.u32 %v72, 4294901760
    %v1451 = vsub.f32 %v72, %v1450
    %1452 = vmatpush1.msra.mxu0 %v1451
    %1453 = vmatprep.subr.mxu0 0.0
    %v1454 = vand.u32 %v73, 4294901760
    %v1455 = vsub.f32 %v73, %v1454
    %1456 = vmatpush1.msra.mxu0 %v1455
    %1457 = vmatprep.subr.mxu0 0.0
    %v1458 = vand.u32 %v74, 4294901760
    %v1459 = vsub.f32 %v74, %v1458
    %1460 = vmatpush1.msra.mxu0 %v1459
    %1461 = vmatprep.subr.mxu0 0.0
    %v1462 = vand.u32 %v75, 4294901760
    %v1463 = vsub.f32 %v75, %v1462
    %1464 = vmatpush1.msra.mxu0 %v1463
    %1465 = vmatprep.subr.mxu0 0.0
    %v1466 = vand.u32 %v76, 4294901760
    %v1467 = vsub.f32 %v76, %v1466
    %1468 = vmatpush1.msra.mxu0 %v1467
    %1469 = vmatprep.subr.mxu0 0.0
    %v1470 = vand.u32 %v77, 4294901760
    %v1471 = vsub.f32 %v77, %v1470
    %1472 = vmatpush1.msra.mxu0 %v1471
    %1473 = vmatprep.subr.mxu0 0.0
    %v1474 = vand.u32 %v78, 4294901760
    %v1475 = vsub.f32 %v78, %v1474
    %1476 = vmatpush1.msra.mxu0 %v1475
    %1477 = vmatprep.subr.mxu0 0.0
    %v1478 = vand.u32 %v79, 4294901760
    %v1479 = vsub.f32 %v79, %v1478
    %1480 = vmatpush1.msra.mxu0 %v1479
    %1481 = vmatprep.subr.mxu0 0.0
    %v1482 = vand.u32 %v80, 4294901760
    %v1483 = vsub.f32 %v80, %v1482
    %1484 = vmatpush1.msra.mxu0 %v1483
    %1485 = vmatprep.subr.mxu0 0.0
    %v1486 = vand.u32 %v81, 4294901760
    %v1487 = vsub.f32 %v81, %v1486
    %1488 = vmatpush1.msra.mxu0 %v1487
    %1489 = vmatprep.subr.mxu0 0.0
    %v1490 = vand.u32 %v82, 4294901760
    %v1491 = vsub.f32 %v82, %v1490
    %1492 = vmatpush1.msra.mxu0 %v1491
    %1493 = vmatprep.subr.mxu0 0.0
    %v1494 = vand.u32 %v83, 4294901760
    %v1495 = vsub.f32 %v83, %v1494
    %1496 = vmatpush1.msra.mxu0 %v1495
    %1497 = vmatprep.subr.mxu0 0.0
    %v1498 = vand.u32 %v84, 4294901760
    %v1499 = vsub.f32 %v84, %v1498
    %1500 = vmatpush1.msra.mxu0 %v1499
    %1501 = vmatprep.subr.mxu0 0.0
    %v1502 = vand.u32 %v85, 4294901760
    %v1503 = vsub.f32 %v85, %v1502
    %1504 = vmatpush1.msra.mxu0 %v1503
    %1505 = vmatprep.subr.mxu0 0.0
    %v1506 = vand.u32 %v86, 4294901760
    %v1507 = vsub.f32 %v86, %v1506
    %1508 = vmatpush1.msra.mxu0 %v1507
    %1509 = vmatprep.subr.mxu0 0.0
    %v1510 = vand.u32 %v87, 4294901760
    %v1511 = vsub.f32 %v87, %v1510
    %1512 = vmatpush1.msra.mxu0 %v1511
    %1513 = vmatprep.subr.mxu0 0.0
    %v1514 = vand.u32 %v88, 4294901760
    %v1515 = vsub.f32 %v88, %v1514
    %1516 = vmatpush1.msra.mxu0 %v1515
    %1517 = vmatprep.subr.mxu0 0.0
    %v1518 = vand.u32 %v89, 4294901760
    %v1519 = vsub.f32 %v89, %v1518
    %1520 = vmatpush1.msra.mxu0 %v1519
    %1521 = vmatprep.subr.mxu0 0.0
    %v1522 = vand.u32 %v90, 4294901760
    %v1523 = vsub.f32 %v90, %v1522
    %1524 = vmatpush1.msra.mxu0 %v1523
    %1525 = vmatprep.subr.mxu0 0.0
    %v1526 = vand.u32 %v91, 4294901760
    %v1527 = vsub.f32 %v91, %v1526
    %1528 = vmatpush1.msra.mxu0 %v1527
    %1529 = vmatprep.subr.mxu0 0.0
    %v1530 = vand.u32 %v92, 4294901760
    %v1531 = vsub.f32 %v92, %v1530
    %1532 = vmatpush1.msra.mxu0 %v1531
    %1533 = vmatprep.subr.mxu0 0.0
    %v1534 = vand.u32 %v93, 4294901760
    %v1535 = vsub.f32 %v93, %v1534
    %1536 = vmatpush1.msra.mxu0 %v1535
    %1537 = vmatprep.subr.mxu0 0.0
    %v1538 = vand.u32 %v94, 4294901760
    %v1539 = vsub.f32 %v94, %v1538
    %1540 = vmatpush1.msra.mxu0 %v1539
    %1541 = vmatprep.subr.mxu0 0.0
    %v1542 = vand.u32 %v95, 4294901760
    %v1543 = vsub.f32 %v95, %v1542
    %1544 = vmatpush1.msra.mxu0 %v1543
    %v1545 = vand.u32 %v24, 4294901760
    %v1546 = vsub.f32 %v24, %v1545
    %1547 = vmatprep.mubr.f32.mxu0 %v1546
    %v1548 = vand.u32 %v23, 4294901760
    %v1549 = vsub.f32 %v23, %v1548
    %1550 = vmatmul.mubr.f32.gmra.mrb[0].mxu0 %v1549
    %v1551 = vpop.f32.mrb[0].mxu0
    %v1552 = vadd.f32 %v1414, %v1551
    %v1553 = vpop.f32.mrb[0].mxu0
    %1554 = vdwg.mxu0
    %1555 = vmatprep.subr.mxu0 0.0
    %v1556 = vand.u32 %v64, 4294901760
    %1557 = vmatpush1.msra.mxu0 %v1556
    %1558 = vmatprep.subr.mxu0 0.0
    %v1559 = vand.u32 %v65, 4294901760
    %1560 = vmatpush1.msra.mxu0 %v1559
    %1561 = vmatprep.subr.mxu0 0.0
    %v1562 = vand.u32 %v66, 4294901760
    %1563 = vmatpush1.msra.mxu0 %v1562
    %1564 = vmatprep.subr.mxu0 0.0
    %v1565 = vand.u32 %v67, 4294901760
    %1566 = vmatpush1.msra.mxu0 %v1565
    %1567 = vmatprep.subr.mxu0 0.0
    %v1568 = vand.u32 %v68, 4294901760
    %1569 = vmatpush1.msra.mxu0 %v1568
    %1570 = vmatprep.subr.mxu0 0.0
    %v1571 = vand.u32 %v69, 4294901760
    %1572 = vmatpush1.msra.mxu0 %v1571
    %1573 = vmatprep.subr.mxu0 0.0
    %v1574 = vand.u32 %v70, 4294901760
    %1575 = vmatpush1.msra.mxu0 %v1574
    %1576 = vmatprep.subr.mxu0 0.0
    %v1577 = vand.u32 %v71, 4294901760
    %1578 = vmatpush1.msra.mxu0 %v1577
    %1579 = vmatprep.subr.mxu0 0.0
    %v1580 = vand.u32 %v72, 4294901760
    %1581 = vmatpush1.msra.mxu0 %v1580
    %1582 = vmatprep.subr.mxu0 0.0
    %v1583 = vand.u32 %v73, 4294901760
    %1584 = vmatpush1.msra.mxu0 %v1583
    %1585 = vmatprep.subr.mxu0 0.0
    %v1586 = vand.u32 %v74, 4294901760
    %1587 = vmatpush1.msra.mxu0 %v1586
    %1588 = vmatprep.subr.mxu0 0.0
    %v1589 = vand.u32 %v75, 4294901760
    %1590 = vmatpush1.msra.mxu0 %v1589
    %1591 = vmatprep.subr.mxu0 0.0
    %v1592 = vand.u32 %v76, 4294901760
    %1593 = vmatpush1.msra.mxu0 %v1592
    %1594 = vmatprep.subr.mxu0 0.0
    %v1595 = vand.u32 %v77, 4294901760
    %1596 = vmatpush1.msra.mxu0 %v1595
    %1597 = vmatprep.subr.mxu0 0.0
    %v1598 = vand.u32 %v78, 4294901760
    %1599 = vmatpush1.msra.mxu0 %v1598
    %1600 = vmatprep.subr.mxu0 0.0
    %v1601 = vand.u32 %v79, 4294901760
    %1602 = vmatpush1.msra.mxu0 %v1601
    %1603 = vmatprep.subr.mxu0 0.0
    %v1604 = vand.u32 %v80, 4294901760
    %1605 = vmatpush1.msra.mxu0 %v1604
    %1606 = vmatprep.subr.mxu0 0.0
    %v1607 = vand.u32 %v81, 4294901760
    %1608 = vmatpush1.msra.mxu0 %v1607
    %1609 = vmatprep.subr.mxu0 0.0
    %v1610 = vand.u32 %v82, 4294901760
    %1611 = vmatpush1.msra.mxu0 %v1610
    %1612 = vmatprep.subr.mxu0 0.0
    %v1613 = vand.u32 %v83, 4294901760
    %1614 = vmatpush1.msra.mxu0 %v1613
    %1615 = vmatprep.subr.mxu0 0.0
    %v1616 = vand.u32 %v84, 4294901760
    %1617 = vmatpush1.msra.mxu0 %v1616
    %1618 = vmatprep.subr.mxu0 0.0
    %v1619 = vand.u32 %v85, 4294901760
    %1620 = vmatpush1.msra.mxu0 %v1619
    %1621 = vmatprep.subr.mxu0 0.0
    %v1622 = vand.u32 %v86, 4294901760
    %1623 = vmatpush1.msra.mxu0 %v1622
    %1624 = vmatprep.subr.mxu0 0.0
    %v1625 = vand.u32 %v87, 4294901760
    %1626 = vmatpush1.msra.mxu0 %v1625
    %1627 = vmatprep.subr.mxu0 0.0
    %v1628 = vand.u32 %v88, 4294901760
    %1629 = vmatpush1.msra.mxu0 %v1628
    %1630 = vmatprep.subr.mxu0 0.0
    %v1631 = vand.u32 %v89, 4294901760
    %1632 = vmatpush1.msra.mxu0 %v1631
    %1633 = vmatprep.subr.mxu0 0.0
    %v1634 = vand.u32 %v90, 4294901760
    %1635 = vmatpush1.msra.mxu0 %v1634
    %1636 = vmatprep.subr.mxu0 0.0
    %v1637 = vand.u32 %v91, 4294901760
    %1638 = vmatpush1.msra.mxu0 %v1637
    %1639 = vmatprep.subr.mxu0 0.0
    %v1640 = vand.u32 %v92, 4294901760
    %1641 = vmatpush1.msra.mxu0 %v1640
    %1642 = vmatprep.subr.mxu0 0.0
    %v1643 = vand.u32 %v93, 4294901760
    %1644 = vmatpush1.msra.mxu0 %v1643
    %1645 = vmatprep.subr.mxu0 0.0
    %v1646 = vand.u32 %v94, 4294901760
    %1647 = vmatpush1.msra.mxu0 %v1646
    %1648 = vmatprep.subr.mxu0 0.0
    %v1649 = vand.u32 %v95, 4294901760
    %1650 = vmatpush1.msra.mxu0 %v1649
    %v1651 = vand.u32 %v24, 4294901760
    %v1652 = vsub.f32 %v24, %v1651
    %v1653 = vand.u32 %v1652, 4294901760
    %1654 = vmatprep.mubr.f32.mxu0 %v1653
    %v1655 = vand.u32 %v23, 4294901760
    %v1656 = vsub.f32 %v23, %v1655
    %v1657 = vand.u32 %v1656, 4294901760
    %1658 = vmatmul.mubr.f32.gmra.mrb[0].mxu0 %v1657
    %v1659 = vpop.f32.mrb[0].mxu0
    %v1660 = vadd.f32 %v1552, %v1659
    %v1661 = vpop.f32.mrb[0].mxu0
    %1662 = vdwg.mxu0
    %1663 = vmatprep.subr.mxu0 0.0
    %v1664 = vand.u32 %v64, 4294901760
    %v1665 = vsub.f32 %v64, %v1664
    %v1666 = vand.u32 %v1665, 4294901760
    %1667 = vmatpush1.msra.mxu0 %v1666
    %1668 = vmatprep.subr.mxu0 0.0
    %v1669 = vand.u32 %v65, 4294901760
    %v1670 = vsub.f32 %v65, %v1669
    %v1671 = vand.u32 %v1670, 4294901760
    %1672 = vmatpush1.msra.mxu0 %v1671
    %1673 = vmatprep.subr.mxu0 0.0
    %v1674 = vand.u32 %v66, 4294901760
    %v1675 = vsub.f32 %v66, %v1674
    %v1676 = vand.u32 %v1675, 4294901760
    %1677 = vmatpush1.msra.mxu0 %v1676
    %1678 = vmatprep.subr.mxu0 0.0
    %v1679 = vand.u32 %v67, 4294901760
    %v1680 = vsub.f32 %v67, %v1679
    %v1681 = vand.u32 %v1680, 4294901760
    %1682 = vmatpush1.msra.mxu0 %v1681
    %1683 = vmatprep.subr.mxu0 0.0
    %v1684 = vand.u32 %v68, 4294901760
    %v1685 = vsub.f32 %v68, %v1684
    %v1686 = vand.u32 %v1685, 4294901760
    %1687 = vmatpush1.msra.mxu0 %v1686
    %1688 = vmatprep.subr.mxu0 0.0
    %v1689 = vand.u32 %v69, 4294901760
    %v1690 = vsub.f32 %v69, %v1689
    %v1691 = vand.u32 %v1690, 4294901760
    %1692 = vmatpush1.msra.mxu0 %v1691
    %1693 = vmatprep.subr.mxu0 0.0
    %v1694 = vand.u32 %v70, 4294901760
    %v1695 = vsub.f32 %v70, %v1694
    %v1696 = vand.u32 %v1695, 4294901760
    %1697 = vmatpush1.msra.mxu0 %v1696
    %1698 = vmatprep.subr.mxu0 0.0
    %v1699 = vand.u32 %v71, 4294901760
    %v1700 = vsub.f32 %v71, %v1699
    %v1701 = vand.u32 %v1700, 4294901760
    %1702 = vmatpush1.msra.mxu0 %v1701
    %1703 = vmatprep.subr.mxu0 0.0
    %v1704 = vand.u32 %v72, 4294901760
    %v1705 = vsub.f32 %v72, %v1704
    %v1706 = vand.u32 %v1705, 4294901760
    %1707 = vmatpush1.msra.mxu0 %v1706
    %1708 = vmatprep.subr.mxu0 0.0
    %v1709 = vand.u32 %v73, 4294901760
    %v1710 = vsub.f32 %v73, %v1709
    %v1711 = vand.u32 %v1710, 4294901760
    %1712 = vmatpush1.msra.mxu0 %v1711
    %1713 = vmatprep.subr.mxu0 0.0
    %v1714 = vand.u32 %v74, 4294901760
    %v1715 = vsub.f32 %v74, %v1714
    %v1716 = vand.u32 %v1715, 4294901760
    %1717 = vmatpush1.msra.mxu0 %v1716
    %1718 = vmatprep.subr.mxu0 0.0
    %v1719 = vand.u32 %v75, 4294901760
    %v1720 = vsub.f32 %v75, %v1719
    %v1721 = vand.u32 %v1720, 4294901760
    %1722 = vmatpush1.msra.mxu0 %v1721
    %1723 = vmatprep.subr.mxu0 0.0
    %v1724 = vand.u32 %v76, 4294901760
    %v1725 = vsub.f32 %v76, %v1724
    %v1726 = vand.u32 %v1725, 4294901760
    %1727 = vmatpush1.msra.mxu0 %v1726
    %1728 = vmatprep.subr.mxu0 0.0
    %v1729 = vand.u32 %v77, 4294901760
    %v1730 = vsub.f32 %v77, %v1729
    %v1731 = vand.u32 %v1730, 4294901760
    %1732 = vmatpush1.msra.mxu0 %v1731
    %1733 = vmatprep.subr.mxu0 0.0
    %v1734 = vand.u32 %v78, 4294901760
    %v1735 = vsub.f32 %v78, %v1734
    %v1736 = vand.u32 %v1735, 4294901760
    %1737 = vmatpush1.msra.mxu0 %v1736
    %1738 = vmatprep.subr.mxu0 0.0
    %v1739 = vand.u32 %v79, 4294901760
    %v1740 = vsub.f32 %v79, %v1739
    %v1741 = vand.u32 %v1740, 4294901760
    %1742 = vmatpush1.msra.mxu0 %v1741
    %1743 = vmatprep.subr.mxu0 0.0
    %v1744 = vand.u32 %v80, 4294901760
    %v1745 = vsub.f32 %v80, %v1744
    %v1746 = vand.u32 %v1745, 4294901760
    %1747 = vmatpush1.msra.mxu0 %v1746
    %1748 = vmatprep.subr.mxu0 0.0
    %v1749 = vand.u32 %v81, 4294901760
    %v1750 = vsub.f32 %v81, %v1749
    %v1751 = vand.u32 %v1750, 4294901760
    %1752 = vmatpush1.msra.mxu0 %v1751
    %1753 = vmatprep.subr.mxu0 0.0
    %v1754 = vand.u32 %v82, 4294901760
    %v1755 = vsub.f32 %v82, %v1754
    %v1756 = vand.u32 %v1755, 4294901760
    %1757 = vmatpush1.msra.mxu0 %v1756
    %1758 = vmatprep.subr.mxu0 0.0
    %v1759 = vand.u32 %v83, 4294901760
    %v1760 = vsub.f32 %v83, %v1759
    %v1761 = vand.u32 %v1760, 4294901760
    %1762 = vmatpush1.msra.mxu0 %v1761
    %1763 = vmatprep.subr.mxu0 0.0
    %v1764 = vand.u32 %v84, 4294901760
    %v1765 = vsub.f32 %v84, %v1764
    %v1766 = vand.u32 %v1765, 4294901760
    %1767 = vmatpush1.msra.mxu0 %v1766
    %1768 = vmatprep.subr.mxu0 0.0
    %v1769 = vand.u32 %v85, 4294901760
    %v1770 = vsub.f32 %v85, %v1769
    %v1771 = vand.u32 %v1770, 4294901760
    %1772 = vmatpush1.msra.mxu0 %v1771
    %1773 = vmatprep.subr.mxu0 0.0
    %v1774 = vand.u32 %v86, 4294901760
    %v1775 = vsub.f32 %v86, %v1774
    %v1776 = vand.u32 %v1775, 4294901760
    %1777 = vmatpush1.msra.mxu0 %v1776
    %1778 = vmatprep.subr.mxu0 0.0
    %v1779 = vand.u32 %v87, 4294901760
    %v1780 = vsub.f32 %v87, %v1779
    %v1781 = vand.u32 %v1780, 4294901760
    %1782 = vmatpush1.msra.mxu0 %v1781
    %1783 = vmatprep.subr.mxu0 0.0
    %v1784 = vand.u32 %v88, 4294901760
    %v1785 = vsub.f32 %v88, %v1784
    %v1786 = vand.u32 %v1785, 4294901760
    %1787 = vmatpush1.msra.mxu0 %v1786
    %1788 = vmatprep.subr.mxu0 0.0
    %v1789 = vand.u32 %v89, 4294901760
    %v1790 = vsub.f32 %v89, %v1789
    %v1791 = vand.u32 %v1790, 4294901760
    %1792 = vmatpush1.msra.mxu0 %v1791
    %1793 = vmatprep.subr.mxu0 0.0
    %v1794 = vand.u32 %v90, 4294901760
    %v1795 = vsub.f32 %v90, %v1794
    %v1796 = vand.u32 %v1795, 4294901760
    %1797 = vmatpush1.msra.mxu0 %v1796
    %1798 = vmatprep.subr.mxu0 0.0
    %v1799 = vand.u32 %v91, 4294901760
    %v1800 = vsub.f32 %v91, %v1799
    %v1801 = vand.u32 %v1800, 4294901760
    %1802 = vmatpush1.msra.mxu0 %v1801
    %1803 = vmatprep.subr.mxu0 0.0
    %v1804 = vand.u32 %v92, 4294901760
    %v1805 = vsub.f32 %v92, %v1804
    %v1806 = vand.u32 %v1805, 4294901760
    %1807 = vmatpush1.msra.mxu0 %v1806
    %1808 = vmatprep.subr.mxu0 0.0
    %v1809 = vand.u32 %v93, 4294901760
    %v1810 = vsub.f32 %v93, %v1809
    %v1811 = vand.u32 %v1810, 4294901760
    %1812 = vmatpush1.msra.mxu0 %v1811
    %1813 = vmatprep.subr.mxu0 0.0
    %v1814 = vand.u32 %v94, 4294901760
    %v1815 = vsub.f32 %v94, %v1814
    %v1816 = vand.u32 %v1815, 4294901760
    %1817 = vmatpush1.msra.mxu0 %v1816
    %1818 = vmatprep.subr.mxu0 0.0
    %v1819 = vand.u32 %v95, 4294901760
    %v1820 = vsub.f32 %v95, %v1819
    %v1821 = vand.u32 %v1820, 4294901760
    %1822 = vmatpush1.msra.mxu0 %v1821
    %v1823 = vand.u32 %v24, 4294901760
    %1824 = vmatprep.mubr.f32.mxu0 %v1823
    %v1825 = vand.u32 %v23, 4294901760
    %1826 = vmatmul.mubr.f32.gmra.mrb[0].mxu0 %v1825
    %v1827 = vpop.f32.mrb[0].mxu0
    %v1828 = vadd.f32 %v1660, %v1827
    %v1829 = vpop.f32.mrb[0].mxu0
    %1830 = vdwg.mxu0
    %1831 = vmatprep.subr.mxu0 0.0
    %v1832 = vand.u32 %v64, 4294901760
    %1833 = vmatpush1.msra.mxu0 %v1832
    %1834 = vmatprep.subr.mxu0 0.0
    %v1835 = vand.u32 %v65, 4294901760
    %1836 = vmatpush1.msra.mxu0 %v1835
    %1837 = vmatprep.subr.mxu0 0.0
    %v1838 = vand.u32 %v66, 4294901760
    %1839 = vmatpush1.msra.mxu0 %v1838
    %1840 = vmatprep.subr.mxu0 0.0
    %v1841 = vand.u32 %v67, 4294901760
    %1842 = vmatpush1.msra.mxu0 %v1841
    %1843 = vmatprep.subr.mxu0 0.0
    %v1844 = vand.u32 %v68, 4294901760
    %1845 = vmatpush1.msra.mxu0 %v1844
    %1846 = vmatprep.subr.mxu0 0.0
    %v1847 = vand.u32 %v69, 4294901760
    %1848 = vmatpush1.msra.mxu0 %v1847
    %1849 = vmatprep.subr.mxu0 0.0
    %v1850 = vand.u32 %v70, 4294901760
    %1851 = vmatpush1.msra.mxu0 %v1850
    %1852 = vmatprep.subr.mxu0 0.0
    %v1853 = vand.u32 %v71, 4294901760
    %1854 = vmatpush1.msra.mxu0 %v1853
    %1855 = vmatprep.subr.mxu0 0.0
    %v1856 = vand.u32 %v72, 4294901760
    %1857 = vmatpush1.msra.mxu0 %v1856
    %1858 = vmatprep.subr.mxu0 0.0
    %v1859 = vand.u32 %v73, 4294901760
    %1860 = vmatpush1.msra.mxu0 %v1859
    %1861 = vmatprep.subr.mxu0 0.0
    %v1862 = vand.u32 %v74, 4294901760
    %1863 = vmatpush1.msra.mxu0 %v1862
    %1864 = vmatprep.subr.mxu0 0.0
    %v1865 = vand.u32 %v75, 4294901760
    %1866 = vmatpush1.msra.mxu0 %v1865
    %1867 = vmatprep.subr.mxu0 0.0
    %v1868 = vand.u32 %v76, 4294901760
    %1869 = vmatpush1.msra.mxu0 %v1868
    %1870 = vmatprep.subr.mxu0 0.0
    %v1871 = vand.u32 %v77, 4294901760
    %1872 = vmatpush1.msra.mxu0 %v1871
    %1873 = vmatprep.subr.mxu0 0.0
    %v1874 = vand.u32 %v78, 4294901760
    %1875 = vmatpush1.msra.mxu0 %v1874
    %1876 = vmatprep.subr.mxu0 0.0
    %v1877 = vand.u32 %v79, 4294901760
    %1878 = vmatpush1.msra.mxu0 %v1877
    %1879 = vmatprep.subr.mxu0 0.0
    %v1880 = vand.u32 %v80, 4294901760
    %1881 = vmatpush1.msra.mxu0 %v1880
    %1882 = vmatprep.subr.mxu0 0.0
    %v1883 = vand.u32 %v81, 4294901760
    %1884 = vmatpush1.msra.mxu0 %v1883
    %1885 = vmatprep.subr.mxu0 0.0
    %v1886 = vand.u32 %v82, 4294901760
    %1887 = vmatpush1.msra.mxu0 %v1886
    %1888 = vmatprep.subr.mxu0 0.0
    %v1889 = vand.u32 %v83, 4294901760
    %1890 = vmatpush1.msra.mxu0 %v1889
    %1891 = vmatprep.subr.mxu0 0.0
    %v1892 = vand.u32 %v84, 4294901760
    %1893 = vmatpush1.msra.mxu0 %v1892
    %1894 = vmatprep.subr.mxu0 0.0
    %v1895 = vand.u32 %v85, 4294901760
    %1896 = vmatpush1.msra.mxu0 %v1895
    %1897 = vmatprep.subr.mxu0 0.0
    %v1898 = vand.u32 %v86, 4294901760
    %1899 = vmatpush1.msra.mxu0 %v1898
    %1900 = vmatprep.subr.mxu0 0.0
    %v1901 = vand.u32 %v87, 4294901760
    %1902 = vmatpush1.msra.mxu0 %v1901
    %1903 = vmatprep.subr.mxu0 0.0
    %v1904 = vand.u32 %v88, 4294901760
    %1905 = vmatpush1.msra.mxu0 %v1904
    %1906 = vmatprep.subr.mxu0 0.0
    %v1907 = vand.u32 %v89, 4294901760
    %1908 = vmatpush1.msra.mxu0 %v1907
    %1909 = vmatprep.subr.mxu0 0.0
    %v1910 = vand.u32 %v90, 4294901760
    %1911 = vmatpush1.msra.mxu0 %v1910
    %1912 = vmatprep.subr.mxu0 0.0
    %v1913 = vand.u32 %v91, 4294901760
    %1914 = vmatpush1.msra.mxu0 %v1913
    %1915 = vmatprep.subr.mxu0 0.0
    %v1916 = vand.u32 %v92, 4294901760
    %1917 = vmatpush1.msra.mxu0 %v1916
    %1918 = vmatprep.subr.mxu0 0.0
    %v1919 = vand.u32 %v93, 4294901760
    %1920 = vmatpush1.msra.mxu0 %v1919
    %1921 = vmatprep.subr.mxu0 0.0
    %v1922 = vand.u32 %v94, 4294901760
    %1923 = vmatpush1.msra.mxu0 %v1922
    %1924 = vmatprep.subr.mxu0 0.0
    %v1925 = vand.u32 %v95, 4294901760
    %1926 = vmatpush1.msra.mxu0 %v1925
    %v1927 = vand.u32 %v24, 4294901760
    %1928 = vmatprep.mubr.f32.mxu0 %v1927
    %v1929 = vand.u32 %v23, 4294901760
    %1930 = vmatmul.mubr.f32.gmra.mrb[0].mxu0 %v1929
    %v1931 = vpop.f32.mrb[0].mxu0
    %v1932 = vadd.f32 %v1828, %v1931
    %v1933 = vpop.f32.mrb[0].mxu0
    %1934 = vdwg.mxu0
    %1935 = vmatprep.subr.mxu0 0.0
    %v1936 = vand.u32 %v96, 4294901760
    %1937 = vmatpush1.msra.mxu0 %v1936
    %1938 = vmatprep.subr.mxu0 0.0
    %v1939 = vand.u32 %v97, 4294901760
    %1940 = vmatpush1.msra.mxu0 %v1939
    %1941 = vmatprep.subr.mxu0 0.0
    %v1942 = vand.u32 %v98, 4294901760
    %1943 = vmatpush1.msra.mxu0 %v1942
    %1944 = vmatprep.subr.mxu0 0.0
    %v1945 = vand.u32 %v99, 4294901760
    %1946 = vmatpush1.msra.mxu0 %v1945
    %1947 = vmatprep.subr.mxu0 0.0
    %v1948 = vand.u32 %v100, 4294901760
    %1949 = vmatpush1.msra.mxu0 %v1948
    %1950 = vmatprep.subr.mxu0 0.0
    %v1951 = vand.u32 %v101, 4294901760
    %1952 = vmatpush1.msra.mxu0 %v1951
    %1953 = vmatprep.subr.mxu0 0.0
    %v1954 = vand.u32 %v102, 4294901760
    %1955 = vmatpush1.msra.mxu0 %v1954
    %1956 = vmatprep.subr.mxu0 0.0
    %v1957 = vand.u32 %v103, 4294901760
    %1958 = vmatpush1.msra.mxu0 %v1957
    %1959 = vmatprep.subr.mxu0 0.0
    %v1960 = vand.u32 %v104, 4294901760
    %1961 = vmatpush1.msra.mxu0 %v1960
    %1962 = vmatprep.subr.mxu0 0.0
    %v1963 = vand.u32 %v105, 4294901760
    %1964 = vmatpush1.msra.mxu0 %v1963
    %1965 = vmatprep.subr.mxu0 0.0
    %v1966 = vand.u32 %v106, 4294901760
    %1967 = vmatpush1.msra.mxu0 %v1966
    %1968 = vmatprep.subr.mxu0 0.0
    %v1969 = vand.u32 %v107, 4294901760
    %1970 = vmatpush1.msra.mxu0 %v1969
    %1971 = vmatprep.subr.mxu0 0.0
    %v1972 = vand.u32 %v108, 4294901760
    %1973 = vmatpush1.msra.mxu0 %v1972
    %1974 = vmatprep.subr.mxu0 0.0
    %v1975 = vand.u32 %v109, 4294901760
    %1976 = vmatpush1.msra.mxu0 %v1975
    %1977 = vmatprep.subr.mxu0 0.0
    %v1978 = vand.u32 %v110, 4294901760
    %1979 = vmatpush1.msra.mxu0 %v1978
    %1980 = vmatprep.subr.mxu0 0.0
    %v1981 = vand.u32 %v111, 4294901760
    %1982 = vmatpush1.msra.mxu0 %v1981
    %1983 = vmatprep.subr.mxu0 0.0
    %v1984 = vand.u32 %v112, 4294901760
    %1985 = vmatpush1.msra.mxu0 %v1984
    %1986 = vmatprep.subr.mxu0 0.0
    %v1987 = vand.u32 %v113, 4294901760
    %1988 = vmatpush1.msra.mxu0 %v1987
    %1989 = vmatprep.subr.mxu0 0.0
    %v1990 = vand.u32 %v114, 4294901760
    %1991 = vmatpush1.msra.mxu0 %v1990
    %1992 = vmatprep.subr.mxu0 0.0
    %v1993 = vand.u32 %v115, 4294901760
    %1994 = vmatpush1.msra.mxu0 %v1993
    %1995 = vmatprep.subr.mxu0 0.0
    %v1996 = vand.u32 %v116, 4294901760
    %1997 = vmatpush1.msra.mxu0 %v1996
    %1998 = vmatprep.subr.mxu0 0.0
    %v1999 = vand.u32 %v117, 4294901760
    %2000 = vmatpush1.msra.mxu0 %v1999
    %2001 = vmatprep.subr.mxu0 0.0
    %v2002 = vand.u32 %v118, 4294901760
    %2003 = vmatpush1.msra.mxu0 %v2002
    %2004 = vmatprep.subr.mxu0 0.0
    %v2005 = vand.u32 %v119, 4294901760
    %2006 = vmatpush1.msra.mxu0 %v2005
    %2007 = vmatprep.subr.mxu0 0.0
    %v2008 = vand.u32 %v120, 4294901760
    %2009 = vmatpush1.msra.mxu0 %v2008
    %2010 = vmatprep.subr.mxu0 0.0
    %v2011 = vand.u32 %v121, 4294901760
    %2012 = vmatpush1.msra.mxu0 %v2011
    %2013 = vmatprep.subr.mxu0 0.0
    %v2014 = vand.u32 %v122, 4294901760
    %2015 = vmatpush1.msra.mxu0 %v2014
    %2016 = vmatprep.subr.mxu0 0.0
    %v2017 = vand.u32 %v123, 4294901760
    %2018 = vmatpush1.msra.mxu0 %v2017
    %2019 = vmatprep.subr.mxu0 0.0
    %v2020 = vand.u32 %v124, 4294901760
    %2021 = vmatpush1.msra.mxu0 %v2020
    %2022 = vmatprep.subr.mxu0 0.0
    %v2023 = vand.u32 %v125, 4294901760
    %2024 = vmatpush1.msra.mxu0 %v2023
    %2025 = vmatprep.subr.mxu0 0.0
    %v2026 = vand.u32 %v126, 4294901760
    %2027 = vmatpush1.msra.mxu0 %v2026
    %2028 = vmatprep.subr.mxu0 0.0
    %v2029 = vand.u32 %v127, 4294901760
    %2030 = vmatpush1.msra.mxu0 %v2029
    %v2031 = vand.u32 %v26, 4294901760
    %v2032 = vsub.f32 %v26, %v2031
    %v2033 = vand.u32 %v2032, 4294901760
    %v2034 = vsub.f32 %v2032, %v2033
    %v2035 = vand.u32 %v2034, 4294901760
    %2036 = vmatprep.mubr.f32.mxu0 %v2035
    %v2037 = vand.u32 %v25, 4294901760
    %v2038 = vsub.f32 %v25, %v2037
    %v2039 = vand.u32 %v2038, 4294901760
    %v2040 = vsub.f32 %v2038, %v2039
    %v2041 = vand.u32 %v2040, 4294901760
    %2042 = vmatmul.mubr.f32.gmra.mrb[0].mxu0 %v2041
    %v2043 = vpop.f32.mrb[0].mxu0
    %v2044 = vadd.f32 %v1932, %v2043
    %v2045 = vpop.f32.mrb[0].mxu0
    %2046 = vdwg.mxu0
    %2047 = vmatprep.subr.mxu0 0.0
    %v2048 = vand.u32 %v96, 4294901760
    %v2049 = vsub.f32 %v96, %v2048
    %v2050 = vand.u32 %v2049, 4294901760
    %v2051 = vsub.f32 %v2049, %v2050
    %v2052 = vand.u32 %v2051, 4294901760
    %2053 = vmatpush1.msra.mxu0 %v2052
    %2054 = vmatprep.subr.mxu0 0.0
    %v2055 = vand.u32 %v97, 4294901760
    %v2056 = vsub.f32 %v97, %v2055
    %v2057 = vand.u32 %v2056, 4294901760
    %v2058 = vsub.f32 %v2056, %v2057
    %v2059 = vand.u32 %v2058, 4294901760
    %2060 = vmatpush1.msra.mxu0 %v2059
    %2061 = vmatprep.subr.mxu0 0.0
    %v2062 = vand.u32 %v98, 4294901760
    %v2063 = vsub.f32 %v98, %v2062
    %v2064 = vand.u32 %v2063, 4294901760
    %v2065 = vsub.f32 %v2063, %v2064
    %v2066 = vand.u32 %v2065, 4294901760
    %2067 = vmatpush1.msra.mxu0 %v2066
    %2068 = vmatprep.subr.mxu0 0.0
    %v2069 = vand.u32 %v99, 4294901760
    %v2070 = vsub.f32 %v99, %v2069
    %v2071 = vand.u32 %v2070, 4294901760
    %v2072 = vsub.f32 %v2070, %v2071
    %v2073 = vand.u32 %v2072, 4294901760
    %2074 = vmatpush1.msra.mxu0 %v2073
    %2075 = vmatprep.subr.mxu0 0.0
    %v2076 = vand.u32 %v100, 4294901760
    %v2077 = vsub.f32 %v100, %v2076
    %v2078 = vand.u32 %v2077, 4294901760
    %v2079 = vsub.f32 %v2077, %v2078
    %v2080 = vand.u32 %v2079, 4294901760
    %2081 = vmatpush1.msra.mxu0 %v2080
    %2082 = vmatprep.subr.mxu0 0.0
    %v2083 = vand.u32 %v101, 4294901760
    %v2084 = vsub.f32 %v101, %v2083
    %v2085 = vand.u32 %v2084, 4294901760
    %v2086 = vsub.f32 %v2084, %v2085
    %v2087 = vand.u32 %v2086, 4294901760
    %2088 = vmatpush1.msra.mxu0 %v2087
    %2089 = vmatprep.subr.mxu0 0.0
    %v2090 = vand.u32 %v102, 4294901760
    %v2091 = vsub.f32 %v102, %v2090
    %v2092 = vand.u32 %v2091, 4294901760
    %v2093 = vsub.f32 %v2091, %v2092
    %v2094 = vand.u32 %v2093, 4294901760
    %2095 = vmatpush1.msra.mxu0 %v2094
    %2096 = vmatprep.subr.mxu0 0.0
    %v2097 = vand.u32 %v103, 4294901760
    %v2098 = vsub.f32 %v103, %v2097
    %v2099 = vand.u32 %v2098, 4294901760
    %v2100 = vsub.f32 %v2098, %v2099
    %v2101 = vand.u32 %v2100, 4294901760
    %2102 = vmatpush1.msra.mxu0 %v2101
    %2103 = vmatprep.subr.mxu0 0.0
    %v2104 = vand.u32 %v104, 4294901760
    %v2105 = vsub.f32 %v104, %v2104
    %v2106 = vand.u32 %v2105, 4294901760
    %v2107 = vsub.f32 %v2105, %v2106
    %v2108 = vand.u32 %v2107, 4294901760
    %2109 = vmatpush1.msra.mxu0 %v2108
    %2110 = vmatprep.subr.mxu0 0.0
    %v2111 = vand.u32 %v105, 4294901760
    %v2112 = vsub.f32 %v105, %v2111
    %v2113 = vand.u32 %v2112, 4294901760
    %v2114 = vsub.f32 %v2112, %v2113
    %v2115 = vand.u32 %v2114, 4294901760
    %2116 = vmatpush1.msra.mxu0 %v2115
    %2117 = vmatprep.subr.mxu0 0.0
    %v2118 = vand.u32 %v106, 4294901760
    %v2119 = vsub.f32 %v106, %v2118
    %v2120 = vand.u32 %v2119, 4294901760
    %v2121 = vsub.f32 %v2119, %v2120
    %v2122 = vand.u32 %v2121, 4294901760
    %2123 = vmatpush1.msra.mxu0 %v2122
    %2124 = vmatprep.subr.mxu0 0.0
    %v2125 = vand.u32 %v107, 4294901760
    %v2126 = vsub.f32 %v107, %v2125
    %v2127 = vand.u32 %v2126, 4294901760
    %v2128 = vsub.f32 %v2126, %v2127
    %v2129 = vand.u32 %v2128, 4294901760
    %2130 = vmatpush1.msra.mxu0 %v2129
    %2131 = vmatprep.subr.mxu0 0.0
    %v2132 = vand.u32 %v108, 4294901760
    %v2133 = vsub.f32 %v108, %v2132
    %v2134 = vand.u32 %v2133, 4294901760
    %v2135 = vsub.f32 %v2133, %v2134
    %v2136 = vand.u32 %v2135, 4294901760
    %2137 = vmatpush1.msra.mxu0 %v2136
    %2138 = vmatprep.subr.mxu0 0.0
    %v2139 = vand.u32 %v109, 4294901760
    %v2140 = vsub.f32 %v109, %v2139
    %v2141 = vand.u32 %v2140, 4294901760
    %v2142 = vsub.f32 %v2140, %v2141
    %v2143 = vand.u32 %v2142, 4294901760
    %2144 = vmatpush1.msra.mxu0 %v2143
    %2145 = vmatprep.subr.mxu0 0.0
    %v2146 = vand.u32 %v110, 4294901760
    %v2147 = vsub.f32 %v110, %v2146
    %v2148 = vand.u32 %v2147, 4294901760
    %v2149 = vsub.f32 %v2147, %v2148
    %v2150 = vand.u32 %v2149, 4294901760
    %2151 = vmatpush1.msra.mxu0 %v2150
    %2152 = vmatprep.subr.mxu0 0.0
    %v2153 = vand.u32 %v111, 4294901760
    %v2154 = vsub.f32 %v111, %v2153
    %v2155 = vand.u32 %v2154, 4294901760
    %v2156 = vsub.f32 %v2154, %v2155
    %v2157 = vand.u32 %v2156, 4294901760
    %2158 = vmatpush1.msra.mxu0 %v2157
    %2159 = vmatprep.subr.mxu0 0.0
    %v2160 = vand.u32 %v112, 4294901760
    %v2161 = vsub.f32 %v112, %v2160
    %v2162 = vand.u32 %v2161, 4294901760
    %v2163 = vsub.f32 %v2161, %v2162
    %v2164 = vand.u32 %v2163, 4294901760
    %2165 = vmatpush1.msra.mxu0 %v2164
    %2166 = vmatprep.subr.mxu0 0.0
    %v2167 = vand.u32 %v113, 4294901760
    %v2168 = vsub.f32 %v113, %v2167
    %v2169 = vand.u32 %v2168, 4294901760
    %v2170 = vsub.f32 %v2168, %v2169
    %v2171 = vand.u32 %v2170, 4294901760
    %2172 = vmatpush1.msra.mxu0 %v2171
    %2173 = vmatprep.subr.mxu0 0.0
    %v2174 = vand.u32 %v114, 4294901760
    %v2175 = vsub.f32 %v114, %v2174
    %v2176 = vand.u32 %v2175, 4294901760
    %v2177 = vsub.f32 %v2175, %v2176
    %v2178 = vand.u32 %v2177, 4294901760
    %2179 = vmatpush1.msra.mxu0 %v2178
    %2180 = vmatprep.subr.mxu0 0.0
    %v2181 = vand.u32 %v115, 4294901760
    %v2182 = vsub.f32 %v115, %v2181
    %v2183 = vand.u32 %v2182, 4294901760
    %v2184 = vsub.f32 %v2182, %v2183
    %v2185 = vand.u32 %v2184, 4294901760
    %2186 = vmatpush1.msra.mxu0 %v2185
    %2187 = vmatprep.subr.mxu0 0.0
    %v2188 = vand.u32 %v116, 4294901760
    %v2189 = vsub.f32 %v116, %v2188
    %v2190 = vand.u32 %v2189, 4294901760
    %v2191 = vsub.f32 %v2189, %v2190
    %v2192 = vand.u32 %v2191, 4294901760
    %2193 = vmatpush1.msra.mxu0 %v2192
    %2194 = vmatprep.subr.mxu0 0.0
    %v2195 = vand.u32 %v117, 4294901760
    %v2196 = vsub.f32 %v117, %v2195
    %v2197 = vand.u32 %v2196, 4294901760
    %v2198 = vsub.f32 %v2196, %v2197
    %v2199 = vand.u32 %v2198, 4294901760
    %2200 = vmatpush1.msra.mxu0 %v2199
    %2201 = vmatprep.subr.mxu0 0.0
    %v2202 = vand.u32 %v118, 4294901760
    %v2203 = vsub.f32 %v118, %v2202
    %v2204 = vand.u32 %v2203, 4294901760
    %v2205 = vsub.f32 %v2203, %v2204
    %v2206 = vand.u32 %v2205, 4294901760
    %2207 = vmatpush1.msra.mxu0 %v2206
    %2208 = vmatprep.subr.mxu0 0.0
    %v2209 = vand.u32 %v119, 4294901760
    %v2210 = vsub.f32 %v119, %v2209
    %v2211 = vand.u32 %v2210, 4294901760
    %v2212 = vsub.f32 %v2210, %v2211
    %v2213 = vand.u32 %v2212, 4294901760
    %2214 = vmatpush1.msra.mxu0 %v2213
    %2215 = vmatprep.subr.mxu0 0.0
    %v2216 = vand.u32 %v120, 4294901760
    %v2217 = vsub.f32 %v120, %v2216
    %v2218 = vand.u32 %v2217, 4294901760
    %v2219 = vsub.f32 %v2217, %v2218
    %v2220 = vand.u32 %v2219, 4294901760
    %2221 = vmatpush1.msra.mxu0 %v2220
    %2222 = vmatprep.subr.mxu0 0.0
    %v2223 = vand.u32 %v121, 4294901760
    %v2224 = vsub.f32 %v121, %v2223
    %v2225 = vand.u32 %v2224, 4294901760
    %v2226 = vsub.f32 %v2224, %v2225
    %v2227 = vand.u32 %v2226, 4294901760
    %2228 = vmatpush1.msra.mxu0 %v2227
    %2229 = vmatprep.subr.mxu0 0.0
    %v2230 = vand.u32 %v122, 4294901760
    %v2231 = vsub.f32 %v122, %v2230
    %v2232 = vand.u32 %v2231, 4294901760
    %v2233 = vsub.f32 %v2231, %v2232
    %v2234 = vand.u32 %v2233, 4294901760
    %2235 = vmatpush1.msra.mxu0 %v2234
    %2236 = vmatprep.subr.mxu0 0.0
    %v2237 = vand.u32 %v123, 4294901760
    %v2238 = vsub.f32 %v123, %v2237
    %v2239 = vand.u32 %v2238, 4294901760
    %v2240 = vsub.f32 %v2238, %v2239
    %v2241 = vand.u32 %v2240, 4294901760
    %2242 = vmatpush1.msra.mxu0 %v2241
    %2243 = vmatprep.subr.mxu0 0.0
    %v2244 = vand.u32 %v124, 4294901760
    %v2245 = vsub.f32 %v124, %v2244
    %v2246 = vand.u32 %v2245, 4294901760
    %v2247 = vsub.f32 %v2245, %v2246
    %v2248 = vand.u32 %v2247, 4294901760
    %2249 = vmatpush1.msra.mxu0 %v2248
    %2250 = vmatprep.subr.mxu0 0.0
    %v2251 = vand.u32 %v125, 4294901760
    %v2252 = vsub.f32 %v125, %v2251
    %v2253 = vand.u32 %v2252, 4294901760
    %v2254 = vsub.f32 %v2252, %v2253
    %v2255 = vand.u32 %v2254, 4294901760
    %2256 = vmatpush1.msra.mxu0 %v2255
    %2257 = vmatprep.subr.mxu0 0.0
    %v2258 = vand.u32 %v126, 4294901760
    %v2259 = vsub.f32 %v126, %v2258
    %v2260 = vand.u32 %v2259, 4294901760
    %v2261 = vsub.f32 %v2259, %v2260
    %v2262 = vand.u32 %v2261, 4294901760
    %2263 = vmatpush1.msra.mxu0 %v2262
    %2264 = vmatprep.subr.mxu0 0.0
    %v2265 = vand.u32 %v127, 4294901760
    %v2266 = vsub.f32 %v127, %v2265
    %v2267 = vand.u32 %v2266, 4294901760
    %v2268 = vsub.f32 %v2266, %v2267
    %v2269 = vand.u32 %v2268, 4294901760
    %2270 = vmatpush1.msra.mxu0 %v2269
    %v2271 = vand.u32 %v26, 4294901760
    %2272 = vmatprep.mubr.f32.mxu0 %v2271
    %v2273 = vand.u32 %v25, 4294901760
    %2274 = vmatmul.mubr.f32.gmra.mrb[0].mxu0 %v2273
    %v2275 = vpop.f32.mrb[0].mxu0
    %v2276 = vadd.f32 %v2044, %v2275
    %v2277 = vpop.f32.mrb[0].mxu0
    %2278 = vdwg.mxu0
    %2279 = vmatprep.subr.mxu0 0.0
    %v2280 = vand.u32 %v96, 4294901760
    %v2281 = vsub.f32 %v96, %v2280
    %2282 = vmatpush1.msra.mxu0 %v2281
    %2283 = vmatprep.subr.mxu0 0.0
    %v2284 = vand.u32 %v97, 4294901760
    %v2285 = vsub.f32 %v97, %v2284
    %2286 = vmatpush1.msra.mxu0 %v2285
    %2287 = vmatprep.subr.mxu0 0.0
    %v2288 = vand.u32 %v98, 4294901760
    %v2289 = vsub.f32 %v98, %v2288
    %2290 = vmatpush1.msra.mxu0 %v2289
    %2291 = vmatprep.subr.mxu0 0.0
    %v2292 = vand.u32 %v99, 4294901760
    %v2293 = vsub.f32 %v99, %v2292
    %2294 = vmatpush1.msra.mxu0 %v2293
    %2295 = vmatprep.subr.mxu0 0.0
    %v2296 = vand.u32 %v100, 4294901760
    %v2297 = vsub.f32 %v100, %v2296
    %2298 = vmatpush1.msra.mxu0 %v2297
    %2299 = vmatprep.subr.mxu0 0.0
    %v2300 = vand.u32 %v101, 4294901760
    %v2301 = vsub.f32 %v101, %v2300
    %2302 = vmatpush1.msra.mxu0 %v2301
    %2303 = vmatprep.subr.mxu0 0.0
    %v2304 = vand.u32 %v102, 4294901760
    %v2305 = vsub.f32 %v102, %v2304
    %2306 = vmatpush1.msra.mxu0 %v2305
    %2307 = vmatprep.subr.mxu0 0.0
    %v2308 = vand.u32 %v103, 4294901760
    %v2309 = vsub.f32 %v103, %v2308
    %2310 = vmatpush1.msra.mxu0 %v2309
    %2311 = vmatprep.subr.mxu0 0.0
    %v2312 = vand.u32 %v104, 4294901760
    %v2313 = vsub.f32 %v104, %v2312
    %2314 = vmatpush1.msra.mxu0 %v2313
    %2315 = vmatprep.subr.mxu0 0.0
    %v2316 = vand.u32 %v105, 4294901760
    %v2317 = vsub.f32 %v105, %v2316
    %2318 = vmatpush1.msra.mxu0 %v2317
    %2319 = vmatprep.subr.mxu0 0.0
    %v2320 = vand.u32 %v106, 4294901760
    %v2321 = vsub.f32 %v106, %v2320
    %2322 = vmatpush1.msra.mxu0 %v2321
    %2323 = vmatprep.subr.mxu0 0.0
    %v2324 = vand.u32 %v107, 4294901760
    %v2325 = vsub.f32 %v107, %v2324
    %2326 = vmatpush1.msra.mxu0 %v2325
    %2327 = vmatprep.subr.mxu0 0.0
    %v2328 = vand.u32 %v108, 4294901760
    %v2329 = vsub.f32 %v108, %v2328
    %2330 = vmatpush1.msra.mxu0 %v2329
    %2331 = vmatprep.subr.mxu0 0.0
    %v2332 = vand.u32 %v109, 4294901760
    %v2333 = vsub.f32 %v109, %v2332
    %2334 = vmatpush1.msra.mxu0 %v2333
    %2335 = vmatprep.subr.mxu0 0.0
    %v2336 = vand.u32 %v110, 4294901760
    %v2337 = vsub.f32 %v110, %v2336
    %2338 = vmatpush1.msra.mxu0 %v2337
    %2339 = vmatprep.subr.mxu0 0.0
    %v2340 = vand.u32 %v111, 4294901760
    %v2341 = vsub.f32 %v111, %v2340
    %2342 = vmatpush1.msra.mxu0 %v2341
    %2343 = vmatprep.subr.mxu0 0.0
    %v2344 = vand.u32 %v112, 4294901760
    %v2345 = vsub.f32 %v112, %v2344
    %2346 = vmatpush1.msra.mxu0 %v2345
    %2347 = vmatprep.subr.mxu0 0.0
    %v2348 = vand.u32 %v113, 4294901760
    %v2349 = vsub.f32 %v113, %v2348
    %2350 = vmatpush1.msra.mxu0 %v2349
    %2351 = vmatprep.subr.mxu0 0.0
    %v2352 = vand.u32 %v114, 4294901760
    %v2353 = vsub.f32 %v114, %v2352
    %2354 = vmatpush1.msra.mxu0 %v2353
    %2355 = vmatprep.subr.mxu0 0.0
    %v2356 = vand.u32 %v115, 4294901760
    %v2357 = vsub.f32 %v115, %v2356
    %2358 = vmatpush1.msra.mxu0 %v2357
    %2359 = vmatprep.subr.mxu0 0.0
    %v2360 = vand.u32 %v116, 4294901760
    %v2361 = vsub.f32 %v116, %v2360
    %2362 = vmatpush1.msra.mxu0 %v2361
    %2363 = vmatprep.subr.mxu0 0.0
    %v2364 = vand.u32 %v117, 4294901760
    %v2365 = vsub.f32 %v117, %v2364
    %2366 = vmatpush1.msra.mxu0 %v2365
    %2367 = vmatprep.subr.mxu0 0.0
    %v2368 = vand.u32 %v118, 4294901760
    %v2369 = vsub.f32 %v118, %v2368
    %2370 = vmatpush1.msra.mxu0 %v2369
    %2371 = vmatprep.subr.mxu0 0.0
    %v2372 = vand.u32 %v119, 4294901760
    %v2373 = vsub.f32 %v119, %v2372
    %2374 = vmatpush1.msra.mxu0 %v2373
    %2375 = vmatprep.subr.mxu0 0.0
    %v2376 = vand.u32 %v120, 4294901760
    %v2377 = vsub.f32 %v120, %v2376
    %2378 = vmatpush1.msra.mxu0 %v2377
    %2379 = vmatprep.subr.mxu0 0.0
    %v2380 = vand.u32 %v121, 4294901760
    %v2381 = vsub.f32 %v121, %v2380
    %2382 = vmatpush1.msra.mxu0 %v2381
    %2383 = vmatprep.subr.mxu0 0.0
    %v2384 = vand.u32 %v122, 4294901760
    %v2385 = vsub.f32 %v122, %v2384
    %2386 = vmatpush1.msra.mxu0 %v2385
    %2387 = vmatprep.subr.mxu0 0.0
    %v2388 = vand.u32 %v123, 4294901760
    %v2389 = vsub.f32 %v123, %v2388
    %2390 = vmatpush1.msra.mxu0 %v2389
    %2391 = vmatprep.subr.mxu0 0.0
    %v2392 = vand.u32 %v124, 4294901760
    %v2393 = vsub.f32 %v124, %v2392
    %2394 = vmatpush1.msra.mxu0 %v2393
    %2395 = vmatprep.subr.mxu0 0.0
    %v2396 = vand.u32 %v125, 4294901760
    %v2397 = vsub.f32 %v125, %v2396
    %2398 = vmatpush1.msra.mxu0 %v2397
    %2399 = vmatprep.subr.mxu0 0.0
    %v2400 = vand.u32 %v126, 4294901760
    %v2401 = vsub.f32 %v126, %v2400
    %2402 = vmatpush1.msra.mxu0 %v2401
    %2403 = vmatprep.subr.mxu0 0.0
    %v2404 = vand.u32 %v127, 4294901760
    %v2405 = vsub.f32 %v127, %v2404
    %2406 = vmatpush1.msra.mxu0 %v2405
    %v2407 = vand.u32 %v26, 4294901760
    %v2408 = vsub.f32 %v26, %v2407
    %2409 = vmatprep.mubr.f32.mxu0 %v2408
    %v2410 = vand.u32 %v25, 4294901760
    %v2411 = vsub.f32 %v25, %v2410
    %2412 = vmatmul.mubr.f32.gmra.mrb[0].mxu0 %v2411
    %v2413 = vpop.f32.mrb[0].mxu0
    %v2414 = vadd.f32 %v2276, %v2413
    %v2415 = vpop.f32.mrb[0].mxu0
    %2416 = vdwg.mxu0
    %2417 = vmatprep.subr.mxu0 0.0
    %v2418 = vand.u32 %v96, 4294901760
    %2419 = vmatpush1.msra.mxu0 %v2418
    %2420 = vmatprep.subr.mxu0 0.0
    %v2421 = vand.u32 %v97, 4294901760
    %2422 = vmatpush1.msra.mxu0 %v2421
    %2423 = vmatprep.subr.mxu0 0.0
    %v2424 = vand.u32 %v98, 4294901760
    %2425 = vmatpush1.msra.mxu0 %v2424
    %2426 = vmatprep.subr.mxu0 0.0
    %v2427 = vand.u32 %v99, 4294901760
    %2428 = vmatpush1.msra.mxu0 %v2427
    %2429 = vmatprep.subr.mxu0 0.0
    %v2430 = vand.u32 %v100, 4294901760
    %2431 = vmatpush1.msra.mxu0 %v2430
    %2432 = vmatprep.subr.mxu0 0.0
    %v2433 = vand.u32 %v101, 4294901760
    %2434 = vmatpush1.msra.mxu0 %v2433
    %2435 = vmatprep.subr.mxu0 0.0
    %v2436 = vand.u32 %v102, 4294901760
    %2437 = vmatpush1.msra.mxu0 %v2436
    %2438 = vmatprep.subr.mxu0 0.0
    %v2439 = vand.u32 %v103, 4294901760
    %2440 = vmatpush1.msra.mxu0 %v2439
    %2441 = vmatprep.subr.mxu0 0.0
    %v2442 = vand.u32 %v104, 4294901760
    %2443 = vmatpush1.msra.mxu0 %v2442
    %2444 = vmatprep.subr.mxu0 0.0
    %v2445 = vand.u32 %v105, 4294901760
    %2446 = vmatpush1.msra.mxu0 %v2445
    %2447 = vmatprep.subr.mxu0 0.0
    %v2448 = vand.u32 %v106, 4294901760
    %2449 = vmatpush1.msra.mxu0 %v2448
    %2450 = vmatprep.subr.mxu0 0.0
    %v2451 = vand.u32 %v107, 4294901760
    %2452 = vmatpush1.msra.mxu0 %v2451
    %2453 = vmatprep.subr.mxu0 0.0
    %v2454 = vand.u32 %v108, 4294901760
    %2455 = vmatpush1.msra.mxu0 %v2454
    %2456 = vmatprep.subr.mxu0 0.0
    %v2457 = vand.u32 %v109, 4294901760
    %2458 = vmatpush1.msra.mxu0 %v2457
    %2459 = vmatprep.subr.mxu0 0.0
    %v2460 = vand.u32 %v110, 4294901760
    %2461 = vmatpush1.msra.mxu0 %v2460
    %2462 = vmatprep.subr.mxu0 0.0
    %v2463 = vand.u32 %v111, 4294901760
    %2464 = vmatpush1.msra.mxu0 %v2463
    %2465 = vmatprep.subr.mxu0 0.0
    %v2466 = vand.u32 %v112, 4294901760
    %2467 = vmatpush1.msra.mxu0 %v2466
    %2468 = vmatprep.subr.mxu0 0.0
    %v2469 = vand.u32 %v113, 4294901760
    %2470 = vmatpush1.msra.mxu0 %v2469
    %2471 = vmatprep.subr.mxu0 0.0
    %v2472 = vand.u32 %v114, 4294901760
    %2473 = vmatpush1.msra.mxu0 %v2472
    %2474 = vmatprep.subr.mxu0 0.0
    %v2475 = vand.u32 %v115, 4294901760
    %2476 = vmatpush1.msra.mxu0 %v2475
    %2477 = vmatprep.subr.mxu0 0.0
    %v2478 = vand.u32 %v116, 4294901760
    %2479 = vmatpush1.msra.mxu0 %v2478
    %2480 = vmatprep.subr.mxu0 0.0
    %v2481 = vand.u32 %v117, 4294901760
    %2482 = vmatpush1.msra.mxu0 %v2481
    %2483 = vmatprep.subr.mxu0 0.0
    %v2484 = vand.u32 %v118, 4294901760
    %2485 = vmatpush1.msra.mxu0 %v2484
    %2486 = vmatprep.subr.mxu0 0.0
    %v2487 = vand.u32 %v119, 4294901760
    %2488 = vmatpush1.msra.mxu0 %v2487
    %2489 = vmatprep.subr.mxu0 0.0
    %v2490 = vand.u32 %v120, 4294901760
    %2491 = vmatpush1.msra.mxu0 %v2490
    %2492 = vmatprep.subr.mxu0 0.0
    %v2493 = vand.u32 %v121, 4294901760
    %2494 = vmatpush1.msra.mxu0 %v2493
    %2495 = vmatprep.subr.mxu0 0.0
    %v2496 = vand.u32 %v122, 4294901760
    %2497 = vmatpush1.msra.mxu0 %v2496
    %2498 = vmatprep.subr.mxu0 0.0
    %v2499 = vand.u32 %v123, 4294901760
    %2500 = vmatpush1.msra.mxu0 %v2499
    %2501 = vmatprep.subr.mxu0 0.0
    %v2502 = vand.u32 %v124, 4294901760
    %2503 = vmatpush1.msra.mxu0 %v2502
    %2504 = vmatprep.subr.mxu0 0.0
    %v2505 = vand.u32 %v125, 4294901760
    %2506 = vmatpush1.msra.mxu0 %v2505
    %2507 = vmatprep.subr.mxu0 0.0
    %v2508 = vand.u32 %v126, 4294901760
    %2509 = vmatpush1.msra.mxu0 %v2508
    %2510 = vmatprep.subr.mxu0 0.0
    %v2511 = vand.u32 %v127, 4294901760
    %2512 = vmatpush1.msra.mxu0 %v2511
    %v2513 = vand.u32 %v26, 4294901760
    %v2514 = vsub.f32 %v26, %v2513
    %v2515 = vand.u32 %v2514, 4294901760
    %2516 = vmatprep.mubr.f32.mxu0 %v2515
    %v2517 = vand.u32 %v25, 4294901760
    %v2518 = vsub.f32 %v25, %v2517
    %v2519 = vand.u32 %v2518, 4294901760
    %2520 = vmatmul.mubr.f32.gmra.mrb[0].mxu0 %v2519
    %v2521 = vpop.f32.mrb[0].mxu0
    %v2522 = vadd.f32 %v2414, %v2521
    %v2523 = vpop.f32.mrb[0].mxu0
    %2524 = vdwg.mxu0
    %2525 = vmatprep.subr.mxu0 0.0
    %v2526 = vand.u32 %v96, 4294901760
    %v2527 = vsub.f32 %v96, %v2526
    %v2528 = vand.u32 %v2527, 4294901760
    %2529 = vmatpush1.msra.mxu0 %v2528
    %2530 = vmatprep.subr.mxu0 0.0
    %v2531 = vand.u32 %v97, 4294901760
    %v2532 = vsub.f32 %v97, %v2531
    %v2533 = vand.u32 %v2532, 4294901760
    %2534 = vmatpush1.msra.mxu0 %v2533
    %2535 = vmatprep.subr.mxu0 0.0
    %v2536 = vand.u32 %v98, 4294901760
    %v2537 = vsub.f32 %v98, %v2536
    %v2538 = vand.u32 %v2537, 4294901760
    %2539 = vmatpush1.msra.mxu0 %v2538
    %2540 = vmatprep.subr.mxu0 0.0
    %v2541 = vand.u32 %v99, 4294901760
    %v2542 = vsub.f32 %v99, %v2541
    %v2543 = vand.u32 %v2542, 4294901760
    %2544 = vmatpush1.msra.mxu0 %v2543
    %2545 = vmatprep.subr.mxu0 0.0
    %v2546 = vand.u32 %v100, 4294901760
    %v2547 = vsub.f32 %v100, %v2546
    %v2548 = vand.u32 %v2547, 4294901760
    %2549 = vmatpush1.msra.mxu0 %v2548
    %2550 = vmatprep.subr.mxu0 0.0
    %v2551 = vand.u32 %v101, 4294901760
    %v2552 = vsub.f32 %v101, %v2551
    %v2553 = vand.u32 %v2552, 4294901760
    %2554 = vmatpush1.msra.mxu0 %v2553
    %2555 = vmatprep.subr.mxu0 0.0
    %v2556 = vand.u32 %v102, 4294901760
    %v2557 = vsub.f32 %v102, %v2556
    %v2558 = vand.u32 %v2557, 4294901760
    %2559 = vmatpush1.msra.mxu0 %v2558
    %2560 = vmatprep.subr.mxu0 0.0
    %v2561 = vand.u32 %v103, 4294901760
    %v2562 = vsub.f32 %v103, %v2561
    %v2563 = vand.u32 %v2562, 4294901760
    %2564 = vmatpush1.msra.mxu0 %v2563
    %2565 = vmatprep.subr.mxu0 0.0
    %v2566 = vand.u32 %v104, 4294901760
    %v2567 = vsub.f32 %v104, %v2566
    %v2568 = vand.u32 %v2567, 4294901760
    %2569 = vmatpush1.msra.mxu0 %v2568
    %2570 = vmatprep.subr.mxu0 0.0
    %v2571 = vand.u32 %v105, 4294901760
    %v2572 = vsub.f32 %v105, %v2571
    %v2573 = vand.u32 %v2572, 4294901760
    %2574 = vmatpush1.msra.mxu0 %v2573
    %2575 = vmatprep.subr.mxu0 0.0
    %v2576 = vand.u32 %v106, 4294901760
    %v2577 = vsub.f32 %v106, %v2576
    %v2578 = vand.u32 %v2577, 4294901760
    %2579 = vmatpush1.msra.mxu0 %v2578
    %2580 = vmatprep.subr.mxu0 0.0
    %v2581 = vand.u32 %v107, 4294901760
    %v2582 = vsub.f32 %v107, %v2581
    %v2583 = vand.u32 %v2582, 4294901760
    %2584 = vmatpush1.msra.mxu0 %v2583
    %2585 = vmatprep.subr.mxu0 0.0
    %v2586 = vand.u32 %v108, 4294901760
    %v2587 = vsub.f32 %v108, %v2586
    %v2588 = vand.u32 %v2587, 4294901760
    %2589 = vmatpush1.msra.mxu0 %v2588
    %2590 = vmatprep.subr.mxu0 0.0
    %v2591 = vand.u32 %v109, 4294901760
    %v2592 = vsub.f32 %v109, %v2591
    %v2593 = vand.u32 %v2592, 4294901760
    %2594 = vmatpush1.msra.mxu0 %v2593
    %2595 = vmatprep.subr.mxu0 0.0
    %v2596 = vand.u32 %v110, 4294901760
    %v2597 = vsub.f32 %v110, %v2596
    %v2598 = vand.u32 %v2597, 4294901760
    %2599 = vmatpush1.msra.mxu0 %v2598
    %2600 = vmatprep.subr.mxu0 0.0
    %v2601 = vand.u32 %v111, 4294901760
    %v2602 = vsub.f32 %v111, %v2601
    %v2603 = vand.u32 %v2602, 4294901760
    %2604 = vmatpush1.msra.mxu0 %v2603
    %2605 = vmatprep.subr.mxu0 0.0
    %v2606 = vand.u32 %v112, 4294901760
    %v2607 = vsub.f32 %v112, %v2606
    %v2608 = vand.u32 %v2607, 4294901760
    %2609 = vmatpush1.msra.mxu0 %v2608
    %2610 = vmatprep.subr.mxu0 0.0
    %v2611 = vand.u32 %v113, 4294901760
    %v2612 = vsub.f32 %v113, %v2611
    %v2613 = vand.u32 %v2612, 4294901760
    %2614 = vmatpush1.msra.mxu0 %v2613
    %2615 = vmatprep.subr.mxu0 0.0
    %v2616 = vand.u32 %v114, 4294901760
    %v2617 = vsub.f32 %v114, %v2616
    %v2618 = vand.u32 %v2617, 4294901760
    %2619 = vmatpush1.msra.mxu0 %v2618
    %2620 = vmatprep.subr.mxu0 0.0
    %v2621 = vand.u32 %v115, 4294901760
    %v2622 = vsub.f32 %v115, %v2621
    %v2623 = vand.u32 %v2622, 4294901760
    %2624 = vmatpush1.msra.mxu0 %v2623
    %2625 = vmatprep.subr.mxu0 0.0
    %v2626 = vand.u32 %v116, 4294901760
    %v2627 = vsub.f32 %v116, %v2626
    %v2628 = vand.u32 %v2627, 4294901760
    %2629 = vmatpush1.msra.mxu0 %v2628
    %2630 = vmatprep.subr.mxu0 0.0
    %v2631 = vand.u32 %v117, 4294901760
    %v2632 = vsub.f32 %v117, %v2631
    %v2633 = vand.u32 %v2632, 4294901760
    %2634 = vmatpush1.msra.mxu0 %v2633
    %2635 = vmatprep.subr.mxu0 0.0
    %v2636 = vand.u32 %v118, 4294901760
    %v2637 = vsub.f32 %v118, %v2636
    %v2638 = vand.u32 %v2637, 4294901760
    %2639 = vmatpush1.msra.mxu0 %v2638
    %2640 = vmatprep.subr.mxu0 0.0
    %v2641 = vand.u32 %v119, 4294901760
    %v2642 = vsub.f32 %v119, %v2641
    %v2643 = vand.u32 %v2642, 4294901760
    %2644 = vmatpush1.msra.mxu0 %v2643
    %2645 = vmatprep.subr.mxu0 0.0
    %v2646 = vand.u32 %v120, 4294901760
    %v2647 = vsub.f32 %v120, %v2646
    %v2648 = vand.u32 %v2647, 4294901760
    %2649 = vmatpush1.msra.mxu0 %v2648
    %2650 = vmatprep.subr.mxu0 0.0
    %v2651 = vand.u32 %v121, 4294901760
    %v2652 = vsub.f32 %v121, %v2651
    %v2653 = vand.u32 %v2652, 4294901760
    %2654 = vmatpush1.msra.mxu0 %v2653
    %2655 = vmatprep.subr.mxu0 0.0
    %v2656 = vand.u32 %v122, 4294901760
    %v2657 = vsub.f32 %v122, %v2656
    %v2658 = vand.u32 %v2657, 4294901760
    %2659 = vmatpush1.msra.mxu0 %v2658
    %2660 = vmatprep.subr.mxu0 0.0
    %v2661 = vand.u32 %v123, 4294901760
    %v2662 = vsub.f32 %v123, %v2661
    %v2663 = vand.u32 %v2662, 4294901760
    %2664 = vmatpush1.msra.mxu0 %v2663
    %2665 = vmatprep.subr.mxu0 0.0
    %v2666 = vand.u32 %v124, 4294901760
    %v2667 = vsub.f32 %v124, %v2666
    %v2668 = vand.u32 %v2667, 4294901760
    %2669 = vmatpush1.msra.mxu0 %v2668
    %2670 = vmatprep.subr.mxu0 0.0
    %v2671 = vand.u32 %v125, 4294901760
    %v2672 = vsub.f32 %v125, %v2671
    %v2673 = vand.u32 %v2672, 4294901760
    %2674 = vmatpush1.msra.mxu0 %v2673
    %2675 = vmatprep.subr.mxu0 0.0
    %v2676 = vand.u32 %v126, 4294901760
    %v2677 = vsub.f32 %v126, %v2676
    %v2678 = vand.u32 %v2677, 4294901760
    %2679 = vmatpush1.msra.mxu0 %v2678
    %2680 = vmatprep.subr.mxu0 0.0
    %v2681 = vand.u32 %v127, 4294901760
    %v2682 = vsub.f32 %v127, %v2681
    %v2683 = vand.u32 %v2682, 4294901760
    %2684 = vmatpush1.msra.mxu0 %v2683
    %v2685 = vand.u32 %v26, 4294901760
    %2686 = vmatprep.mubr.f32.mxu0 %v2685
    %v2687 = vand.u32 %v25, 4294901760
    %2688 = vmatmul.mubr.f32.gmra.mrb[0].mxu0 %v2687
    %v2689 = vpop.f32.mrb[0].mxu0
    %v2690 = vadd.f32 %v2522, %v2689
    %v2691 = vpop.f32.mrb[0].mxu0
    %2692 = vdwg.mxu0
    %2693 = vmatprep.subr.mxu0 0.0
    %v2694 = vand.u32 %v96, 4294901760
    %2695 = vmatpush1.msra.mxu0 %v2694
    %2696 = vmatprep.subr.mxu0 0.0
    %v2697 = vand.u32 %v97, 4294901760
    %2698 = vmatpush1.msra.mxu0 %v2697
    %2699 = vmatprep.subr.mxu0 0.0
    %v2700 = vand.u32 %v98, 4294901760
    %2701 = vmatpush1.msra.mxu0 %v2700
    %2702 = vmatprep.subr.mxu0 0.0
    %v2703 = vand.u32 %v99, 4294901760
    %2704 = vmatpush1.msra.mxu0 %v2703
    %2705 = vmatprep.subr.mxu0 0.0
    %v2706 = vand.u32 %v100, 4294901760
    %2707 = vmatpush1.msra.mxu0 %v2706
    %2708 = vmatprep.subr.mxu0 0.0
    %v2709 = vand.u32 %v101, 4294901760
    %2710 = vmatpush1.msra.mxu0 %v2709
    %2711 = vmatprep.subr.mxu0 0.0
    %v2712 = vand.u32 %v102, 4294901760
    %2713 = vmatpush1.msra.mxu0 %v2712
    %2714 = vmatprep.subr.mxu0 0.0
    %v2715 = vand.u32 %v103, 4294901760
    %2716 = vmatpush1.msra.mxu0 %v2715
    %2717 = vmatprep.subr.mxu0 0.0
    %v2718 = vand.u32 %v104, 4294901760
    %2719 = vmatpush1.msra.mxu0 %v2718
    %2720 = vmatprep.subr.mxu0 0.0
    %v2721 = vand.u32 %v105, 4294901760
    %2722 = vmatpush1.msra.mxu0 %v2721
    %2723 = vmatprep.subr.mxu0 0.0
    %v2724 = vand.u32 %v106, 4294901760
    %2725 = vmatpush1.msra.mxu0 %v2724
    %2726 = vmatprep.subr.mxu0 0.0
    %v2727 = vand.u32 %v107, 4294901760
    %2728 = vmatpush1.msra.mxu0 %v2727
    %2729 = vmatprep.subr.mxu0 0.0
    %v2730 = vand.u32 %v108, 4294901760
    %2731 = vmatpush1.msra.mxu0 %v2730
    %2732 = vmatprep.subr.mxu0 0.0
    %v2733 = vand.u32 %v109, 4294901760
    %2734 = vmatpush1.msra.mxu0 %v2733
    %2735 = vmatprep.subr.mxu0 0.0
    %v2736 = vand.u32 %v110, 4294901760
    %2737 = vmatpush1.msra.mxu0 %v2736
    %2738 = vmatprep.subr.mxu0 0.0
    %v2739 = vand.u32 %v111, 4294901760
    %2740 = vmatpush1.msra.mxu0 %v2739
    %2741 = vmatprep.subr.mxu0 0.0
    %v2742 = vand.u32 %v112, 4294901760
    %2743 = vmatpush1.msra.mxu0 %v2742
    %2744 = vmatprep.subr.mxu0 0.0
    %v2745 = vand.u32 %v113, 4294901760
    %2746 = vmatpush1.msra.mxu0 %v2745
    %2747 = vmatprep.subr.mxu0 0.0
    %v2748 = vand.u32 %v114, 4294901760
    %2749 = vmatpush1.msra.mxu0 %v2748
    %2750 = vmatprep.subr.mxu0 0.0
    %v2751 = vand.u32 %v115, 4294901760
    %2752 = vmatpush1.msra.mxu0 %v2751
    %2753 = vmatprep.subr.mxu0 0.0
    %v2754 = vand.u32 %v116, 4294901760
    %2755 = vmatpush1.msra.mxu0 %v2754
    %2756 = vmatprep.subr.mxu0 0.0
    %v2757 = vand.u32 %v117, 4294901760
    %2758 = vmatpush1.msra.mxu0 %v2757
    %2759 = vmatprep.subr.mxu0 0.0
    %v2760 = vand.u32 %v118, 4294901760
    %2761 = vmatpush1.msra.mxu0 %v2760
    %2762 = vmatprep.subr.mxu0 0.0
    %v2763 = vand.u32 %v119, 4294901760
    %2764 = vmatpush1.msra.mxu0 %v2763
    %2765 = vmatprep.subr.mxu0 0.0
    %v2766 = vand.u32 %v120, 4294901760
    %2767 = vmatpush1.msra.mxu0 %v2766
    %2768 = vmatprep.subr.mxu0 0.0
    %v2769 = vand.u32 %v121, 4294901760
    %2770 = vmatpush1.msra.mxu0 %v2769
    %2771 = vmatprep.subr.mxu0 0.0
    %v2772 = vand.u32 %v122, 4294901760
    %2773 = vmatpush1.msra.mxu0 %v2772
    %2774 = vmatprep.subr.mxu0 0.0
    %v2775 = vand.u32 %v123, 4294901760
    %2776 = vmatpush1.msra.mxu0 %v2775
    %2777 = vmatprep.subr.mxu0 0.0
    %v2778 = vand.u32 %v124, 4294901760
    %2779 = vmatpush1.msra.mxu0 %v2778
    %2780 = vmatprep.subr.mxu0 0.0
    %v2781 = vand.u32 %v125, 4294901760
    %2782 = vmatpush1.msra.mxu0 %v2781
    %2783 = vmatprep.subr.mxu0 0.0
    %v2784 = vand.u32 %v126, 4294901760
    %2785 = vmatpush1.msra.mxu0 %v2784
    %2786 = vmatprep.subr.mxu0 0.0
    %v2787 = vand.u32 %v127, 4294901760
    %2788 = vmatpush1.msra.mxu0 %v2787
    %v2789 = vand.u32 %v26, 4294901760
    %2790 = vmatprep.mubr.f32.mxu0 %v2789
    %v2791 = vand.u32 %v25, 4294901760
    %2792 = vmatmul.mubr.f32.gmra.mrb[0].mxu0 %v2791
    %v2793 = vpop.f32.mrb[0].mxu0
    %v2794 = vadd.f32 %v2690, %v2793
    %v2795 = vpop.f32.mrb[0].mxu0
    %2796 = vdwg.mxu0
    %2797 = vmatprep.subr.mxu0 0.0
    %v2798 = vand.u32 %v128, 4294901760
    %2799 = vmatpush1.msra.mxu0 %v2798
    %2800 = vmatprep.subr.mxu0 0.0
    %v2801 = vand.u32 %v129, 4294901760
    %2802 = vmatpush1.msra.mxu0 %v2801
    %2803 = vmatprep.subr.mxu0 0.0
    %v2804 = vand.u32 %v130, 4294901760
    %2805 = vmatpush1.msra.mxu0 %v2804
    %2806 = vmatprep.subr.mxu0 0.0
    %v2807 = vand.u32 %v131, 4294901760
    %2808 = vmatpush1.msra.mxu0 %v2807
    %2809 = vmatprep.subr.mxu0 0.0
    %v2810 = vand.u32 %v132, 4294901760
    %2811 = vmatpush1.msra.mxu0 %v2810
    %2812 = vmatprep.subr.mxu0 0.0
    %v2813 = vand.u32 %v133, 4294901760
    %2814 = vmatpush1.msra.mxu0 %v2813
    %2815 = vmatprep.subr.mxu0 0.0
    %v2816 = vand.u32 %v134, 4294901760
    %2817 = vmatpush1.msra.mxu0 %v2816
    %2818 = vmatprep.subr.mxu0 0.0
    %v2819 = vand.u32 %v135, 4294901760
    %2820 = vmatpush1.msra.mxu0 %v2819
    %2821 = vmatprep.subr.mxu0 0.0
    %v2822 = vand.u32 %v136, 4294901760
    %2823 = vmatpush1.msra.mxu0 %v2822
    %2824 = vmatprep.subr.mxu0 0.0
    %v2825 = vand.u32 %v137, 4294901760
    %2826 = vmatpush1.msra.mxu0 %v2825
    %2827 = vmatprep.subr.mxu0 0.0
    %v2828 = vand.u32 %v138, 4294901760
    %2829 = vmatpush1.msra.mxu0 %v2828
    %2830 = vmatprep.subr.mxu0 0.0
    %v2831 = vand.u32 %v139, 4294901760
    %2832 = vmatpush1.msra.mxu0 %v2831
    %2833 = vmatprep.subr.mxu0 0.0
    %v2834 = vand.u32 %v140, 4294901760
    %2835 = vmatpush1.msra.mxu0 %v2834
    %2836 = vmatprep.subr.mxu0 0.0
    %v2837 = vand.u32 %v141, 4294901760
    %2838 = vmatpush1.msra.mxu0 %v2837
    %2839 = vmatprep.subr.mxu0 0.0
    %v2840 = vand.u32 %v142, 4294901760
    %2841 = vmatpush1.msra.mxu0 %v2840
    %2842 = vmatprep.subr.mxu0 0.0
    %v2843 = vand.u32 %v143, 4294901760
    %2844 = vmatpush1.msra.mxu0 %v2843
    %2845 = vmatprep.subr.mxu0 0.0
    %v2846 = vand.u32 %v144, 4294901760
    %2847 = vmatpush1.msra.mxu0 %v2846
    %2848 = vmatprep.subr.mxu0 0.0
    %v2849 = vand.u32 %v145, 4294901760
    %2850 = vmatpush1.msra.mxu0 %v2849
    %2851 = vmatprep.subr.mxu0 0.0
    %v2852 = vand.u32 %v146, 4294901760
    %2853 = vmatpush1.msra.mxu0 %v2852
    %2854 = vmatprep.subr.mxu0 0.0
    %v2855 = vand.u32 %v147, 4294901760
    %2856 = vmatpush1.msra.mxu0 %v2855
    %2857 = vmatprep.subr.mxu0 0.0
    %v2858 = vand.u32 %v148, 4294901760
    %2859 = vmatpush1.msra.mxu0 %v2858
    %2860 = vmatprep.subr.mxu0 0.0
    %v2861 = vand.u32 %v149, 4294901760
    %2862 = vmatpush1.msra.mxu0 %v2861
    %2863 = vmatprep.subr.mxu0 0.0
    %v2864 = vand.u32 %v150, 4294901760
    %2865 = vmatpush1.msra.mxu0 %v2864
    %2866 = vmatprep.subr.mxu0 0.0
    %v2867 = vand.u32 %v151, 4294901760
    %2868 = vmatpush1.msra.mxu0 %v2867
    %2869 = vmatprep.subr.mxu0 0.0
    %v2870 = vand.u32 %v152, 4294901760
    %2871 = vmatpush1.msra.mxu0 %v2870
    %2872 = vmatprep.subr.mxu0 0.0
    %v2873 = vand.u32 %v153, 4294901760
    %2874 = vmatpush1.msra.mxu0 %v2873
    %2875 = vmatprep.subr.mxu0 0.0
    %v2876 = vand.u32 %v154, 4294901760
    %2877 = vmatpush1.msra.mxu0 %v2876
    %2878 = vmatprep.subr.mxu0 0.0
    %v2879 = vand.u32 %v155, 4294901760
    %2880 = vmatpush1.msra.mxu0 %v2879
    %2881 = vmatprep.subr.mxu0 0.0
    %v2882 = vand.u32 %v156, 4294901760
    %2883 = vmatpush1.msra.mxu0 %v2882
    %2884 = vmatprep.subr.mxu0 0.0
    %v2885 = vand.u32 %v157, 4294901760
    %2886 = vmatpush1.msra.mxu0 %v2885
    %2887 = vmatprep.subr.mxu0 0.0
    %v2888 = vand.u32 %v158, 4294901760
    %2889 = vmatpush1.msra.mxu0 %v2888
    %2890 = vmatprep.subr.mxu0 0.0
    %v2891 = vand.u32 %v159, 4294901760
    %2892 = vmatpush1.msra.mxu0 %v2891
    %v2893 = vand.u32 %v28, 4294901760
    %v2894 = vsub.f32 %v28, %v2893
    %v2895 = vand.u32 %v2894, 4294901760
    %v2896 = vsub.f32 %v2894, %v2895
    %v2897 = vand.u32 %v2896, 4294901760
    %2898 = vmatprep.mubr.f32.mxu0 %v2897
    %v2899 = vand.u32 %v27, 4294901760
    %v2900 = vsub.f32 %v27, %v2899
    %v2901 = vand.u32 %v2900, 4294901760
    %v2902 = vsub.f32 %v2900, %v2901
    %v2903 = vand.u32 %v2902, 4294901760
    %2904 = vmatmul.mubr.f32.gmra.mrb[0].mxu0 %v2903
    %v2905 = vpop.f32.mrb[0].mxu0
    %v2906 = vadd.f32 %v2794, %v2905
    %v2907 = vpop.f32.mrb[0].mxu0
    %2908 = vdwg.mxu0
    %2909 = vmatprep.subr.mxu0 0.0
    %v2910 = vand.u32 %v128, 4294901760
    %v2911 = vsub.f32 %v128, %v2910
    %v2912 = vand.u32 %v2911, 4294901760
    %v2913 = vsub.f32 %v2911, %v2912
    %v2914 = vand.u32 %v2913, 4294901760
    %2915 = vmatpush1.msra.mxu0 %v2914
    %2916 = vmatprep.subr.mxu0 0.0
    %v2917 = vand.u32 %v129, 4294901760
    %v2918 = vsub.f32 %v129, %v2917
    %v2919 = vand.u32 %v2918, 4294901760
    %v2920 = vsub.f32 %v2918, %v2919
    %v2921 = vand.u32 %v2920, 4294901760
    %2922 = vmatpush1.msra.mxu0 %v2921
    %2923 = vmatprep.subr.mxu0 0.0
    %v2924 = vand.u32 %v130, 4294901760
    %v2925 = vsub.f32 %v130, %v2924
    %v2926 = vand.u32 %v2925, 4294901760
    %v2927 = vsub.f32 %v2925, %v2926
    %v2928 = vand.u32 %v2927, 4294901760
    %2929 = vmatpush1.msra.mxu0 %v2928
    %2930 = vmatprep.subr.mxu0 0.0
    %v2931 = vand.u32 %v131, 4294901760
    %v2932 = vsub.f32 %v131, %v2931
    %v2933 = vand.u32 %v2932, 4294901760
    %v2934 = vsub.f32 %v2932, %v2933
    %v2935 = vand.u32 %v2934, 4294901760
    %2936 = vmatpush1.msra.mxu0 %v2935
    %2937 = vmatprep.subr.mxu0 0.0
    %v2938 = vand.u32 %v132, 4294901760
    %v2939 = vsub.f32 %v132, %v2938
    %v2940 = vand.u32 %v2939, 4294901760
    %v2941 = vsub.f32 %v2939, %v2940
    %v2942 = vand.u32 %v2941, 4294901760
    %2943 = vmatpush1.msra.mxu0 %v2942
    %2944 = vmatprep.subr.mxu0 0.0
    %v2945 = vand.u32 %v133, 4294901760
    %v2946 = vsub.f32 %v133, %v2945
    %v2947 = vand.u32 %v2946, 4294901760
    %v2948 = vsub.f32 %v2946, %v2947
    %v2949 = vand.u32 %v2948, 4294901760
    %2950 = vmatpush1.msra.mxu0 %v2949
    %2951 = vmatprep.subr.mxu0 0.0
    %v2952 = vand.u32 %v134, 4294901760
    %v2953 = vsub.f32 %v134, %v2952
    %v2954 = vand.u32 %v2953, 4294901760
    %v2955 = vsub.f32 %v2953, %v2954
    %v2956 = vand.u32 %v2955, 4294901760
    %2957 = vmatpush1.msra.mxu0 %v2956
    %2958 = vmatprep.subr.mxu0 0.0
    %v2959 = vand.u32 %v135, 4294901760
    %v2960 = vsub.f32 %v135, %v2959
    %v2961 = vand.u32 %v2960, 4294901760
    %v2962 = vsub.f32 %v2960, %v2961
    %v2963 = vand.u32 %v2962, 4294901760
    %2964 = vmatpush1.msra.mxu0 %v2963
    %2965 = vmatprep.subr.mxu0 0.0
    %v2966 = vand.u32 %v136, 4294901760
    %v2967 = vsub.f32 %v136, %v2966
    %v2968 = vand.u32 %v2967, 4294901760
    %v2969 = vsub.f32 %v2967, %v2968
    %v2970 = vand.u32 %v2969, 4294901760
    %2971 = vmatpush1.msra.mxu0 %v2970
    %2972 = vmatprep.subr.mxu0 0.0
    %v2973 = vand.u32 %v137, 4294901760
    %v2974 = vsub.f32 %v137, %v2973
    %v2975 = vand.u32 %v2974, 4294901760
    %v2976 = vsub.f32 %v2974, %v2975
    %v2977 = vand.u32 %v2976, 4294901760
    %2978 = vmatpush1.msra.mxu0 %v2977
    %2979 = vmatprep.subr.mxu0 0.0
    %v2980 = vand.u32 %v138, 4294901760
    %v2981 = vsub.f32 %v138, %v2980
    %v2982 = vand.u32 %v2981, 4294901760
    %v2983 = vsub.f32 %v2981, %v2982
    %v2984 = vand.u32 %v2983, 4294901760
    %2985 = vmatpush1.msra.mxu0 %v2984
    %2986 = vmatprep.subr.mxu0 0.0
    %v2987 = vand.u32 %v139, 4294901760
    %v2988 = vsub.f32 %v139, %v2987
    %v2989 = vand.u32 %v2988, 4294901760
    %v2990 = vsub.f32 %v2988, %v2989
    %v2991 = vand.u32 %v2990, 4294901760
    %2992 = vmatpush1.msra.mxu0 %v2991
    %2993 = vmatprep.subr.mxu0 0.0
    %v2994 = vand.u32 %v140, 4294901760
    %v2995 = vsub.f32 %v140, %v2994
    %v2996 = vand.u32 %v2995, 4294901760
    %v2997 = vsub.f32 %v2995, %v2996
    %v2998 = vand.u32 %v2997, 4294901760
    %2999 = vmatpush1.msra.mxu0 %v2998
    %3000 = vmatprep.subr.mxu0 0.0
    %v3001 = vand.u32 %v141, 4294901760
    %v3002 = vsub.f32 %v141, %v3001
    %v3003 = vand.u32 %v3002, 4294901760
    %v3004 = vsub.f32 %v3002, %v3003
    %v3005 = vand.u32 %v3004, 4294901760
    %3006 = vmatpush1.msra.mxu0 %v3005
    %3007 = vmatprep.subr.mxu0 0.0
    %v3008 = vand.u32 %v142, 4294901760
    %v3009 = vsub.f32 %v142, %v3008
    %v3010 = vand.u32 %v3009, 4294901760
    %v3011 = vsub.f32 %v3009, %v3010
    %v3012 = vand.u32 %v3011, 4294901760
    %3013 = vmatpush1.msra.mxu0 %v3012
    %3014 = vmatprep.subr.mxu0 0.0
    %v3015 = vand.u32 %v143, 4294901760
    %v3016 = vsub.f32 %v143, %v3015
    %v3017 = vand.u32 %v3016, 4294901760
    %v3018 = vsub.f32 %v3016, %v3017
    %v3019 = vand.u32 %v3018, 4294901760
    %3020 = vmatpush1.msra.mxu0 %v3019
    %3021 = vmatprep.subr.mxu0 0.0
    %v3022 = vand.u32 %v144, 4294901760
    %v3023 = vsub.f32 %v144, %v3022
    %v3024 = vand.u32 %v3023, 4294901760
    %v3025 = vsub.f32 %v3023, %v3024
    %v3026 = vand.u32 %v3025, 4294901760
    %3027 = vmatpush1.msra.mxu0 %v3026
    %3028 = vmatprep.subr.mxu0 0.0
    %v3029 = vand.u32 %v145, 4294901760
    %v3030 = vsub.f32 %v145, %v3029
    %v3031 = vand.u32 %v3030, 4294901760
    %v3032 = vsub.f32 %v3030, %v3031
    %v3033 = vand.u32 %v3032, 4294901760
    %3034 = vmatpush1.msra.mxu0 %v3033
    %3035 = vmatprep.subr.mxu0 0.0
    %v3036 = vand.u32 %v146, 4294901760
    %v3037 = vsub.f32 %v146, %v3036
    %v3038 = vand.u32 %v3037, 4294901760
    %v3039 = vsub.f32 %v3037, %v3038
    %v3040 = vand.u32 %v3039, 4294901760
    %3041 = vmatpush1.msra.mxu0 %v3040
    %3042 = vmatprep.subr.mxu0 0.0
    %v3043 = vand.u32 %v147, 4294901760
    %v3044 = vsub.f32 %v147, %v3043
    %v3045 = vand.u32 %v3044, 4294901760
    %v3046 = vsub.f32 %v3044, %v3045
    %v3047 = vand.u32 %v3046, 4294901760
    %3048 = vmatpush1.msra.mxu0 %v3047
    %3049 = vmatprep.subr.mxu0 0.0
    %v3050 = vand.u32 %v148, 4294901760
    %v3051 = vsub.f32 %v148, %v3050
    %v3052 = vand.u32 %v3051, 4294901760
    %v3053 = vsub.f32 %v3051, %v3052
    %v3054 = vand.u32 %v3053, 4294901760
    %3055 = vmatpush1.msra.mxu0 %v3054
    %3056 = vmatprep.subr.mxu0 0.0
    %v3057 = vand.u32 %v149, 4294901760
    %v3058 = vsub.f32 %v149, %v3057
    %v3059 = vand.u32 %v3058, 4294901760
    %v3060 = vsub.f32 %v3058, %v3059
    %v3061 = vand.u32 %v3060, 4294901760
    %3062 = vmatpush1.msra.mxu0 %v3061
    %3063 = vmatprep.subr.mxu0 0.0
    %v3064 = vand.u32 %v150, 4294901760
    %v3065 = vsub.f32 %v150, %v3064
    %v3066 = vand.u32 %v3065, 4294901760
    %v3067 = vsub.f32 %v3065, %v3066
    %v3068 = vand.u32 %v3067, 4294901760
    %3069 = vmatpush1.msra.mxu0 %v3068
    %3070 = vmatprep.subr.mxu0 0.0
    %v3071 = vand.u32 %v151, 4294901760
    %v3072 = vsub.f32 %v151, %v3071
    %v3073 = vand.u32 %v3072, 4294901760
    %v3074 = vsub.f32 %v3072, %v3073
    %v3075 = vand.u32 %v3074, 4294901760
    %3076 = vmatpush1.msra.mxu0 %v3075
    %3077 = vmatprep.subr.mxu0 0.0
    %v3078 = vand.u32 %v152, 4294901760
    %v3079 = vsub.f32 %v152, %v3078
    %v3080 = vand.u32 %v3079, 4294901760
    %v3081 = vsub.f32 %v3079, %v3080
    %v3082 = vand.u32 %v3081, 4294901760
    %3083 = vmatpush1.msra.mxu0 %v3082
    %3084 = vmatprep.subr.mxu0 0.0
    %v3085 = vand.u32 %v153, 4294901760
    %v3086 = vsub.f32 %v153, %v3085
    %v3087 = vand.u32 %v3086, 4294901760
    %v3088 = vsub.f32 %v3086, %v3087
    %v3089 = vand.u32 %v3088, 4294901760
    %3090 = vmatpush1.msra.mxu0 %v3089
    %3091 = vmatprep.subr.mxu0 0.0
    %v3092 = vand.u32 %v154, 4294901760
    %v3093 = vsub.f32 %v154, %v3092
    %v3094 = vand.u32 %v3093, 4294901760
    %v3095 = vsub.f32 %v3093, %v3094
    %v3096 = vand.u32 %v3095, 4294901760
    %3097 = vmatpush1.msra.mxu0 %v3096
    %3098 = vmatprep.subr.mxu0 0.0
    %v3099 = vand.u32 %v155, 4294901760
    %v3100 = vsub.f32 %v155, %v3099
    %v3101 = vand.u32 %v3100, 4294901760
    %v3102 = vsub.f32 %v3100, %v3101
    %v3103 = vand.u32 %v3102, 4294901760
    %3104 = vmatpush1.msra.mxu0 %v3103
    %3105 = vmatprep.subr.mxu0 0.0
    %v3106 = vand.u32 %v156, 4294901760
    %v3107 = vsub.f32 %v156, %v3106
    %v3108 = vand.u32 %v3107, 4294901760
    %v3109 = vsub.f32 %v3107, %v3108
    %v3110 = vand.u32 %v3109, 4294901760
    %3111 = vmatpush1.msra.mxu0 %v3110
    %3112 = vmatprep.subr.mxu0 0.0
    %v3113 = vand.u32 %v157, 4294901760
    %v3114 = vsub.f32 %v157, %v3113
    %v3115 = vand.u32 %v3114, 4294901760
    %v3116 = vsub.f32 %v3114, %v3115
    %v3117 = vand.u32 %v3116, 4294901760
    %3118 = vmatpush1.msra.mxu0 %v3117
    %3119 = vmatprep.subr.mxu0 0.0
    %v3120 = vand.u32 %v158, 4294901760
    %v3121 = vsub.f32 %v158, %v3120
    %v3122 = vand.u32 %v3121, 4294901760
    %v3123 = vsub.f32 %v3121, %v3122
    %v3124 = vand.u32 %v3123, 4294901760
    %3125 = vmatpush1.msra.mxu0 %v3124
    %3126 = vmatprep.subr.mxu0 0.0
    %v3127 = vand.u32 %v159, 4294901760
    %v3128 = vsub.f32 %v159, %v3127
    %v3129 = vand.u32 %v3128, 4294901760
    %v3130 = vsub.f32 %v3128, %v3129
    %v3131 = vand.u32 %v3130, 4294901760
    %3132 = vmatpush1.msra.mxu0 %v3131
    %v3133 = vand.u32 %v28, 4294901760
    %3134 = vmatprep.mubr.f32.mxu0 %v3133
    %v3135 = vand.u32 %v27, 4294901760
    %3136 = vmatmul.mubr.f32.gmra.mrb[0].mxu0 %v3135
    %v3137 = vpop.f32.mrb[0].mxu0
    %v3138 = vadd.f32 %v2906, %v3137
    %v3139 = vpop.f32.mrb[0].mxu0
    %3140 = vdwg.mxu0
    %3141 = vmatprep.subr.mxu0 0.0
    %v3142 = vand.u32 %v128, 4294901760
    %v3143 = vsub.f32 %v128, %v3142
    %3144 = vmatpush1.msra.mxu0 %v3143
    %3145 = vmatprep.subr.mxu0 0.0
    %v3146 = vand.u32 %v129, 4294901760
    %v3147 = vsub.f32 %v129, %v3146
    %3148 = vmatpush1.msra.mxu0 %v3147
    %3149 = vmatprep.subr.mxu0 0.0
    %v3150 = vand.u32 %v130, 4294901760
    %v3151 = vsub.f32 %v130, %v3150
    %3152 = vmatpush1.msra.mxu0 %v3151
    %3153 = vmatprep.subr.mxu0 0.0
    %v3154 = vand.u32 %v131, 4294901760
    %v3155 = vsub.f32 %v131, %v3154
    %3156 = vmatpush1.msra.mxu0 %v3155
    %3157 = vmatprep.subr.mxu0 0.0
    %v3158 = vand.u32 %v132, 4294901760
    %v3159 = vsub.f32 %v132, %v3158
    %3160 = vmatpush1.msra.mxu0 %v3159
    %3161 = vmatprep.subr.mxu0 0.0
    %v3162 = vand.u32 %v133, 4294901760
    %v3163 = vsub.f32 %v133, %v3162
    %3164 = vmatpush1.msra.mxu0 %v3163
    %3165 = vmatprep.subr.mxu0 0.0
    %v3166 = vand.u32 %v134, 4294901760
    %v3167 = vsub.f32 %v134, %v3166
    %3168 = vmatpush1.msra.mxu0 %v3167
    %3169 = vmatprep.subr.mxu0 0.0
    %v3170 = vand.u32 %v135, 4294901760
    %v3171 = vsub.f32 %v135, %v3170
    %3172 = vmatpush1.msra.mxu0 %v3171
    %3173 = vmatprep.subr.mxu0 0.0
    %v3174 = vand.u32 %v136, 4294901760
    %v3175 = vsub.f32 %v136, %v3174
    %3176 = vmatpush1.msra.mxu0 %v3175
    %3177 = vmatprep.subr.mxu0 0.0
    %v3178 = vand.u32 %v137, 4294901760
    %v3179 = vsub.f32 %v137, %v3178
    %3180 = vmatpush1.msra.mxu0 %v3179
    %3181 = vmatprep.subr.mxu0 0.0
    %v3182 = vand.u32 %v138, 4294901760
    %v3183 = vsub.f32 %v138, %v3182
    %3184 = vmatpush1.msra.mxu0 %v3183
    %3185 = vmatprep.subr.mxu0 0.0
    %v3186 = vand.u32 %v139, 4294901760
    %v3187 = vsub.f32 %v139, %v3186
    %3188 = vmatpush1.msra.mxu0 %v3187
    %3189 = vmatprep.subr.mxu0 0.0
    %v3190 = vand.u32 %v140, 4294901760
    %v3191 = vsub.f32 %v140, %v3190
    %3192 = vmatpush1.msra.mxu0 %v3191
    %3193 = vmatprep.subr.mxu0 0.0
    %v3194 = vand.u32 %v141, 4294901760
    %v3195 = vsub.f32 %v141, %v3194
    %3196 = vmatpush1.msra.mxu0 %v3195
    %3197 = vmatprep.subr.mxu0 0.0
    %v3198 = vand.u32 %v142, 4294901760
    %v3199 = vsub.f32 %v142, %v3198
    %3200 = vmatpush1.msra.mxu0 %v3199
    %3201 = vmatprep.subr.mxu0 0.0
    %v3202 = vand.u32 %v143, 4294901760
    %v3203 = vsub.f32 %v143, %v3202
    %3204 = vmatpush1.msra.mxu0 %v3203
    %3205 = vmatprep.subr.mxu0 0.0
    %v3206 = vand.u32 %v144, 4294901760
    %v3207 = vsub.f32 %v144, %v3206
    %3208 = vmatpush1.msra.mxu0 %v3207
    %3209 = vmatprep.subr.mxu0 0.0
    %v3210 = vand.u32 %v145, 4294901760
    %v3211 = vsub.f32 %v145, %v3210
    %3212 = vmatpush1.msra.mxu0 %v3211
    %3213 = vmatprep.subr.mxu0 0.0
    %v3214 = vand.u32 %v146, 4294901760
    %v3215 = vsub.f32 %v146, %v3214
    %3216 = vmatpush1.msra.mxu0 %v3215
    %3217 = vmatprep.subr.mxu0 0.0
    %v3218 = vand.u32 %v147, 4294901760
    %v3219 = vsub.f32 %v147, %v3218
    %3220 = vmatpush1.msra.mxu0 %v3219
    %3221 = vmatprep.subr.mxu0 0.0
    %v3222 = vand.u32 %v148, 4294901760
    %v3223 = vsub.f32 %v148, %v3222
    %3224 = vmatpush1.msra.mxu0 %v3223
    %3225 = vmatprep.subr.mxu0 0.0
    %v3226 = vand.u32 %v149, 4294901760
    %v3227 = vsub.f32 %v149, %v3226
    %3228 = vmatpush1.msra.mxu0 %v3227
    %3229 = vmatprep.subr.mxu0 0.0
    %v3230 = vand.u32 %v150, 4294901760
    %v3231 = vsub.f32 %v150, %v3230
    %3232 = vmatpush1.msra.mxu0 %v3231
    %3233 = vmatprep.subr.mxu0 0.0
    %v3234 = vand.u32 %v151, 4294901760
    %v3235 = vsub.f32 %v151, %v3234
    %3236 = vmatpush1.msra.mxu0 %v3235
    %3237 = vmatprep.subr.mxu0 0.0
    %v3238 = vand.u32 %v152, 4294901760
    %v3239 = vsub.f32 %v152, %v3238
    %3240 = vmatpush1.msra.mxu0 %v3239
    %3241 = vmatprep.subr.mxu0 0.0
    %v3242 = vand.u32 %v153, 4294901760
    %v3243 = vsub.f32 %v153, %v3242
    %3244 = vmatpush1.msra.mxu0 %v3243
    %3245 = vmatprep.subr.mxu0 0.0
    %v3246 = vand.u32 %v154, 4294901760
    %v3247 = vsub.f32 %v154, %v3246
    %3248 = vmatpush1.msra.mxu0 %v3247
    %3249 = vmatprep.subr.mxu0 0.0
    %v3250 = vand.u32 %v155, 4294901760
    %v3251 = vsub.f32 %v155, %v3250
    %3252 = vmatpush1.msra.mxu0 %v3251
    %3253 = vmatprep.subr.mxu0 0.0
    %v3254 = vand.u32 %v156, 4294901760
    %v3255 = vsub.f32 %v156, %v3254
    %3256 = vmatpush1.msra.mxu0 %v3255
    %3257 = vmatprep.subr.mxu0 0.0
    %v3258 = vand.u32 %v157, 4294901760
    %v3259 = vsub.f32 %v157, %v3258
    %3260 = vmatpush1.msra.mxu0 %v3259
    %3261 = vmatprep.subr.mxu0 0.0
    %v3262 = vand.u32 %v158, 4294901760
    %v3263 = vsub.f32 %v158, %v3262
    %3264 = vmatpush1.msra.mxu0 %v3263
    %3265 = vmatprep.subr.mxu0 0.0
    %v3266 = vand.u32 %v159, 4294901760
    %v3267 = vsub.f32 %v159, %v3266
    %3268 = vmatpush1.msra.mxu0 %v3267
    %v3269 = vand.u32 %v28, 4294901760
    %v3270 = vsub.f32 %v28, %v3269
    %3271 = vmatprep.mubr.f32.mxu0 %v3270
    %v3272 = vand.u32 %v27, 4294901760
    %v3273 = vsub.f32 %v27, %v3272
    %3274 = vmatmul.mubr.f32.gmra.mrb[0].mxu0 %v3273
    %v3275 = vpop.f32.mrb[0].mxu0
    %v3276 = vadd.f32 %v3138, %v3275
    %v3277 = vpop.f32.mrb[0].mxu0
    %3278 = vdwg.mxu0
    %3279 = vmatprep.subr.mxu0 0.0
    %v3280 = vand.u32 %v128, 4294901760
    %3281 = vmatpush1.msra.mxu0 %v3280
    %3282 = vmatprep.subr.mxu0 0.0
    %v3283 = vand.u32 %v129, 4294901760
    %3284 = vmatpush1.msra.mxu0 %v3283
    %3285 = vmatprep.subr.mxu0 0.0
    %v3286 = vand.u32 %v130, 4294901760
    %3287 = vmatpush1.msra.mxu0 %v3286
    %3288 = vmatprep.subr.mxu0 0.0
    %v3289 = vand.u32 %v131, 4294901760
    %3290 = vmatpush1.msra.mxu0 %v3289
    %3291 = vmatprep.subr.mxu0 0.0
    %v3292 = vand.u32 %v132, 4294901760
    %3293 = vmatpush1.msra.mxu0 %v3292
    %3294 = vmatprep.subr.mxu0 0.0
    %v3295 = vand.u32 %v133, 4294901760
    %3296 = vmatpush1.msra.mxu0 %v3295
    %3297 = vmatprep.subr.mxu0 0.0
    %v3298 = vand.u32 %v134, 4294901760
    %3299 = vmatpush1.msra.mxu0 %v3298
    %3300 = vmatprep.subr.mxu0 0.0
    %v3301 = vand.u32 %v135, 4294901760
    %3302 = vmatpush1.msra.mxu0 %v3301
    %3303 = vmatprep.subr.mxu0 0.0
    %v3304 = vand.u32 %v136, 4294901760
    %3305 = vmatpush1.msra.mxu0 %v3304
    %3306 = vmatprep.subr.mxu0 0.0
    %v3307 = vand.u32 %v137, 4294901760
    %3308 = vmatpush1.msra.mxu0 %v3307
    %3309 = vmatprep.subr.mxu0 0.0
    %v3310 = vand.u32 %v138, 4294901760
    %3311 = vmatpush1.msra.mxu0 %v3310
    %3312 = vmatprep.subr.mxu0 0.0
    %v3313 = vand.u32 %v139, 4294901760
    %3314 = vmatpush1.msra.mxu0 %v3313
    %3315 = vmatprep.subr.mxu0 0.0
    %v3316 = vand.u32 %v140, 4294901760
    %3317 = vmatpush1.msra.mxu0 %v3316
    %3318 = vmatprep.subr.mxu0 0.0
    %v3319 = vand.u32 %v141, 4294901760
    %3320 = vmatpush1.msra.mxu0 %v3319
    %3321 = vmatprep.subr.mxu0 0.0
    %v3322 = vand.u32 %v142, 4294901760
    %3323 = vmatpush1.msra.mxu0 %v3322
    %3324 = vmatprep.subr.mxu0 0.0
    %v3325 = vand.u32 %v143, 4294901760
    %3326 = vmatpush1.msra.mxu0 %v3325
    %3327 = vmatprep.subr.mxu0 0.0
    %v3328 = vand.u32 %v144, 4294901760
    %3329 = vmatpush1.msra.mxu0 %v3328
    %3330 = vmatprep.subr.mxu0 0.0
    %v3331 = vand.u32 %v145, 4294901760
    %3332 = vmatpush1.msra.mxu0 %v3331
    %3333 = vmatprep.subr.mxu0 0.0
    %v3334 = vand.u32 %v146, 4294901760
    %3335 = vmatpush1.msra.mxu0 %v3334
    %3336 = vmatprep.subr.mxu0 0.0
    %v3337 = vand.u32 %v147, 4294901760
    %3338 = vmatpush1.msra.mxu0 %v3337
    %3339 = vmatprep.subr.mxu0 0.0
    %v3340 = vand.u32 %v148, 4294901760
    %3341 = vmatpush1.msra.mxu0 %v3340
    %3342 = vmatprep.subr.mxu0 0.0
    %v3343 = vand.u32 %v149, 4294901760
    %3344 = vmatpush1.msra.mxu0 %v3343
    %3345 = vmatprep.subr.mxu0 0.0
    %v3346 = vand.u32 %v150, 4294901760
    %3347 = vmatpush1.msra.mxu0 %v3346
    %3348 = vmatprep.subr.mxu0 0.0
    %v3349 = vand.u32 %v151, 4294901760
    %3350 = vmatpush1.msra.mxu0 %v3349
    %3351 = vmatprep.subr.mxu0 0.0
    %v3352 = vand.u32 %v152, 4294901760
    %3353 = vmatpush1.msra.mxu0 %v3352
    %3354 = vmatprep.subr.mxu0 0.0
    %v3355 = vand.u32 %v153, 4294901760
    %3356 = vmatpush1.msra.mxu0 %v3355
    %3357 = vmatprep.subr.mxu0 0.0
    %v3358 = vand.u32 %v154, 4294901760
    %3359 = vmatpush1.msra.mxu0 %v3358
    %3360 = vmatprep.subr.mxu0 0.0
    %v3361 = vand.u32 %v155, 4294901760
    %3362 = vmatpush1.msra.mxu0 %v3361
    %3363 = vmatprep.subr.mxu0 0.0
    %v3364 = vand.u32 %v156, 4294901760
    %3365 = vmatpush1.msra.mxu0 %v3364
    %3366 = vmatprep.subr.mxu0 0.0
    %v3367 = vand.u32 %v157, 4294901760
    %3368 = vmatpush1.msra.mxu0 %v3367
    %3369 = vmatprep.subr.mxu0 0.0
    %v3370 = vand.u32 %v158, 4294901760
    %3371 = vmatpush1.msra.mxu0 %v3370
    %3372 = vmatprep.subr.mxu0 0.0
    %v3373 = vand.u32 %v159, 4294901760
    %3374 = vmatpush1.msra.mxu0 %v3373
    %v3375 = vand.u32 %v28, 4294901760
    %v3376 = vsub.f32 %v28, %v3375
    %v3377 = vand.u32 %v3376, 4294901760
    %3378 = vmatprep.mubr.f32.mxu0 %v3377
    %v3379 = vand.u32 %v27, 4294901760
    %v3380 = vsub.f32 %v27, %v3379
    %v3381 = vand.u32 %v3380, 4294901760
    %3382 = vmatmul.mubr.f32.gmra.mrb[0].mxu0 %v3381
    %v3383 = vpop.f32.mrb[0].mxu0
    %v3384 = vadd.f32 %v3276, %v3383
    %v3385 = vpop.f32.mrb[0].mxu0
    %3386 = vdwg.mxu0
    %3387 = vmatprep.subr.mxu0 0.0
    %v3388 = vand.u32 %v128, 4294901760
    %v3389 = vsub.f32 %v128, %v3388
    %v3390 = vand.u32 %v3389, 4294901760
    %3391 = vmatpush1.msra.mxu0 %v3390
    %3392 = vmatprep.subr.mxu0 0.0
    %v3393 = vand.u32 %v129, 4294901760
    %v3394 = vsub.f32 %v129, %v3393
    %v3395 = vand.u32 %v3394, 4294901760
    %3396 = vmatpush1.msra.mxu0 %v3395
    %3397 = vmatprep.subr.mxu0 0.0
    %v3398 = vand.u32 %v130, 4294901760
    %v3399 = vsub.f32 %v130, %v3398
    %v3400 = vand.u32 %v3399, 4294901760
    %3401 = vmatpush1.msra.mxu0 %v3400
    %3402 = vmatprep.subr.mxu0 0.0
    %v3403 = vand.u32 %v131, 4294901760
    %v3404 = vsub.f32 %v131, %v3403
    %v3405 = vand.u32 %v3404, 4294901760
    %3406 = vmatpush1.msra.mxu0 %v3405
    %3407 = vmatprep.subr.mxu0 0.0
    %v3408 = vand.u32 %v132, 4294901760
    %v3409 = vsub.f32 %v132, %v3408
    %v3410 = vand.u32 %v3409, 4294901760
    %3411 = vmatpush1.msra.mxu0 %v3410
    %3412 = vmatprep.subr.mxu0 0.0
    %v3413 = vand.u32 %v133, 4294901760
    %v3414 = vsub.f32 %v133, %v3413
    %v3415 = vand.u32 %v3414, 4294901760
    %3416 = vmatpush1.msra.mxu0 %v3415
    %3417 = vmatprep.subr.mxu0 0.0
    %v3418 = vand.u32 %v134, 4294901760
    %v3419 = vsub.f32 %v134, %v3418
    %v3420 = vand.u32 %v3419, 4294901760
    %3421 = vmatpush1.msra.mxu0 %v3420
    %3422 = vmatprep.subr.mxu0 0.0
    %v3423 = vand.u32 %v135, 4294901760
    %v3424 = vsub.f32 %v135, %v3423
    %v3425 = vand.u32 %v3424, 4294901760
    %3426 = vmatpush1.msra.mxu0 %v3425
    %3427 = vmatprep.subr.mxu0 0.0
    %v3428 = vand.u32 %v136, 4294901760
    %v3429 = vsub.f32 %v136, %v3428
    %v3430 = vand.u32 %v3429, 4294901760
    %3431 = vmatpush1.msra.mxu0 %v3430
    %3432 = vmatprep.subr.mxu0 0.0
    %v3433 = vand.u32 %v137, 4294901760
    %v3434 = vsub.f32 %v137, %v3433
    %v3435 = vand.u32 %v3434, 4294901760
    %3436 = vmatpush1.msra.mxu0 %v3435
    %3437 = vmatprep.subr.mxu0 0.0
    %v3438 = vand.u32 %v138, 4294901760
    %v3439 = vsub.f32 %v138, %v3438
    %v3440 = vand.u32 %v3439, 4294901760
    %3441 = vmatpush1.msra.mxu0 %v3440
    %3442 = vmatprep.subr.mxu0 0.0
    %v3443 = vand.u32 %v139, 4294901760
    %v3444 = vsub.f32 %v139, %v3443
    %v3445 = vand.u32 %v3444, 4294901760
    %3446 = vmatpush1.msra.mxu0 %v3445
    %3447 = vmatprep.subr.mxu0 0.0
    %v3448 = vand.u32 %v140, 4294901760
    %v3449 = vsub.f32 %v140, %v3448
    %v3450 = vand.u32 %v3449, 4294901760
    %3451 = vmatpush1.msra.mxu0 %v3450
    %3452 = vmatprep.subr.mxu0 0.0
    %v3453 = vand.u32 %v141, 4294901760
    %v3454 = vsub.f32 %v141, %v3453
    %v3455 = vand.u32 %v3454, 4294901760
    %3456 = vmatpush1.msra.mxu0 %v3455
    %3457 = vmatprep.subr.mxu0 0.0
    %v3458 = vand.u32 %v142, 4294901760
    %v3459 = vsub.f32 %v142, %v3458
    %v3460 = vand.u32 %v3459, 4294901760
    %3461 = vmatpush1.msra.mxu0 %v3460
    %3462 = vmatprep.subr.mxu0 0.0
    %v3463 = vand.u32 %v143, 4294901760
    %v3464 = vsub.f32 %v143, %v3463
    %v3465 = vand.u32 %v3464, 4294901760
    %3466 = vmatpush1.msra.mxu0 %v3465
    %3467 = vmatprep.subr.mxu0 0.0
    %v3468 = vand.u32 %v144, 4294901760
    %v3469 = vsub.f32 %v144, %v3468
    %v3470 = vand.u32 %v3469, 4294901760
    %3471 = vmatpush1.msra.mxu0 %v3470
    %3472 = vmatprep.subr.mxu0 0.0
    %v3473 = vand.u32 %v145, 4294901760
    %v3474 = vsub.f32 %v145, %v3473
    %v3475 = vand.u32 %v3474, 4294901760
    %3476 = vmatpush1.msra.mxu0 %v3475
    %3477 = vmatprep.subr.mxu0 0.0
    %v3478 = vand.u32 %v146, 4294901760
    %v3479 = vsub.f32 %v146, %v3478
    %v3480 = vand.u32 %v3479, 4294901760
    %3481 = vmatpush1.msra.mxu0 %v3480
    %3482 = vmatprep.subr.mxu0 0.0
    %v3483 = vand.u32 %v147, 4294901760
    %v3484 = vsub.f32 %v147, %v3483
    %v3485 = vand.u32 %v3484, 4294901760
    %3486 = vmatpush1.msra.mxu0 %v3485
    %3487 = vmatprep.subr.mxu0 0.0
    %v3488 = vand.u32 %v148, 4294901760
    %v3489 = vsub.f32 %v148, %v3488
    %v3490 = vand.u32 %v3489, 4294901760
    %3491 = vmatpush1.msra.mxu0 %v3490
    %3492 = vmatprep.subr.mxu0 0.0
    %v3493 = vand.u32 %v149, 4294901760
    %v3494 = vsub.f32 %v149, %v3493
    %v3495 = vand.u32 %v3494, 4294901760
    %3496 = vmatpush1.msra.mxu0 %v3495
    %3497 = vmatprep.subr.mxu0 0.0
    %v3498 = vand.u32 %v150, 4294901760
    %v3499 = vsub.f32 %v150, %v3498
    %v3500 = vand.u32 %v3499, 4294901760
    %3501 = vmatpush1.msra.mxu0 %v3500
    %3502 = vmatprep.subr.mxu0 0.0
    %v3503 = vand.u32 %v151, 4294901760
    %v3504 = vsub.f32 %v151, %v3503
    %v3505 = vand.u32 %v3504, 4294901760
    %3506 = vmatpush1.msra.mxu0 %v3505
    %3507 = vmatprep.subr.mxu0 0.0
    %v3508 = vand.u32 %v152, 4294901760
    %v3509 = vsub.f32 %v152, %v3508
    %v3510 = vand.u32 %v3509, 4294901760
    %3511 = vmatpush1.msra.mxu0 %v3510
    %3512 = vmatprep.subr.mxu0 0.0
    %v3513 = vand.u32 %v153, 4294901760
    %v3514 = vsub.f32 %v153, %v3513
    %v3515 = vand.u32 %v3514, 4294901760
    %3516 = vmatpush1.msra.mxu0 %v3515
    %3517 = vmatprep.subr.mxu0 0.0
    %v3518 = vand.u32 %v154, 4294901760
    %v3519 = vsub.f32 %v154, %v3518
    %v3520 = vand.u32 %v3519, 4294901760
    %3521 = vmatpush1.msra.mxu0 %v3520
    %3522 = vmatprep.subr.mxu0 0.0
    %v3523 = vand.u32 %v155, 4294901760
    %v3524 = vsub.f32 %v155, %v3523
    %v3525 = vand.u32 %v3524, 4294901760
    %3526 = vmatpush1.msra.mxu0 %v3525
    %3527 = vmatprep.subr.mxu0 0.0
    %v3528 = vand.u32 %v156, 4294901760
    %v3529 = vsub.f32 %v156, %v3528
    %v3530 = vand.u32 %v3529, 4294901760
    %3531 = vmatpush1.msra.mxu0 %v3530
    %3532 = vmatprep.subr.mxu0 0.0
    %v3533 = vand.u32 %v157, 4294901760
    %v3534 = vsub.f32 %v157, %v3533
    %v3535 = vand.u32 %v3534, 4294901760
    %3536 = vmatpush1.msra.mxu0 %v3535
    %3537 = vmatprep.subr.mxu0 0.0
    %v3538 = vand.u32 %v158, 4294901760
    %v3539 = vsub.f32 %v158, %v3538
    %v3540 = vand.u32 %v3539, 4294901760
    %3541 = vmatpush1.msra.mxu0 %v3540
    %3542 = vmatprep.subr.mxu0 0.0
    %v3543 = vand.u32 %v159, 4294901760
    %v3544 = vsub.f32 %v159, %v3543
    %v3545 = vand.u32 %v3544, 4294901760
    %3546 = vmatpush1.msra.mxu0 %v3545
    %v3547 = vand.u32 %v28, 4294901760
    %3548 = vmatprep.mubr.f32.mxu0 %v3547
    %v3549 = vand.u32 %v27, 4294901760
    %3550 = vmatmul.mubr.f32.gmra.mrb[0].mxu0 %v3549
    %v3551 = vpop.f32.mrb[0].mxu0
    %v3552 = vadd.f32 %v3384, %v3551
    %v3553 = vpop.f32.mrb[0].mxu0
    %3554 = vdwg.mxu0
    %3555 = vmatprep.subr.mxu0 0.0
    %v3556 = vand.u32 %v128, 4294901760
    %3557 = vmatpush1.msra.mxu0 %v3556
    %3558 = vmatprep.subr.mxu0 0.0
    %v3559 = vand.u32 %v129, 4294901760
    %3560 = vmatpush1.msra.mxu0 %v3559
    %3561 = vmatprep.subr.mxu0 0.0
    %v3562 = vand.u32 %v130, 4294901760
    %3563 = vmatpush1.msra.mxu0 %v3562
    %3564 = vmatprep.subr.mxu0 0.0
    %v3565 = vand.u32 %v131, 4294901760
    %3566 = vmatpush1.msra.mxu0 %v3565
    %3567 = vmatprep.subr.mxu0 0.0
    %v3568 = vand.u32 %v132, 4294901760
    %3569 = vmatpush1.msra.mxu0 %v3568
    %3570 = vmatprep.subr.mxu0 0.0
    %v3571 = vand.u32 %v133, 4294901760
    %3572 = vmatpush1.msra.mxu0 %v3571
    %3573 = vmatprep.subr.mxu0 0.0
    %v3574 = vand.u32 %v134, 4294901760
    %3575 = vmatpush1.msra.mxu0 %v3574
    %3576 = vmatprep.subr.mxu0 0.0
    %v3577 = vand.u32 %v135, 4294901760
    %3578 = vmatpush1.msra.mxu0 %v3577
    %3579 = vmatprep.subr.mxu0 0.0
    %v3580 = vand.u32 %v136, 4294901760
    %3581 = vmatpush1.msra.mxu0 %v3580
    %3582 = vmatprep.subr.mxu0 0.0
    %v3583 = vand.u32 %v137, 4294901760
    %3584 = vmatpush1.msra.mxu0 %v3583
    %3585 = vmatprep.subr.mxu0 0.0
    %v3586 = vand.u32 %v138, 4294901760
    %3587 = vmatpush1.msra.mxu0 %v3586
    %3588 = vmatprep.subr.mxu0 0.0
    %v3589 = vand.u32 %v139, 4294901760
    %3590 = vmatpush1.msra.mxu0 %v3589
    %3591 = vmatprep.subr.mxu0 0.0
    %v3592 = vand.u32 %v140, 4294901760
    %3593 = vmatpush1.msra.mxu0 %v3592
    %3594 = vmatprep.subr.mxu0 0.0
    %v3595 = vand.u32 %v141, 4294901760
    %3596 = vmatpush1.msra.mxu0 %v3595
    %3597 = vmatprep.subr.mxu0 0.0
    %v3598 = vand.u32 %v142, 4294901760
    %3599 = vmatpush1.msra.mxu0 %v3598
    %3600 = vmatprep.subr.mxu0 0.0
    %v3601 = vand.u32 %v143, 4294901760
    %3602 = vmatpush1.msra.mxu0 %v3601
    %3603 = vmatprep.subr.mxu0 0.0
    %v3604 = vand.u32 %v144, 4294901760
    %3605 = vmatpush1.msra.mxu0 %v3604
    %3606 = vmatprep.subr.mxu0 0.0
    %v3607 = vand.u32 %v145, 4294901760
    %3608 = vmatpush1.msra.mxu0 %v3607
    %3609 = vmatprep.subr.mxu0 0.0
    %v3610 = vand.u32 %v146, 4294901760
    %3611 = vmatpush1.msra.mxu0 %v3610
    %3612 = vmatprep.subr.mxu0 0.0
    %v3613 = vand.u32 %v147, 4294901760
    %3614 = vmatpush1.msra.mxu0 %v3613
    %3615 = vmatprep.subr.mxu0 0.0
    %v3616 = vand.u32 %v148, 4294901760
    %3617 = vmatpush1.msra.mxu0 %v3616
    %3618 = vmatprep.subr.mxu0 0.0
    %v3619 = vand.u32 %v149, 4294901760
    %3620 = vmatpush1.msra.mxu0 %v3619
    %3621 = vmatprep.subr.mxu0 0.0
    %v3622 = vand.u32 %v150, 4294901760
    %3623 = vmatpush1.msra.mxu0 %v3622
    %3624 = vmatprep.subr.mxu0 0.0
    %v3625 = vand.u32 %v151, 4294901760
    %3626 = vmatpush1.msra.mxu0 %v3625
    %3627 = vmatprep.subr.mxu0 0.0
    %v3628 = vand.u32 %v152, 4294901760
    %3629 = vmatpush1.msra.mxu0 %v3628
    %3630 = vmatprep.subr.mxu0 0.0
    %v3631 = vand.u32 %v153, 4294901760
    %3632 = vmatpush1.msra.mxu0 %v3631
    %3633 = vmatprep.subr.mxu0 0.0
    %v3634 = vand.u32 %v154, 4294901760
    %3635 = vmatpush1.msra.mxu0 %v3634
    %3636 = vmatprep.subr.mxu0 0.0
    %v3637 = vand.u32 %v155, 4294901760
    %3638 = vmatpush1.msra.mxu0 %v3637
    %3639 = vmatprep.subr.mxu0 0.0
    %v3640 = vand.u32 %v156, 4294901760
    %3641 = vmatpush1.msra.mxu0 %v3640
    %3642 = vmatprep.subr.mxu0 0.0
    %v3643 = vand.u32 %v157, 4294901760
    %3644 = vmatpush1.msra.mxu0 %v3643
    %3645 = vmatprep.subr.mxu0 0.0
    %v3646 = vand.u32 %v158, 4294901760
    %3647 = vmatpush1.msra.mxu0 %v3646
    %3648 = vmatprep.subr.mxu0 0.0
    %v3649 = vand.u32 %v159, 4294901760
    %3650 = vmatpush1.msra.mxu0 %v3649
    %v3651 = vand.u32 %v28, 4294901760
    %3652 = vmatprep.mubr.f32.mxu0 %v3651
    %v3653 = vand.u32 %v27, 4294901760
    %3654 = vmatmul.mubr.f32.gmra.mrb[0].mxu0 %v3653
    %v3655 = vpop.f32.mrb[0].mxu0
    %v3656 = vadd.f32 %v3552, %v3655
    %v3657 = vpop.f32.mrb[0].mxu0
    %3658 = vdwg.mxu0
    %3659 = vmatprep.subr.mxu0 0.0
    %v3660 = vand.u32 %v160, 4294901760
    %3661 = vmatpush1.msra.mxu0 %v3660
    %3662 = vmatprep.subr.mxu0 0.0
    %v3663 = vand.u32 %v161, 4294901760
    %3664 = vmatpush1.msra.mxu0 %v3663
    %3665 = vmatprep.subr.mxu0 0.0
    %v3666 = vand.u32 %v162, 4294901760
    %3667 = vmatpush1.msra.mxu0 %v3666
    %3668 = vmatprep.subr.mxu0 0.0
    %v3669 = vand.u32 %v163, 4294901760
    %3670 = vmatpush1.msra.mxu0 %v3669
    %3671 = vmatprep.subr.mxu0 0.0
    %v3672 = vand.u32 %v164, 4294901760
    %3673 = vmatpush1.msra.mxu0 %v3672
    %3674 = vmatprep.subr.mxu0 0.0
    %v3675 = vand.u32 %v165, 4294901760
    %3676 = vmatpush1.msra.mxu0 %v3675
    %3677 = vmatprep.subr.mxu0 0.0
    %v3678 = vand.u32 %v166, 4294901760
    %3679 = vmatpush1.msra.mxu0 %v3678
    %3680 = vmatprep.subr.mxu0 0.0
    %v3681 = vand.u32 %v167, 4294901760
    %3682 = vmatpush1.msra.mxu0 %v3681
    %3683 = vmatprep.subr.mxu0 0.0
    %v3684 = vand.u32 %v168, 4294901760
    %3685 = vmatpush1.msra.mxu0 %v3684
    %3686 = vmatprep.subr.mxu0 0.0
    %v3687 = vand.u32 %v169, 4294901760
    %3688 = vmatpush1.msra.mxu0 %v3687
    %3689 = vmatprep.subr.mxu0 0.0
    %v3690 = vand.u32 %v170, 4294901760
    %3691 = vmatpush1.msra.mxu0 %v3690
    %3692 = vmatprep.subr.mxu0 0.0
    %v3693 = vand.u32 %v171, 4294901760
    %3694 = vmatpush1.msra.mxu0 %v3693
    %3695 = vmatprep.subr.mxu0 0.0
    %v3696 = vand.u32 %v172, 4294901760
    %3697 = vmatpush1.msra.mxu0 %v3696
    %3698 = vmatprep.subr.mxu0 0.0
    %v3699 = vand.u32 %v173, 4294901760
    %3700 = vmatpush1.msra.mxu0 %v3699
    %3701 = vmatprep.subr.mxu0 0.0
    %v3702 = vand.u32 %v174, 4294901760
    %3703 = vmatpush1.msra.mxu0 %v3702
    %3704 = vmatprep.subr.mxu0 0.0
    %v3705 = vand.u32 %v175, 4294901760
    %3706 = vmatpush1.msra.mxu0 %v3705
    %3707 = vmatprep.subr.mxu0 0.0
    %v3708 = vand.u32 %v176, 4294901760
    %3709 = vmatpush1.msra.mxu0 %v3708
    %3710 = vmatprep.subr.mxu0 0.0
    %v3711 = vand.u32 %v177, 4294901760
    %3712 = vmatpush1.msra.mxu0 %v3711
    %3713 = vmatprep.subr.mxu0 0.0
    %v3714 = vand.u32 %v178, 4294901760
    %3715 = vmatpush1.msra.mxu0 %v3714
    %3716 = vmatprep.subr.mxu0 0.0
    %v3717 = vand.u32 %v179, 4294901760
    %3718 = vmatpush1.msra.mxu0 %v3717
    %3719 = vmatprep.subr.mxu0 0.0
    %v3720 = vand.u32 %v180, 4294901760
    %3721 = vmatpush1.msra.mxu0 %v3720
    %3722 = vmatprep.subr.mxu0 0.0
    %v3723 = vand.u32 %v181, 4294901760
    %3724 = vmatpush1.msra.mxu0 %v3723
    %3725 = vmatprep.subr.mxu0 0.0
    %v3726 = vand.u32 %v182, 4294901760
    %3727 = vmatpush1.msra.mxu0 %v3726
    %3728 = vmatprep.subr.mxu0 0.0
    %v3729 = vand.u32 %v183, 4294901760
    %3730 = vmatpush1.msra.mxu0 %v3729
    %3731 = vmatprep.subr.mxu0 0.0
    %v3732 = vand.u32 %v184, 4294901760
    %3733 = vmatpush1.msra.mxu0 %v3732
    %3734 = vmatprep.subr.mxu0 0.0
    %v3735 = vand.u32 %v185, 4294901760
    %3736 = vmatpush1.msra.mxu0 %v3735
    %3737 = vmatprep.subr.mxu0 0.0
    %v3738 = vand.u32 %v186, 4294901760
    %3739 = vmatpush1.msra.mxu0 %v3738
    %3740 = vmatprep.subr.mxu0 0.0
    %v3741 = vand.u32 %v187, 4294901760
    %3742 = vmatpush1.msra.mxu0 %v3741
    %3743 = vmatprep.subr.mxu0 0.0
    %v3744 = vand.u32 %v188, 4294901760
    %3745 = vmatpush1.msra.mxu0 %v3744
    %3746 = vmatprep.subr.mxu0 0.0
    %v3747 = vand.u32 %v189, 4294901760
    %3748 = vmatpush1.msra.mxu0 %v3747
    %3749 = vmatprep.subr.mxu0 0.0
    %v3750 = vand.u32 %v190, 4294901760
    %3751 = vmatpush1.msra.mxu0 %v3750
    %3752 = vmatprep.subr.mxu0 0.0
    %v3753 = vand.u32 %v191, 4294901760
    %3754 = vmatpush1.msra.mxu0 %v3753
    %v3755 = vand.u32 %v30, 4294901760
    %v3756 = vsub.f32 %v30, %v3755
    %v3757 = vand.u32 %v3756, 4294901760
    %v3758 = vsub.f32 %v3756, %v3757
    %v3759 = vand.u32 %v3758, 4294901760
    %3760 = vmatprep.mubr.f32.mxu0 %v3759
    %v3761 = vand.u32 %v29, 4294901760
    %v3762 = vsub.f32 %v29, %v3761
    %v3763 = vand.u32 %v3762, 4294901760
    %v3764 = vsub.f32 %v3762, %v3763
    %v3765 = vand.u32 %v3764, 4294901760
    %3766 = vmatmul.mubr.f32.gmra.mrb[0].mxu0 %v3765
    %v3767 = vpop.f32.mrb[0].mxu0
    %v3768 = vadd.f32 %v3656, %v3767
    %v3769 = vpop.f32.mrb[0].mxu0
    %3770 = vdwg.mxu0
    %3771 = vmatprep.subr.mxu0 0.0
    %v3772 = vand.u32 %v160, 4294901760
    %v3773 = vsub.f32 %v160, %v3772
    %v3774 = vand.u32 %v3773, 4294901760
    %v3775 = vsub.f32 %v3773, %v3774
    %v3776 = vand.u32 %v3775, 4294901760
    %3777 = vmatpush1.msra.mxu0 %v3776
    %3778 = vmatprep.subr.mxu0 0.0
    %v3779 = vand.u32 %v161, 4294901760
    %v3780 = vsub.f32 %v161, %v3779
    %v3781 = vand.u32 %v3780, 4294901760
    %v3782 = vsub.f32 %v3780, %v3781
    %v3783 = vand.u32 %v3782, 4294901760
    %3784 = vmatpush1.msra.mxu0 %v3783
    %3785 = vmatprep.subr.mxu0 0.0
    %v3786 = vand.u32 %v162, 4294901760
    %v3787 = vsub.f32 %v162, %v3786
    %v3788 = vand.u32 %v3787, 4294901760
    %v3789 = vsub.f32 %v3787, %v3788
    %v3790 = vand.u32 %v3789, 4294901760
    %3791 = vmatpush1.msra.mxu0 %v3790
    %3792 = vmatprep.subr.mxu0 0.0
    %v3793 = vand.u32 %v163, 4294901760
    %v3794 = vsub.f32 %v163, %v3793
    %v3795 = vand.u32 %v3794, 4294901760
    %v3796 = vsub.f32 %v3794, %v3795
    %v3797 = vand.u32 %v3796, 4294901760
    %3798 = vmatpush1.msra.mxu0 %v3797
    %3799 = vmatprep.subr.mxu0 0.0
    %v3800 = vand.u32 %v164, 4294901760
    %v3801 = vsub.f32 %v164, %v3800
    %v3802 = vand.u32 %v3801, 4294901760
    %v3803 = vsub.f32 %v3801, %v3802
    %v3804 = vand.u32 %v3803, 4294901760
    %3805 = vmatpush1.msra.mxu0 %v3804
    %3806 = vmatprep.subr.mxu0 0.0
    %v3807 = vand.u32 %v165, 4294901760
    %v3808 = vsub.f32 %v165, %v3807
    %v3809 = vand.u32 %v3808, 4294901760
    %v3810 = vsub.f32 %v3808, %v3809
    %v3811 = vand.u32 %v3810, 4294901760
    %3812 = vmatpush1.msra.mxu0 %v3811
    %3813 = vmatprep.subr.mxu0 0.0
    %v3814 = vand.u32 %v166, 4294901760
    %v3815 = vsub.f32 %v166, %v3814
    %v3816 = vand.u32 %v3815, 4294901760
    %v3817 = vsub.f32 %v3815, %v3816
    %v3818 = vand.u32 %v3817, 4294901760
    %3819 = vmatpush1.msra.mxu0 %v3818
    %3820 = vmatprep.subr.mxu0 0.0
    %v3821 = vand.u32 %v167, 4294901760
    %v3822 = vsub.f32 %v167, %v3821
    %v3823 = vand.u32 %v3822, 4294901760
    %v3824 = vsub.f32 %v3822, %v3823
    %v3825 = vand.u32 %v3824, 4294901760
    %3826 = vmatpush1.msra.mxu0 %v3825
    %3827 = vmatprep.subr.mxu0 0.0
    %v3828 = vand.u32 %v168, 4294901760
    %v3829 = vsub.f32 %v168, %v3828
    %v3830 = vand.u32 %v3829, 4294901760
    %v3831 = vsub.f32 %v3829, %v3830
    %v3832 = vand.u32 %v3831, 4294901760
    %3833 = vmatpush1.msra.mxu0 %v3832
    %3834 = vmatprep.subr.mxu0 0.0
    %v3835 = vand.u32 %v169, 4294901760
    %v3836 = vsub.f32 %v169, %v3835
    %v3837 = vand.u32 %v3836, 4294901760
    %v3838 = vsub.f32 %v3836, %v3837
    %v3839 = vand.u32 %v3838, 4294901760
    %3840 = vmatpush1.msra.mxu0 %v3839
    %3841 = vmatprep.subr.mxu0 0.0
    %v3842 = vand.u32 %v170, 4294901760
    %v3843 = vsub.f32 %v170, %v3842
    %v3844 = vand.u32 %v3843, 4294901760
    %v3845 = vsub.f32 %v3843, %v3844
    %v3846 = vand.u32 %v3845, 4294901760
    %3847 = vmatpush1.msra.mxu0 %v3846
    %3848 = vmatprep.subr.mxu0 0.0
    %v3849 = vand.u32 %v171, 4294901760
    %v3850 = vsub.f32 %v171, %v3849
    %v3851 = vand.u32 %v3850, 4294901760
    %v3852 = vsub.f32 %v3850, %v3851
    %v3853 = vand.u32 %v3852, 4294901760
    %3854 = vmatpush1.msra.mxu0 %v3853
    %3855 = vmatprep.subr.mxu0 0.0
    %v3856 = vand.u32 %v172, 4294901760
    %v3857 = vsub.f32 %v172, %v3856
    %v3858 = vand.u32 %v3857, 4294901760
    %v3859 = vsub.f32 %v3857, %v3858
    %v3860 = vand.u32 %v3859, 4294901760
    %3861 = vmatpush1.msra.mxu0 %v3860
    %3862 = vmatprep.subr.mxu0 0.0
    %v3863 = vand.u32 %v173, 4294901760
    %v3864 = vsub.f32 %v173, %v3863
    %v3865 = vand.u32 %v3864, 4294901760
    %v3866 = vsub.f32 %v3864, %v3865
    %v3867 = vand.u32 %v3866, 4294901760
    %3868 = vmatpush1.msra.mxu0 %v3867
    %3869 = vmatprep.subr.mxu0 0.0
    %v3870 = vand.u32 %v174, 4294901760
    %v3871 = vsub.f32 %v174, %v3870
    %v3872 = vand.u32 %v3871, 4294901760
    %v3873 = vsub.f32 %v3871, %v3872
    %v3874 = vand.u32 %v3873, 4294901760
    %3875 = vmatpush1.msra.mxu0 %v3874
    %3876 = vmatprep.subr.mxu0 0.0
    %v3877 = vand.u32 %v175, 4294901760
    %v3878 = vsub.f32 %v175, %v3877
    %v3879 = vand.u32 %v3878, 4294901760
    %v3880 = vsub.f32 %v3878, %v3879
    %v3881 = vand.u32 %v3880, 4294901760
    %3882 = vmatpush1.msra.mxu0 %v3881
    %3883 = vmatprep.subr.mxu0 0.0
    %v3884 = vand.u32 %v176, 4294901760
    %v3885 = vsub.f32 %v176, %v3884
    %v3886 = vand.u32 %v3885, 4294901760
    %v3887 = vsub.f32 %v3885, %v3886
    %v3888 = vand.u32 %v3887, 4294901760
    %3889 = vmatpush1.msra.mxu0 %v3888
    %3890 = vmatprep.subr.mxu0 0.0
    %v3891 = vand.u32 %v177, 4294901760
    %v3892 = vsub.f32 %v177, %v3891
    %v3893 = vand.u32 %v3892, 4294901760
    %v3894 = vsub.f32 %v3892, %v3893
    %v3895 = vand.u32 %v3894, 4294901760
    %3896 = vmatpush1.msra.mxu0 %v3895
    %3897 = vmatprep.subr.mxu0 0.0
    %v3898 = vand.u32 %v178, 4294901760
    %v3899 = vsub.f32 %v178, %v3898
    %v3900 = vand.u32 %v3899, 4294901760
    %v3901 = vsub.f32 %v3899, %v3900
    %v3902 = vand.u32 %v3901, 4294901760
    %3903 = vmatpush1.msra.mxu0 %v3902
    %3904 = vmatprep.subr.mxu0 0.0
    %v3905 = vand.u32 %v179, 4294901760
    %v3906 = vsub.f32 %v179, %v3905
    %v3907 = vand.u32 %v3906, 4294901760
    %v3908 = vsub.f32 %v3906, %v3907
    %v3909 = vand.u32 %v3908, 4294901760
    %3910 = vmatpush1.msra.mxu0 %v3909
    %3911 = vmatprep.subr.mxu0 0.0
    %v3912 = vand.u32 %v180, 4294901760
    %v3913 = vsub.f32 %v180, %v3912
    %v3914 = vand.u32 %v3913, 4294901760
    %v3915 = vsub.f32 %v3913, %v3914
    %v3916 = vand.u32 %v3915, 4294901760
    %3917 = vmatpush1.msra.mxu0 %v3916
    %3918 = vmatprep.subr.mxu0 0.0
    %v3919 = vand.u32 %v181, 4294901760
    %v3920 = vsub.f32 %v181, %v3919
    %v3921 = vand.u32 %v3920, 4294901760
    %v3922 = vsub.f32 %v3920, %v3921
    %v3923 = vand.u32 %v3922, 4294901760
    %3924 = vmatpush1.msra.mxu0 %v3923
    %3925 = vmatprep.subr.mxu0 0.0
    %v3926 = vand.u32 %v182, 4294901760
    %v3927 = vsub.f32 %v182, %v3926
    %v3928 = vand.u32 %v3927, 4294901760
    %v3929 = vsub.f32 %v3927, %v3928
    %v3930 = vand.u32 %v3929, 4294901760
    %3931 = vmatpush1.msra.mxu0 %v3930
    %3932 = vmatprep.subr.mxu0 0.0
    %v3933 = vand.u32 %v183, 4294901760
    %v3934 = vsub.f32 %v183, %v3933
    %v3935 = vand.u32 %v3934, 4294901760
    %v3936 = vsub.f32 %v3934, %v3935
    %v3937 = vand.u32 %v3936, 4294901760
    %3938 = vmatpush1.msra.mxu0 %v3937
    %3939 = vmatprep.subr.mxu0 0.0
    %v3940 = vand.u32 %v184, 4294901760
    %v3941 = vsub.f32 %v184, %v3940
    %v3942 = vand.u32 %v3941, 4294901760
    %v3943 = vsub.f32 %v3941, %v3942
    %v3944 = vand.u32 %v3943, 4294901760
    %3945 = vmatpush1.msra.mxu0 %v3944
    %3946 = vmatprep.subr.mxu0 0.0
    %v3947 = vand.u32 %v185, 4294901760
    %v3948 = vsub.f32 %v185, %v3947
    %v3949 = vand.u32 %v3948, 4294901760
    %v3950 = vsub.f32 %v3948, %v3949
    %v3951 = vand.u32 %v3950, 4294901760
    %3952 = vmatpush1.msra.mxu0 %v3951
    %3953 = vmatprep.subr.mxu0 0.0
    %v3954 = vand.u32 %v186, 4294901760
    %v3955 = vsub.f32 %v186, %v3954
    %v3956 = vand.u32 %v3955, 4294901760
    %v3957 = vsub.f32 %v3955, %v3956
    %v3958 = vand.u32 %v3957, 4294901760
    %3959 = vmatpush1.msra.mxu0 %v3958
    %3960 = vmatprep.subr.mxu0 0.0
    %v3961 = vand.u32 %v187, 4294901760
    %v3962 = vsub.f32 %v187, %v3961
    %v3963 = vand.u32 %v3962, 4294901760
    %v3964 = vsub.f32 %v3962, %v3963
    %v3965 = vand.u32 %v3964, 4294901760
    %3966 = vmatpush1.msra.mxu0 %v3965
    %3967 = vmatprep.subr.mxu0 0.0
    %v3968 = vand.u32 %v188, 4294901760
    %v3969 = vsub.f32 %v188, %v3968
    %v3970 = vand.u32 %v3969, 4294901760
    %v3971 = vsub.f32 %v3969, %v3970
    %v3972 = vand.u32 %v3971, 4294901760
    %3973 = vmatpush1.msra.mxu0 %v3972
    %3974 = vmatprep.subr.mxu0 0.0
    %v3975 = vand.u32 %v189, 4294901760
    %v3976 = vsub.f32 %v189, %v3975
    %v3977 = vand.u32 %v3976, 4294901760
    %v3978 = vsub.f32 %v3976, %v3977
    %v3979 = vand.u32 %v3978, 4294901760
    %3980 = vmatpush1.msra.mxu0 %v3979
    %3981 = vmatprep.subr.mxu0 0.0
    %v3982 = vand.u32 %v190, 4294901760
    %v3983 = vsub.f32 %v190, %v3982
    %v3984 = vand.u32 %v3983, 4294901760
    %v3985 = vsub.f32 %v3983, %v3984
    %v3986 = vand.u32 %v3985, 4294901760
    %3987 = vmatpush1.msra.mxu0 %v3986
    %3988 = vmatprep.subr.mxu0 0.0
    %v3989 = vand.u32 %v191, 4294901760
    %v3990 = vsub.f32 %v191, %v3989
    %v3991 = vand.u32 %v3990, 4294901760
    %v3992 = vsub.f32 %v3990, %v3991
    %v3993 = vand.u32 %v3992, 4294901760
    %3994 = vmatpush1.msra.mxu0 %v3993
    %v3995 = vand.u32 %v30, 4294901760
    %3996 = vmatprep.mubr.f32.mxu0 %v3995
    %v3997 = vand.u32 %v29, 4294901760
    %3998 = vmatmul.mubr.f32.gmra.mrb[0].mxu0 %v3997
    %v3999 = vpop.f32.mrb[0].mxu0
    %v4000 = vadd.f32 %v3768, %v3999
    %v4001 = vpop.f32.mrb[0].mxu0
    %4002 = vdwg.mxu0
    %4003 = vmatprep.subr.mxu0 0.0
    %v4004 = vand.u32 %v160, 4294901760
    %v4005 = vsub.f32 %v160, %v4004
    %4006 = vmatpush1.msra.mxu0 %v4005
    %4007 = vmatprep.subr.mxu0 0.0
    %v4008 = vand.u32 %v161, 4294901760
    %v4009 = vsub.f32 %v161, %v4008
    %4010 = vmatpush1.msra.mxu0 %v4009
    %4011 = vmatprep.subr.mxu0 0.0
    %v4012 = vand.u32 %v162, 4294901760
    %v4013 = vsub.f32 %v162, %v4012
    %4014 = vmatpush1.msra.mxu0 %v4013
    %4015 = vmatprep.subr.mxu0 0.0
    %v4016 = vand.u32 %v163, 4294901760
    %v4017 = vsub.f32 %v163, %v4016
    %4018 = vmatpush1.msra.mxu0 %v4017
    %4019 = vmatprep.subr.mxu0 0.0
    %v4020 = vand.u32 %v164, 4294901760
    %v4021 = vsub.f32 %v164, %v4020
    %4022 = vmatpush1.msra.mxu0 %v4021
    %4023 = vmatprep.subr.mxu0 0.0
    %v4024 = vand.u32 %v165, 4294901760
    %v4025 = vsub.f32 %v165, %v4024
    %4026 = vmatpush1.msra.mxu0 %v4025
    %4027 = vmatprep.subr.mxu0 0.0
    %v4028 = vand.u32 %v166, 4294901760
    %v4029 = vsub.f32 %v166, %v4028
    %4030 = vmatpush1.msra.mxu0 %v4029
    %4031 = vmatprep.subr.mxu0 0.0
    %v4032 = vand.u32 %v167, 4294901760
    %v4033 = vsub.f32 %v167, %v4032
    %4034 = vmatpush1.msra.mxu0 %v4033
    %4035 = vmatprep.subr.mxu0 0.0
    %v4036 = vand.u32 %v168, 4294901760
    %v4037 = vsub.f32 %v168, %v4036
    %4038 = vmatpush1.msra.mxu0 %v4037
    %4039 = vmatprep.subr.mxu0 0.0
    %v4040 = vand.u32 %v169, 4294901760
    %v4041 = vsub.f32 %v169, %v4040
    %4042 = vmatpush1.msra.mxu0 %v4041
    %4043 = vmatprep.subr.mxu0 0.0
    %v4044 = vand.u32 %v170, 4294901760
    %v4045 = vsub.f32 %v170, %v4044
    %4046 = vmatpush1.msra.mxu0 %v4045
    %4047 = vmatprep.subr.mxu0 0.0
    %v4048 = vand.u32 %v171, 4294901760
    %v4049 = vsub.f32 %v171, %v4048
    %4050 = vmatpush1.msra.mxu0 %v4049
    %4051 = vmatprep.subr.mxu0 0.0
    %v4052 = vand.u32 %v172, 4294901760
    %v4053 = vsub.f32 %v172, %v4052
    %4054 = vmatpush1.msra.mxu0 %v4053
    %4055 = vmatprep.subr.mxu0 0.0
    %v4056 = vand.u32 %v173, 4294901760
    %v4057 = vsub.f32 %v173, %v4056
    %4058 = vmatpush1.msra.mxu0 %v4057
    %4059 = vmatprep.subr.mxu0 0.0
    %v4060 = vand.u32 %v174, 4294901760
    %v4061 = vsub.f32 %v174, %v4060
    %4062 = vmatpush1.msra.mxu0 %v4061
    %4063 = vmatprep.subr.mxu0 0.0
    %v4064 = vand.u32 %v175, 4294901760
    %v4065 = vsub.f32 %v175, %v4064
    %4066 = vmatpush1.msra.mxu0 %v4065
    %4067 = vmatprep.subr.mxu0 0.0
    %v4068 = vand.u32 %v176, 4294901760
    %v4069 = vsub.f32 %v176, %v4068
    %4070 = vmatpush1.msra.mxu0 %v4069
    %4071 = vmatprep.subr.mxu0 0.0
    %v4072 = vand.u32 %v177, 4294901760
    %v4073 = vsub.f32 %v177, %v4072
    %4074 = vmatpush1.msra.mxu0 %v4073
    %4075 = vmatprep.subr.mxu0 0.0
    %v4076 = vand.u32 %v178, 4294901760
    %v4077 = vsub.f32 %v178, %v4076
    %4078 = vmatpush1.msra.mxu0 %v4077
    %4079 = vmatprep.subr.mxu0 0.0
    %v4080 = vand.u32 %v179, 4294901760
    %v4081 = vsub.f32 %v179, %v4080
    %4082 = vmatpush1.msra.mxu0 %v4081
    %4083 = vmatprep.subr.mxu0 0.0
    %v4084 = vand.u32 %v180, 4294901760
    %v4085 = vsub.f32 %v180, %v4084
    %4086 = vmatpush1.msra.mxu0 %v4085
    %4087 = vmatprep.subr.mxu0 0.0
    %v4088 = vand.u32 %v181, 4294901760
    %v4089 = vsub.f32 %v181, %v4088
    %4090 = vmatpush1.msra.mxu0 %v4089
    %4091 = vmatprep.subr.mxu0 0.0
    %v4092 = vand.u32 %v182, 4294901760
    %v4093 = vsub.f32 %v182, %v4092
    %4094 = vmatpush1.msra.mxu0 %v4093
    %4095 = vmatprep.subr.mxu0 0.0
    %v4096 = vand.u32 %v183, 4294901760
    %v4097 = vsub.f32 %v183, %v4096
    %4098 = vmatpush1.msra.mxu0 %v4097
    %4099 = vmatprep.subr.mxu0 0.0
    %v4100 = vand.u32 %v184, 4294901760
    %v4101 = vsub.f32 %v184, %v4100
    %4102 = vmatpush1.msra.mxu0 %v4101
    %4103 = vmatprep.subr.mxu0 0.0
    %v4104 = vand.u32 %v185, 4294901760
    %v4105 = vsub.f32 %v185, %v4104
    %4106 = vmatpush1.msra.mxu0 %v4105
    %4107 = vmatprep.subr.mxu0 0.0
    %v4108 = vand.u32 %v186, 4294901760
    %v4109 = vsub.f32 %v186, %v4108
    %4110 = vmatpush1.msra.mxu0 %v4109
    %4111 = vmatprep.subr.mxu0 0.0
    %v4112 = vand.u32 %v187, 4294901760
    %v4113 = vsub.f32 %v187, %v4112
    %4114 = vmatpush1.msra.mxu0 %v4113
    %4115 = vmatprep.subr.mxu0 0.0
    %v4116 = vand.u32 %v188, 4294901760
    %v4117 = vsub.f32 %v188, %v4116
    %4118 = vmatpush1.msra.mxu0 %v4117
    %4119 = vmatprep.subr.mxu0 0.0
    %v4120 = vand.u32 %v189, 4294901760
    %v4121 = vsub.f32 %v189, %v4120
    %4122 = vmatpush1.msra.mxu0 %v4121
    %4123 = vmatprep.subr.mxu0 0.0
    %v4124 = vand.u32 %v190, 4294901760
    %v4125 = vsub.f32 %v190, %v4124
    %4126 = vmatpush1.msra.mxu0 %v4125
    %4127 = vmatprep.subr.mxu0 0.0
    %v4128 = vand.u32 %v191, 4294901760
    %v4129 = vsub.f32 %v191, %v4128
    %4130 = vmatpush1.msra.mxu0 %v4129
    %v4131 = vand.u32 %v30, 4294901760
    %v4132 = vsub.f32 %v30, %v4131
    %4133 = vmatprep.mubr.f32.mxu0 %v4132
    %v4134 = vand.u32 %v29, 4294901760
    %v4135 = vsub.f32 %v29, %v4134
    %4136 = vmatmul.mubr.f32.gmra.mrb[0].mxu0 %v4135
    %v4137 = vpop.f32.mrb[0].mxu0
    %v4138 = vadd.f32 %v4000, %v4137
    %v4139 = vpop.f32.mrb[0].mxu0
    %4140 = vdwg.mxu0
    %4141 = vmatprep.subr.mxu0 0.0
    %v4142 = vand.u32 %v160, 4294901760
    %4143 = vmatpush1.msra.mxu0 %v4142
    %4144 = vmatprep.subr.mxu0 0.0
    %v4145 = vand.u32 %v161, 4294901760
    %4146 = vmatpush1.msra.mxu0 %v4145
    %4147 = vmatprep.subr.mxu0 0.0
    %v4148 = vand.u32 %v162, 4294901760
    %4149 = vmatpush1.msra.mxu0 %v4148
    %4150 = vmatprep.subr.mxu0 0.0
    %v4151 = vand.u32 %v163, 4294901760
    %4152 = vmatpush1.msra.mxu0 %v4151
    %4153 = vmatprep.subr.mxu0 0.0
    %v4154 = vand.u32 %v164, 4294901760
    %4155 = vmatpush1.msra.mxu0 %v4154
    %4156 = vmatprep.subr.mxu0 0.0
    %v4157 = vand.u32 %v165, 4294901760
    %4158 = vmatpush1.msra.mxu0 %v4157
    %4159 = vmatprep.subr.mxu0 0.0
    %v4160 = vand.u32 %v166, 4294901760
    %4161 = vmatpush1.msra.mxu0 %v4160
    %4162 = vmatprep.subr.mxu0 0.0
    %v4163 = vand.u32 %v167, 4294901760
    %4164 = vmatpush1.msra.mxu0 %v4163
    %4165 = vmatprep.subr.mxu0 0.0
    %v4166 = vand.u32 %v168, 4294901760
    %4167 = vmatpush1.msra.mxu0 %v4166
    %4168 = vmatprep.subr.mxu0 0.0
    %v4169 = vand.u32 %v169, 4294901760
    %4170 = vmatpush1.msra.mxu0 %v4169
    %4171 = vmatprep.subr.mxu0 0.0
    %v4172 = vand.u32 %v170, 4294901760
    %4173 = vmatpush1.msra.mxu0 %v4172
    %4174 = vmatprep.subr.mxu0 0.0
    %v4175 = vand.u32 %v171, 4294901760
    %4176 = vmatpush1.msra.mxu0 %v4175
    %4177 = vmatprep.subr.mxu0 0.0
    %v4178 = vand.u32 %v172, 4294901760
    %4179 = vmatpush1.msra.mxu0 %v4178
    %4180 = vmatprep.subr.mxu0 0.0
    %v4181 = vand.u32 %v173, 4294901760
    %4182 = vmatpush1.msra.mxu0 %v4181
    %4183 = vmatprep.subr.mxu0 0.0
    %v4184 = vand.u32 %v174, 4294901760
    %4185 = vmatpush1.msra.mxu0 %v4184
    %4186 = vmatprep.subr.mxu0 0.0
    %v4187 = vand.u32 %v175, 4294901760
    %4188 = vmatpush1.msra.mxu0 %v4187
    %4189 = vmatprep.subr.mxu0 0.0
    %v4190 = vand.u32 %v176, 4294901760
    %4191 = vmatpush1.msra.mxu0 %v4190
    %4192 = vmatprep.subr.mxu0 0.0
    %v4193 = vand.u32 %v177, 4294901760
    %4194 = vmatpush1.msra.mxu0 %v4193
    %4195 = vmatprep.subr.mxu0 0.0
    %v4196 = vand.u32 %v178, 4294901760
    %4197 = vmatpush1.msra.mxu0 %v4196
    %4198 = vmatprep.subr.mxu0 0.0
    %v4199 = vand.u32 %v179, 4294901760
    %4200 = vmatpush1.msra.mxu0 %v4199
    %4201 = vmatprep.subr.mxu0 0.0
    %v4202 = vand.u32 %v180, 4294901760
    %4203 = vmatpush1.msra.mxu0 %v4202
    %4204 = vmatprep.subr.mxu0 0.0
    %v4205 = vand.u32 %v181, 4294901760
    %4206 = vmatpush1.msra.mxu0 %v4205
    %4207 = vmatprep.subr.mxu0 0.0
    %v4208 = vand.u32 %v182, 4294901760
    %4209 = vmatpush1.msra.mxu0 %v4208
    %4210 = vmatprep.subr.mxu0 0.0
    %v4211 = vand.u32 %v183, 4294901760
    %4212 = vmatpush1.msra.mxu0 %v4211
    %4213 = vmatprep.subr.mxu0 0.0
    %v4214 = vand.u32 %v184, 4294901760
    %4215 = vmatpush1.msra.mxu0 %v4214
    %4216 = vmatprep.subr.mxu0 0.0
    %v4217 = vand.u32 %v185, 4294901760
    %4218 = vmatpush1.msra.mxu0 %v4217
    %4219 = vmatprep.subr.mxu0 0.0
    %v4220 = vand.u32 %v186, 4294901760
    %4221 = vmatpush1.msra.mxu0 %v4220
    %4222 = vmatprep.subr.mxu0 0.0
    %v4223 = vand.u32 %v187, 4294901760
    %4224 = vmatpush1.msra.mxu0 %v4223
    %4225 = vmatprep.subr.mxu0 0.0
    %v4226 = vand.u32 %v188, 4294901760
    %4227 = vmatpush1.msra.mxu0 %v4226
    %4228 = vmatprep.subr.mxu0 0.0
    %v4229 = vand.u32 %v189, 4294901760
    %4230 = vmatpush1.msra.mxu0 %v4229
    %4231 = vmatprep.subr.mxu0 0.0
    %v4232 = vand.u32 %v190, 4294901760
    %4233 = vmatpush1.msra.mxu0 %v4232
    %4234 = vmatprep.subr.mxu0 0.0
    %v4235 = vand.u32 %v191, 4294901760
    %4236 = vmatpush1.msra.mxu0 %v4235
    %v4237 = vand.u32 %v30, 4294901760
    %v4238 = vsub.f32 %v30, %v4237
    %v4239 = vand.u32 %v4238, 4294901760
    %4240 = vmatprep.mubr.f32.mxu0 %v4239
    %v4241 = vand.u32 %v29, 4294901760
    %v4242 = vsub.f32 %v29, %v4241
    %v4243 = vand.u32 %v4242, 4294901760
    %4244 = vmatmul.mubr.f32.gmra.mrb[0].mxu0 %v4243
    %v4245 = vpop.f32.mrb[0].mxu0
    %v4246 = vadd.f32 %v4138, %v4245
    %v4247 = vpop.f32.mrb[0].mxu0
    %4248 = vdwg.mxu0
    %4249 = vmatprep.subr.mxu0 0.0
    %v4250 = vand.u32 %v160, 4294901760
    %v4251 = vsub.f32 %v160, %v4250
    %v4252 = vand.u32 %v4251, 4294901760
    %4253 = vmatpush1.msra.mxu0 %v4252
    %4254 = vmatprep.subr.mxu0 0.0
    %v4255 = vand.u32 %v161, 4294901760
    %v4256 = vsub.f32 %v161, %v4255
    %v4257 = vand.u32 %v4256, 4294901760
    %4258 = vmatpush1.msra.mxu0 %v4257
    %4259 = vmatprep.subr.mxu0 0.0
    %v4260 = vand.u32 %v162, 4294901760
    %v4261 = vsub.f32 %v162, %v4260
    %v4262 = vand.u32 %v4261, 4294901760
    %4263 = vmatpush1.msra.mxu0 %v4262
    %4264 = vmatprep.subr.mxu0 0.0
    %v4265 = vand.u32 %v163, 4294901760
    %v4266 = vsub.f32 %v163, %v4265
    %v4267 = vand.u32 %v4266, 4294901760
    %4268 = vmatpush1.msra.mxu0 %v4267
    %4269 = vmatprep.subr.mxu0 0.0
    %v4270 = vand.u32 %v164, 4294901760
    %v4271 = vsub.f32 %v164, %v4270
    %v4272 = vand.u32 %v4271, 4294901760
    %4273 = vmatpush1.msra.mxu0 %v4272
    %4274 = vmatprep.subr.mxu0 0.0
    %v4275 = vand.u32 %v165, 4294901760
    %v4276 = vsub.f32 %v165, %v4275
    %v4277 = vand.u32 %v4276, 4294901760
    %4278 = vmatpush1.msra.mxu0 %v4277
    %4279 = vmatprep.subr.mxu0 0.0
    %v4280 = vand.u32 %v166, 4294901760
    %v4281 = vsub.f32 %v166, %v4280
    %v4282 = vand.u32 %v4281, 4294901760
    %4283 = vmatpush1.msra.mxu0 %v4282
    %4284 = vmatprep.subr.mxu0 0.0
    %v4285 = vand.u32 %v167, 4294901760
    %v4286 = vsub.f32 %v167, %v4285
    %v4287 = vand.u32 %v4286, 4294901760
    %4288 = vmatpush1.msra.mxu0 %v4287
    %4289 = vmatprep.subr.mxu0 0.0
    %v4290 = vand.u32 %v168, 4294901760
    %v4291 = vsub.f32 %v168, %v4290
    %v4292 = vand.u32 %v4291, 4294901760
    %4293 = vmatpush1.msra.mxu0 %v4292
    %4294 = vmatprep.subr.mxu0 0.0
    %v4295 = vand.u32 %v169, 4294901760
    %v4296 = vsub.f32 %v169, %v4295
    %v4297 = vand.u32 %v4296, 4294901760
    %4298 = vmatpush1.msra.mxu0 %v4297
    %4299 = vmatprep.subr.mxu0 0.0
    %v4300 = vand.u32 %v170, 4294901760
    %v4301 = vsub.f32 %v170, %v4300
    %v4302 = vand.u32 %v4301, 4294901760
    %4303 = vmatpush1.msra.mxu0 %v4302
    %4304 = vmatprep.subr.mxu0 0.0
    %v4305 = vand.u32 %v171, 4294901760
    %v4306 = vsub.f32 %v171, %v4305
    %v4307 = vand.u32 %v4306, 4294901760
    %4308 = vmatpush1.msra.mxu0 %v4307
    %4309 = vmatprep.subr.mxu0 0.0
    %v4310 = vand.u32 %v172, 4294901760
    %v4311 = vsub.f32 %v172, %v4310
    %v4312 = vand.u32 %v4311, 4294901760
    %4313 = vmatpush1.msra.mxu0 %v4312
    %4314 = vmatprep.subr.mxu0 0.0
    %v4315 = vand.u32 %v173, 4294901760
    %v4316 = vsub.f32 %v173, %v4315
    %v4317 = vand.u32 %v4316, 4294901760
    %4318 = vmatpush1.msra.mxu0 %v4317
    %4319 = vmatprep.subr.mxu0 0.0
    %v4320 = vand.u32 %v174, 4294901760
    %v4321 = vsub.f32 %v174, %v4320
    %v4322 = vand.u32 %v4321, 4294901760
    %4323 = vmatpush1.msra.mxu0 %v4322
    %4324 = vmatprep.subr.mxu0 0.0
    %v4325 = vand.u32 %v175, 4294901760
    %v4326 = vsub.f32 %v175, %v4325
    %v4327 = vand.u32 %v4326, 4294901760
    %4328 = vmatpush1.msra.mxu0 %v4327
    %4329 = vmatprep.subr.mxu0 0.0
    %v4330 = vand.u32 %v176, 4294901760
    %v4331 = vsub.f32 %v176, %v4330
    %v4332 = vand.u32 %v4331, 4294901760
    %4333 = vmatpush1.msra.mxu0 %v4332
    %4334 = vmatprep.subr.mxu0 0.0
    %v4335 = vand.u32 %v177, 4294901760
    %v4336 = vsub.f32 %v177, %v4335
    %v4337 = vand.u32 %v4336, 4294901760
    %4338 = vmatpush1.msra.mxu0 %v4337
    %4339 = vmatprep.subr.mxu0 0.0
    %v4340 = vand.u32 %v178, 4294901760
    %v4341 = vsub.f32 %v178, %v4340
    %v4342 = vand.u32 %v4341, 4294901760
    %4343 = vmatpush1.msra.mxu0 %v4342
    %4344 = vmatprep.subr.mxu0 0.0
    %v4345 = vand.u32 %v179, 4294901760
    %v4346 = vsub.f32 %v179, %v4345
    %v4347 = vand.u32 %v4346, 4294901760
    %4348 = vmatpush1.msra.mxu0 %v4347
    %4349 = vmatprep.subr.mxu0 0.0
    %v4350 = vand.u32 %v180, 4294901760
    %v4351 = vsub.f32 %v180, %v4350
    %v4352 = vand.u32 %v4351, 4294901760
    %4353 = vmatpush1.msra.mxu0 %v4352
    %4354 = vmatprep.subr.mxu0 0.0
    %v4355 = vand.u32 %v181, 4294901760
    %v4356 = vsub.f32 %v181, %v4355
    %v4357 = vand.u32 %v4356, 4294901760
    %4358 = vmatpush1.msra.mxu0 %v4357
    %4359 = vmatprep.subr.mxu0 0.0
    %v4360 = vand.u32 %v182, 4294901760
    %v4361 = vsub.f32 %v182, %v4360
    %v4362 = vand.u32 %v4361, 4294901760
    %4363 = vmatpush1.msra.mxu0 %v4362
    %4364 = vmatprep.subr.mxu0 0.0
    %v4365 = vand.u32 %v183, 4294901760
    %v4366 = vsub.f32 %v183, %v4365
    %v4367 = vand.u32 %v4366, 4294901760
    %4368 = vmatpush1.msra.mxu0 %v4367
    %4369 = vmatprep.subr.mxu0 0.0
    %v4370 = vand.u32 %v184, 4294901760
    %v4371 = vsub.f32 %v184, %v4370
    %v4372 = vand.u32 %v4371, 4294901760
    %4373 = vmatpush1.msra.mxu0 %v4372
    %4374 = vmatprep.subr.mxu0 0.0
    %v4375 = vand.u32 %v185, 4294901760
    %v4376 = vsub.f32 %v185, %v4375
    %v4377 = vand.u32 %v4376, 4294901760
    %4378 = vmatpush1.msra.mxu0 %v4377
    %4379 = vmatprep.subr.mxu0 0.0
    %v4380 = vand.u32 %v186, 4294901760
    %v4381 = vsub.f32 %v186, %v4380
    %v4382 = vand.u32 %v4381, 4294901760
    %4383 = vmatpush1.msra.mxu0 %v4382
    %4384 = vmatprep.subr.mxu0 0.0
    %v4385 = vand.u32 %v187, 4294901760
    %v4386 = vsub.f32 %v187, %v4385
    %v4387 = vand.u32 %v4386, 4294901760
    %4388 = vmatpush1.msra.mxu0 %v4387
    %4389 = vmatprep.subr.mxu0 0.0
    %v4390 = vand.u32 %v188, 4294901760
    %v4391 = vsub.f32 %v188, %v4390
    %v4392 = vand.u32 %v4391, 4294901760
    %4393 = vmatpush1.msra.mxu0 %v4392
    %4394 = vmatprep.subr.mxu0 0.0
    %v4395 = vand.u32 %v189, 4294901760
    %v4396 = vsub.f32 %v189, %v4395
    %v4397 = vand.u32 %v4396, 4294901760
    %4398 = vmatpush1.msra.mxu0 %v4397
    %4399 = vmatprep.subr.mxu0 0.0
    %v4400 = vand.u32 %v190, 4294901760
    %v4401 = vsub.f32 %v190, %v4400
    %v4402 = vand.u32 %v4401, 4294901760
    %4403 = vmatpush1.msra.mxu0 %v4402
    %4404 = vmatprep.subr.mxu0 0.0
    %v4405 = vand.u32 %v191, 4294901760
    %v4406 = vsub.f32 %v191, %v4405
    %v4407 = vand.u32 %v4406, 4294901760
    %4408 = vmatpush1.msra.mxu0 %v4407
    %v4409 = vand.u32 %v30, 4294901760
    %4410 = vmatprep.mubr.f32.mxu0 %v4409
    %v4411 = vand.u32 %v29, 4294901760
    %4412 = vmatmul.mubr.f32.gmra.mrb[0].mxu0 %v4411
    %v4413 = vpop.f32.mrb[0].mxu0
    %v4414 = vadd.f32 %v4246, %v4413
    %v4415 = vpop.f32.mrb[0].mxu0
    %4416 = vdwg.mxu0
    %4417 = vmatprep.subr.mxu0 0.0
    %v4418 = vand.u32 %v160, 4294901760
    %4419 = vmatpush1.msra.mxu0 %v4418
    %4420 = vmatprep.subr.mxu0 0.0
    %v4421 = vand.u32 %v161, 4294901760
    %4422 = vmatpush1.msra.mxu0 %v4421
    %4423 = vmatprep.subr.mxu0 0.0
    %v4424 = vand.u32 %v162, 4294901760
    %4425 = vmatpush1.msra.mxu0 %v4424
    %4426 = vmatprep.subr.mxu0 0.0
    %v4427 = vand.u32 %v163, 4294901760
    %4428 = vmatpush1.msra.mxu0 %v4427
    %4429 = vmatprep.subr.mxu0 0.0
    %v4430 = vand.u32 %v164, 4294901760
    %4431 = vmatpush1.msra.mxu0 %v4430
    %4432 = vmatprep.subr.mxu0 0.0
    %v4433 = vand.u32 %v165, 4294901760
    %4434 = vmatpush1.msra.mxu0 %v4433
    %4435 = vmatprep.subr.mxu0 0.0
    %v4436 = vand.u32 %v166, 4294901760
    %4437 = vmatpush1.msra.mxu0 %v4436
    %4438 = vmatprep.subr.mxu0 0.0
    %v4439 = vand.u32 %v167, 4294901760
    %4440 = vmatpush1.msra.mxu0 %v4439
    %4441 = vmatprep.subr.mxu0 0.0
    %v4442 = vand.u32 %v168, 4294901760
    %4443 = vmatpush1.msra.mxu0 %v4442
    %4444 = vmatprep.subr.mxu0 0.0
    %v4445 = vand.u32 %v169, 4294901760
    %4446 = vmatpush1.msra.mxu0 %v4445
    %4447 = vmatprep.subr.mxu0 0.0
    %v4448 = vand.u32 %v170, 4294901760
    %4449 = vmatpush1.msra.mxu0 %v4448
    %4450 = vmatprep.subr.mxu0 0.0
    %v4451 = vand.u32 %v171, 4294901760
    %4452 = vmatpush1.msra.mxu0 %v4451
    %4453 = vmatprep.subr.mxu0 0.0
    %v4454 = vand.u32 %v172, 4294901760
    %4455 = vmatpush1.msra.mxu0 %v4454
    %4456 = vmatprep.subr.mxu0 0.0
    %v4457 = vand.u32 %v173, 4294901760
    %4458 = vmatpush1.msra.mxu0 %v4457
    %4459 = vmatprep.subr.mxu0 0.0
    %v4460 = vand.u32 %v174, 4294901760
    %4461 = vmatpush1.msra.mxu0 %v4460
    %4462 = vmatprep.subr.mxu0 0.0
    %v4463 = vand.u32 %v175, 4294901760
    %4464 = vmatpush1.msra.mxu0 %v4463
    %4465 = vmatprep.subr.mxu0 0.0
    %v4466 = vand.u32 %v176, 4294901760
    %4467 = vmatpush1.msra.mxu0 %v4466
    %4468 = vmatprep.subr.mxu0 0.0
    %v4469 = vand.u32 %v177, 4294901760
    %4470 = vmatpush1.msra.mxu0 %v4469
    %4471 = vmatprep.subr.mxu0 0.0
    %v4472 = vand.u32 %v178, 4294901760
    %4473 = vmatpush1.msra.mxu0 %v4472
    %4474 = vmatprep.subr.mxu0 0.0
    %v4475 = vand.u32 %v179, 4294901760
    %4476 = vmatpush1.msra.mxu0 %v4475
    %4477 = vmatprep.subr.mxu0 0.0
    %v4478 = vand.u32 %v180, 4294901760
    %4479 = vmatpush1.msra.mxu0 %v4478
    %4480 = vmatprep.subr.mxu0 0.0
    %v4481 = vand.u32 %v181, 4294901760
    %4482 = vmatpush1.msra.mxu0 %v4481
    %4483 = vmatprep.subr.mxu0 0.0
    %v4484 = vand.u32 %v182, 4294901760
    %4485 = vmatpush1.msra.mxu0 %v4484
    %4486 = vmatprep.subr.mxu0 0.0
    %v4487 = vand.u32 %v183, 4294901760
    %4488 = vmatpush1.msra.mxu0 %v4487
    %4489 = vmatprep.subr.mxu0 0.0
    %v4490 = vand.u32 %v184, 4294901760
    %4491 = vmatpush1.msra.mxu0 %v4490
    %4492 = vmatprep.subr.mxu0 0.0
    %v4493 = vand.u32 %v185, 4294901760
    %4494 = vmatpush1.msra.mxu0 %v4493
    %4495 = vmatprep.subr.mxu0 0.0
    %v4496 = vand.u32 %v186, 4294901760
    %4497 = vmatpush1.msra.mxu0 %v4496
    %4498 = vmatprep.subr.mxu0 0.0
    %v4499 = vand.u32 %v187, 4294901760
    %4500 = vmatpush1.msra.mxu0 %v4499
    %4501 = vmatprep.subr.mxu0 0.0
    %v4502 = vand.u32 %v188, 4294901760
    %4503 = vmatpush1.msra.mxu0 %v4502
    %4504 = vmatprep.subr.mxu0 0.0
    %v4505 = vand.u32 %v189, 4294901760
    %4506 = vmatpush1.msra.mxu0 %v4505
    %4507 = vmatprep.subr.mxu0 0.0
    %v4508 = vand.u32 %v190, 4294901760
    %4509 = vmatpush1.msra.mxu0 %v4508
    %4510 = vmatprep.subr.mxu0 0.0
    %v4511 = vand.u32 %v191, 4294901760
    %4512 = vmatpush1.msra.mxu0 %v4511
    %v4513 = vand.u32 %v30, 4294901760
    %4514 = vmatprep.mubr.f32.mxu0 %v4513
    %v4515 = vand.u32 %v29, 4294901760
    %4516 = vmatmul.mubr.f32.gmra.mrb[0].mxu0 %v4515
    %v4517 = vpop.f32.mrb[0].mxu0
    %v4518 = vadd.f32 %v4414, %v4517
    %v4519 = vpop.f32.mrb[0].mxu0
    %4520 = vdwg.mxu0
    %4521 = vmatprep.subr.mxu0 0.0
    %v4522 = vand.u32 %v192, 4294901760
    %4523 = vmatpush1.msra.mxu0 %v4522
    %4524 = vmatprep.subr.mxu0 0.0
    %v4525 = vand.u32 %v193, 4294901760
    %4526 = vmatpush1.msra.mxu0 %v4525
    %4527 = vmatprep.subr.mxu0 0.0
    %v4528 = vand.u32 %v194, 4294901760
    %4529 = vmatpush1.msra.mxu0 %v4528
    %4530 = vmatprep.subr.mxu0 0.0
    %v4531 = vand.u32 %v195, 4294901760
    %4532 = vmatpush1.msra.mxu0 %v4531
    %4533 = vmatprep.subr.mxu0 0.0
    %v4534 = vand.u32 %v196, 4294901760
    %4535 = vmatpush1.msra.mxu0 %v4534
    %4536 = vmatprep.subr.mxu0 0.0
    %v4537 = vand.u32 %v197, 4294901760
    %4538 = vmatpush1.msra.mxu0 %v4537
    %4539 = vmatprep.subr.mxu0 0.0
    %v4540 = vand.u32 %v198, 4294901760
    %4541 = vmatpush1.msra.mxu0 %v4540
    %4542 = vmatprep.subr.mxu0 0.0
    %v4543 = vand.u32 %v199, 4294901760
    %4544 = vmatpush1.msra.mxu0 %v4543
    %4545 = vmatprep.subr.mxu0 0.0
    %v4546 = vand.u32 %v200, 4294901760
    %4547 = vmatpush1.msra.mxu0 %v4546
    %4548 = vmatprep.subr.mxu0 0.0
    %v4549 = vand.u32 %v201, 4294901760
    %4550 = vmatpush1.msra.mxu0 %v4549
    %4551 = vmatprep.subr.mxu0 0.0
    %v4552 = vand.u32 %v202, 4294901760
    %4553 = vmatpush1.msra.mxu0 %v4552
    %4554 = vmatprep.subr.mxu0 0.0
    %v4555 = vand.u32 %v203, 4294901760
    %4556 = vmatpush1.msra.mxu0 %v4555
    %4557 = vmatprep.subr.mxu0 0.0
    %v4558 = vand.u32 %v204, 4294901760
    %4559 = vmatpush1.msra.mxu0 %v4558
    %4560 = vmatprep.subr.mxu0 0.0
    %v4561 = vand.u32 %v205, 4294901760
    %4562 = vmatpush1.msra.mxu0 %v4561
    %4563 = vmatprep.subr.mxu0 0.0
    %v4564 = vand.u32 %v206, 4294901760
    %4565 = vmatpush1.msra.mxu0 %v4564
    %4566 = vmatprep.subr.mxu0 0.0
    %4567 = vmatpush1.msra.mxu0 0.0
    %4568 = vmatprep.subr.mxu0 0.0
    %4569 = vmatpush1.msra.mxu0 0.0
    %4570 = vmatprep.subr.mxu0 0.0
    %4571 = vmatpush1.msra.mxu0 0.0
    %4572 = vmatprep.subr.mxu0 0.0
    %4573 = vmatpush1.msra.mxu0 0.0
    %4574 = vmatprep.subr.mxu0 0.0
    %4575 = vmatpush1.msra.mxu0 0.0
    %4576 = vmatprep.subr.mxu0 0.0
    %4577 = vmatpush1.msra.mxu0 0.0
    %4578 = vmatprep.subr.mxu0 0.0
    %4579 = vmatpush1.msra.mxu0 0.0
    %4580 = vmatprep.subr.mxu0 0.0
    %4581 = vmatpush1.msra.mxu0 0.0
    %4582 = vmatprep.subr.mxu0 0.0
    %4583 = vmatpush1.msra.mxu0 0.0
    %4584 = vmatprep.subr.mxu0 0.0
    %4585 = vmatpush1.msra.mxu0 0.0
    %4586 = vmatprep.subr.mxu0 0.0
    %4587 = vmatpush1.msra.mxu0 0.0
    %4588 = vmatprep.subr.mxu0 0.0
    %4589 = vmatpush1.msra.mxu0 0.0
    %4590 = vmatprep.subr.mxu0 0.0
    %4591 = vmatpush1.msra.mxu0 0.0
    %4592 = vmatprep.subr.mxu0 0.0
    %4593 = vmatpush1.msra.mxu0 0.0
    %4594 = vmatprep.subr.mxu0 0.0
    %4595 = vmatpush1.msra.mxu0 0.0
    %4596 = vmatprep.subr.mxu0 0.0
    %4597 = vmatpush1.msra.mxu0 0.0
    %4598 = vmatprep.subr.mxu0 0.0
    %4599 = vmatpush1.msra.mxu0 0.0
    %4600 = vmatprep.mubr.f32.mxu0 0.0
    %v4601 = vand.u32 %v209, 4294901760
    %v4602 = vsub.f32 %v209, %v4601
    %v4603 = vand.u32 %v4602, 4294901760
    %v4604 = vsub.f32 %v4602, %v4603
    %v4605 = vand.u32 %v4604, 4294901760
    %4606 = vmatmul.mubr.f32.gmra.mrb[0].mxu0 %v4605
    %v4607 = vpop.f32.mrb[0].mxu0
    %v4608 = vadd.f32 %v4518, %v4607
    %v4609 = vpop.f32.mrb[0].mxu0
    %4610 = vdwg.mxu0
    %4611 = vmatprep.subr.mxu0 0.0
    %v4612 = vand.u32 %v192, 4294901760
    %v4613 = vsub.f32 %v192, %v4612
    %v4614 = vand.u32 %v4613, 4294901760
    %v4615 = vsub.f32 %v4613, %v4614
    %v4616 = vand.u32 %v4615, 4294901760
    %4617 = vmatpush1.msra.mxu0 %v4616
    %4618 = vmatprep.subr.mxu0 0.0
    %v4619 = vand.u32 %v193, 4294901760
    %v4620 = vsub.f32 %v193, %v4619
    %v4621 = vand.u32 %v4620, 4294901760
    %v4622 = vsub.f32 %v4620, %v4621
    %v4623 = vand.u32 %v4622, 4294901760
    %4624 = vmatpush1.msra.mxu0 %v4623
    %4625 = vmatprep.subr.mxu0 0.0
    %v4626 = vand.u32 %v194, 4294901760
    %v4627 = vsub.f32 %v194, %v4626
    %v4628 = vand.u32 %v4627, 4294901760
    %v4629 = vsub.f32 %v4627, %v4628
    %v4630 = vand.u32 %v4629, 4294901760
    %4631 = vmatpush1.msra.mxu0 %v4630
    %4632 = vmatprep.subr.mxu0 0.0
    %v4633 = vand.u32 %v195, 4294901760
    %v4634 = vsub.f32 %v195, %v4633
    %v4635 = vand.u32 %v4634, 4294901760
    %v4636 = vsub.f32 %v4634, %v4635
    %v4637 = vand.u32 %v4636, 4294901760
    %4638 = vmatpush1.msra.mxu0 %v4637
    %4639 = vmatprep.subr.mxu0 0.0
    %v4640 = vand.u32 %v196, 4294901760
    %v4641 = vsub.f32 %v196, %v4640
    %v4642 = vand.u32 %v4641, 4294901760
    %v4643 = vsub.f32 %v4641, %v4642
    %v4644 = vand.u32 %v4643, 4294901760
    %4645 = vmatpush1.msra.mxu0 %v4644
    %4646 = vmatprep.subr.mxu0 0.0
    %v4647 = vand.u32 %v197, 4294901760
    %v4648 = vsub.f32 %v197, %v4647
    %v4649 = vand.u32 %v4648, 4294901760
    %v4650 = vsub.f32 %v4648, %v4649
    %v4651 = vand.u32 %v4650, 4294901760
    %4652 = vmatpush1.msra.mxu0 %v4651
    %4653 = vmatprep.subr.mxu0 0.0
    %v4654 = vand.u32 %v198, 4294901760
    %v4655 = vsub.f32 %v198, %v4654
    %v4656 = vand.u32 %v4655, 4294901760
    %v4657 = vsub.f32 %v4655, %v4656
    %v4658 = vand.u32 %v4657, 4294901760
    %4659 = vmatpush1.msra.mxu0 %v4658
    %4660 = vmatprep.subr.mxu0 0.0
    %v4661 = vand.u32 %v199, 4294901760
    %v4662 = vsub.f32 %v199, %v4661
    %v4663 = vand.u32 %v4662, 4294901760
    %v4664 = vsub.f32 %v4662, %v4663
    %v4665 = vand.u32 %v4664, 4294901760
    %4666 = vmatpush1.msra.mxu0 %v4665
    %4667 = vmatprep.subr.mxu0 0.0
    %v4668 = vand.u32 %v200, 4294901760
    %v4669 = vsub.f32 %v200, %v4668
    %v4670 = vand.u32 %v4669, 4294901760
    %v4671 = vsub.f32 %v4669, %v4670
    %v4672 = vand.u32 %v4671, 4294901760
    %4673 = vmatpush1.msra.mxu0 %v4672
    %4674 = vmatprep.subr.mxu0 0.0
    %v4675 = vand.u32 %v201, 4294901760
    %v4676 = vsub.f32 %v201, %v4675
    %v4677 = vand.u32 %v4676, 4294901760
    %v4678 = vsub.f32 %v4676, %v4677
    %v4679 = vand.u32 %v4678, 4294901760
    %4680 = vmatpush1.msra.mxu0 %v4679
    %4681 = vmatprep.subr.mxu0 0.0
    %v4682 = vand.u32 %v202, 4294901760
    %v4683 = vsub.f32 %v202, %v4682
    %v4684 = vand.u32 %v4683, 4294901760
    %v4685 = vsub.f32 %v4683, %v4684
    %v4686 = vand.u32 %v4685, 4294901760
    %4687 = vmatpush1.msra.mxu0 %v4686
    %4688 = vmatprep.subr.mxu0 0.0
    %v4689 = vand.u32 %v203, 4294901760
    %v4690 = vsub.f32 %v203, %v4689
    %v4691 = vand.u32 %v4690, 4294901760
    %v4692 = vsub.f32 %v4690, %v4691
    %v4693 = vand.u32 %v4692, 4294901760
    %4694 = vmatpush1.msra.mxu0 %v4693
    %4695 = vmatprep.subr.mxu0 0.0
    %v4696 = vand.u32 %v204, 4294901760
    %v4697 = vsub.f32 %v204, %v4696
    %v4698 = vand.u32 %v4697, 4294901760
    %v4699 = vsub.f32 %v4697, %v4698
    %v4700 = vand.u32 %v4699, 4294901760
    %4701 = vmatpush1.msra.mxu0 %v4700
    %4702 = vmatprep.subr.mxu0 0.0
    %v4703 = vand.u32 %v205, 4294901760
    %v4704 = vsub.f32 %v205, %v4703
    %v4705 = vand.u32 %v4704, 4294901760
    %v4706 = vsub.f32 %v4704, %v4705
    %v4707 = vand.u32 %v4706, 4294901760
    %4708 = vmatpush1.msra.mxu0 %v4707
    %4709 = vmatprep.subr.mxu0 0.0
    %v4710 = vand.u32 %v206, 4294901760
    %v4711 = vsub.f32 %v206, %v4710
    %v4712 = vand.u32 %v4711, 4294901760
    %v4713 = vsub.f32 %v4711, %v4712
    %v4714 = vand.u32 %v4713, 4294901760
    %4715 = vmatpush1.msra.mxu0 %v4714
    %4716 = vmatprep.subr.mxu0 0.0
    %4717 = vmatpush1.msra.mxu0 0.0
    %4718 = vmatprep.subr.mxu0 0.0
    %4719 = vmatpush1.msra.mxu0 0.0
    %4720 = vmatprep.subr.mxu0 0.0
    %4721 = vmatpush1.msra.mxu0 0.0
    %4722 = vmatprep.subr.mxu0 0.0
    %4723 = vmatpush1.msra.mxu0 0.0
    %4724 = vmatprep.subr.mxu0 0.0
    %4725 = vmatpush1.msra.mxu0 0.0
    %4726 = vmatprep.subr.mxu0 0.0
    %4727 = vmatpush1.msra.mxu0 0.0
    %4728 = vmatprep.subr.mxu0 0.0
    %4729 = vmatpush1.msra.mxu0 0.0
    %4730 = vmatprep.subr.mxu0 0.0
    %4731 = vmatpush1.msra.mxu0 0.0
    %4732 = vmatprep.subr.mxu0 0.0
    %4733 = vmatpush1.msra.mxu0 0.0
    %4734 = vmatprep.subr.mxu0 0.0
    %4735 = vmatpush1.msra.mxu0 0.0
    %4736 = vmatprep.subr.mxu0 0.0
    %4737 = vmatpush1.msra.mxu0 0.0
    %4738 = vmatprep.subr.mxu0 0.0
    %4739 = vmatpush1.msra.mxu0 0.0
    %4740 = vmatprep.subr.mxu0 0.0
    %4741 = vmatpush1.msra.mxu0 0.0
    %4742 = vmatprep.subr.mxu0 0.0
    %4743 = vmatpush1.msra.mxu0 0.0
    %4744 = vmatprep.subr.mxu0 0.0
    %4745 = vmatpush1.msra.mxu0 0.0
    %4746 = vmatprep.subr.mxu0 0.0
    %4747 = vmatpush1.msra.mxu0 0.0
    %4748 = vmatprep.subr.mxu0 0.0
    %4749 = vmatpush1.msra.mxu0 0.0
    %4750 = vmatprep.mubr.f32.mxu0 0.0
    %v4751 = vand.u32 %v209, 4294901760
    %4752 = vmatmul.mubr.f32.gmra.mrb[0].mxu0 %v4751
    %v4753 = vpop.f32.mrb[0].mxu0
    %v4754 = vadd.f32 %v4608, %v4753
    %v4755 = vpop.f32.mrb[0].mxu0
    %4756 = vdwg.mxu0
    %4757 = vmatprep.subr.mxu0 0.0
    %v4758 = vand.u32 %v192, 4294901760
    %v4759 = vsub.f32 %v192, %v4758
    %4760 = vmatpush1.msra.mxu0 %v4759
    %4761 = vmatprep.subr.mxu0 0.0
    %v4762 = vand.u32 %v193, 4294901760
    %v4763 = vsub.f32 %v193, %v4762
    %4764 = vmatpush1.msra.mxu0 %v4763
    %4765 = vmatprep.subr.mxu0 0.0
    %v4766 = vand.u32 %v194, 4294901760
    %v4767 = vsub.f32 %v194, %v4766
    %4768 = vmatpush1.msra.mxu0 %v4767
    %4769 = vmatprep.subr.mxu0 0.0
    %v4770 = vand.u32 %v195, 4294901760
    %v4771 = vsub.f32 %v195, %v4770
    %4772 = vmatpush1.msra.mxu0 %v4771
    %4773 = vmatprep.subr.mxu0 0.0
    %v4774 = vand.u32 %v196, 4294901760
    %v4775 = vsub.f32 %v196, %v4774
    %4776 = vmatpush1.msra.mxu0 %v4775
    %4777 = vmatprep.subr.mxu0 0.0
    %v4778 = vand.u32 %v197, 4294901760
    %v4779 = vsub.f32 %v197, %v4778
    %4780 = vmatpush1.msra.mxu0 %v4779
    %4781 = vmatprep.subr.mxu0 0.0
    %v4782 = vand.u32 %v198, 4294901760
    %v4783 = vsub.f32 %v198, %v4782
    %4784 = vmatpush1.msra.mxu0 %v4783
    %4785 = vmatprep.subr.mxu0 0.0
    %v4786 = vand.u32 %v199, 4294901760
    %v4787 = vsub.f32 %v199, %v4786
    %4788 = vmatpush1.msra.mxu0 %v4787
    %4789 = vmatprep.subr.mxu0 0.0
    %v4790 = vand.u32 %v200, 4294901760
    %v4791 = vsub.f32 %v200, %v4790
    %4792 = vmatpush1.msra.mxu0 %v4791
    %4793 = vmatprep.subr.mxu0 0.0
    %v4794 = vand.u32 %v201, 4294901760
    %v4795 = vsub.f32 %v201, %v4794
    %4796 = vmatpush1.msra.mxu0 %v4795
    %4797 = vmatprep.subr.mxu0 0.0
    %v4798 = vand.u32 %v202, 4294901760
    %v4799 = vsub.f32 %v202, %v4798
    %4800 = vmatpush1.msra.mxu0 %v4799
    %4801 = vmatprep.subr.mxu0 0.0
    %v4802 = vand.u32 %v203, 4294901760
    %v4803 = vsub.f32 %v203, %v4802
    %4804 = vmatpush1.msra.mxu0 %v4803
    %4805 = vmatprep.subr.mxu0 0.0
    %v4806 = vand.u32 %v204, 4294901760
    %v4807 = vsub.f32 %v204, %v4806
    %4808 = vmatpush1.msra.mxu0 %v4807
    %4809 = vmatprep.subr.mxu0 0.0
    %v4810 = vand.u32 %v205, 4294901760
    %v4811 = vsub.f32 %v205, %v4810
    %4812 = vmatpush1.msra.mxu0 %v4811
    %4813 = vmatprep.subr.mxu0 0.0
    %v4814 = vand.u32 %v206, 4294901760
    %v4815 = vsub.f32 %v206, %v4814
    %4816 = vmatpush1.msra.mxu0 %v4815
    %4817 = vmatprep.subr.mxu0 0.0
    %4818 = vmatpush1.msra.mxu0 0.0
    %4819 = vmatprep.subr.mxu0 0.0
    %4820 = vmatpush1.msra.mxu0 0.0
    %4821 = vmatprep.subr.mxu0 0.0
    %4822 = vmatpush1.msra.mxu0 0.0
    %4823 = vmatprep.subr.mxu0 0.0
    %4824 = vmatpush1.msra.mxu0 0.0
    %4825 = vmatprep.subr.mxu0 0.0
    %4826 = vmatpush1.msra.mxu0 0.0
    %4827 = vmatprep.subr.mxu0 0.0
    %4828 = vmatpush1.msra.mxu0 0.0
    %4829 = vmatprep.subr.mxu0 0.0
    %4830 = vmatpush1.msra.mxu0 0.0
    %4831 = vmatprep.subr.mxu0 0.0
    %4832 = vmatpush1.msra.mxu0 0.0
    %4833 = vmatprep.subr.mxu0 0.0
    %4834 = vmatpush1.msra.mxu0 0.0
    %4835 = vmatprep.subr.mxu0 0.0
    %4836 = vmatpush1.msra.mxu0 0.0
    %4837 = vmatprep.subr.mxu0 0.0
    %4838 = vmatpush1.msra.mxu0 0.0
    %4839 = vmatprep.subr.mxu0 0.0
    %4840 = vmatpush1.msra.mxu0 0.0
    %4841 = vmatprep.subr.mxu0 0.0
    %4842 = vmatpush1.msra.mxu0 0.0
    %4843 = vmatprep.subr.mxu0 0.0
    %4844 = vmatpush1.msra.mxu0 0.0
    %4845 = vmatprep.subr.mxu0 0.0
    %4846 = vmatpush1.msra.mxu0 0.0
    %4847 = vmatprep.subr.mxu0 0.0
    %4848 = vmatpush1.msra.mxu0 0.0
    %4849 = vmatprep.subr.mxu0 0.0
    %4850 = vmatpush1.msra.mxu0 0.0
    %4851 = vmatprep.mubr.f32.mxu0 0.0
    %v4852 = vand.u32 %v209, 4294901760
    %v4853 = vsub.f32 %v209, %v4852
    %4854 = vmatmul.mubr.f32.gmra.mrb[0].mxu0 %v4853
    %v4855 = vpop.f32.mrb[0].mxu0
    %v4856 = vadd.f32 %v4754, %v4855
    %v4857 = vpop.f32.mrb[0].mxu0
    %4858 = vdwg.mxu0
    %4859 = vmatprep.subr.mxu0 0.0
    %v4860 = vand.u32 %v192, 4294901760
    %4861 = vmatpush1.msra.mxu0 %v4860
    %4862 = vmatprep.subr.mxu0 0.0
    %v4863 = vand.u32 %v193, 4294901760
    %4864 = vmatpush1.msra.mxu0 %v4863
    %4865 = vmatprep.subr.mxu0 0.0
    %v4866 = vand.u32 %v194, 4294901760
    %4867 = vmatpush1.msra.mxu0 %v4866
    %4868 = vmatprep.subr.mxu0 0.0
    %v4869 = vand.u32 %v195, 4294901760
    %4870 = vmatpush1.msra.mxu0 %v4869
    %4871 = vmatprep.subr.mxu0 0.0
    %v4872 = vand.u32 %v196, 4294901760
    %4873 = vmatpush1.msra.mxu0 %v4872
    %4874 = vmatprep.subr.mxu0 0.0
    %v4875 = vand.u32 %v197, 4294901760
    %4876 = vmatpush1.msra.mxu0 %v4875
    %4877 = vmatprep.subr.mxu0 0.0
    %v4878 = vand.u32 %v198, 4294901760
    %4879 = vmatpush1.msra.mxu0 %v4878
    %4880 = vmatprep.subr.mxu0 0.0
    %v4881 = vand.u32 %v199, 4294901760
    %4882 = vmatpush1.msra.mxu0 %v4881
    %4883 = vmatprep.subr.mxu0 0.0
    %v4884 = vand.u32 %v200, 4294901760
    %4885 = vmatpush1.msra.mxu0 %v4884
    %4886 = vmatprep.subr.mxu0 0.0
    %v4887 = vand.u32 %v201, 4294901760
    %4888 = vmatpush1.msra.mxu0 %v4887
    %4889 = vmatprep.subr.mxu0 0.0
    %v4890 = vand.u32 %v202, 4294901760
    %4891 = vmatpush1.msra.mxu0 %v4890
    %4892 = vmatprep.subr.mxu0 0.0
    %v4893 = vand.u32 %v203, 4294901760
    %4894 = vmatpush1.msra.mxu0 %v4893
    %4895 = vmatprep.subr.mxu0 0.0
    %v4896 = vand.u32 %v204, 4294901760
    %4897 = vmatpush1.msra.mxu0 %v4896
    %4898 = vmatprep.subr.mxu0 0.0
    %v4899 = vand.u32 %v205, 4294901760
    %4900 = vmatpush1.msra.mxu0 %v4899
    %4901 = vmatprep.subr.mxu0 0.0
    %v4902 = vand.u32 %v206, 4294901760
    %4903 = vmatpush1.msra.mxu0 %v4902
    %4904 = vmatprep.subr.mxu0 0.0
    %4905 = vmatpush1.msra.mxu0 0.0
    %4906 = vmatprep.subr.mxu0 0.0
    %4907 = vmatpush1.msra.mxu0 0.0
    %4908 = vmatprep.subr.mxu0 0.0
    %4909 = vmatpush1.msra.mxu0 0.0
    %4910 = vmatprep.subr.mxu0 0.0
    %4911 = vmatpush1.msra.mxu0 0.0
    %4912 = vmatprep.subr.mxu0 0.0
    %4913 = vmatpush1.msra.mxu0 0.0
    %4914 = vmatprep.subr.mxu0 0.0
    %4915 = vmatpush1.msra.mxu0 0.0
    %4916 = vmatprep.subr.mxu0 0.0
    %4917 = vmatpush1.msra.mxu0 0.0
    %4918 = vmatprep.subr.mxu0 0.0
    %4919 = vmatpush1.msra.mxu0 0.0
    %4920 = vmatprep.subr.mxu0 0.0
    %4921 = vmatpush1.msra.mxu0 0.0
    %4922 = vmatprep.subr.mxu0 0.0
    %4923 = vmatpush1.msra.mxu0 0.0
    %4924 = vmatprep.subr.mxu0 0.0
    %4925 = vmatpush1.msra.mxu0 0.0
    %4926 = vmatprep.subr.mxu0 0.0
    %4927 = vmatpush1.msra.mxu0 0.0
    %4928 = vmatprep.subr.mxu0 0.0
    %4929 = vmatpush1.msra.mxu0 0.0
    %4930 = vmatprep.subr.mxu0 0.0
    %4931 = vmatpush1.msra.mxu0 0.0
    %4932 = vmatprep.subr.mxu0 0.0
    %4933 = vmatpush1.msra.mxu0 0.0
    %4934 = vmatprep.subr.mxu0 0.0
    %4935 = vmatpush1.msra.mxu0 0.0
    %4936 = vmatprep.subr.mxu0 0.0
    %4937 = vmatpush1.msra.mxu0 0.0
    %4938 = vmatprep.mubr.f32.mxu0 0.0
    %v4939 = vand.u32 %v209, 4294901760
    %v4940 = vsub.f32 %v209, %v4939
    %v4941 = vand.u32 %v4940, 4294901760
    %4942 = vmatmul.mubr.f32.gmra.mrb[0].mxu0 %v4941
    %v4943 = vpop.f32.mrb[0].mxu0
    %v4944 = vadd.f32 %v4856, %v4943
    %v4945 = vpop.f32.mrb[0].mxu0
    %4946 = vdwg.mxu0
    %4947 = vmatprep.subr.mxu0 0.0
    %v4948 = vand.u32 %v192, 4294901760
    %v4949 = vsub.f32 %v192, %v4948
    %v4950 = vand.u32 %v4949, 4294901760
    %4951 = vmatpush1.msra.mxu0 %v4950
    %4952 = vmatprep.subr.mxu0 0.0
    %v4953 = vand.u32 %v193, 4294901760
    %v4954 = vsub.f32 %v193, %v4953
    %v4955 = vand.u32 %v4954, 4294901760
    %4956 = vmatpush1.msra.mxu0 %v4955
    %4957 = vmatprep.subr.mxu0 0.0
    %v4958 = vand.u32 %v194, 4294901760
    %v4959 = vsub.f32 %v194, %v4958
    %v4960 = vand.u32 %v4959, 4294901760
    %4961 = vmatpush1.msra.mxu0 %v4960
    %4962 = vmatprep.subr.mxu0 0.0
    %v4963 = vand.u32 %v195, 4294901760
    %v4964 = vsub.f32 %v195, %v4963
    %v4965 = vand.u32 %v4964, 4294901760
    %4966 = vmatpush1.msra.mxu0 %v4965
    %4967 = vmatprep.subr.mxu0 0.0
    %v4968 = vand.u32 %v196, 4294901760
    %v4969 = vsub.f32 %v196, %v4968
    %v4970 = vand.u32 %v4969, 4294901760
    %4971 = vmatpush1.msra.mxu0 %v4970
    %4972 = vmatprep.subr.mxu0 0.0
    %v4973 = vand.u32 %v197, 4294901760
    %v4974 = vsub.f32 %v197, %v4973
    %v4975 = vand.u32 %v4974, 4294901760
    %4976 = vmatpush1.msra.mxu0 %v4975
    %4977 = vmatprep.subr.mxu0 0.0
    %v4978 = vand.u32 %v198, 4294901760
    %v4979 = vsub.f32 %v198, %v4978
    %v4980 = vand.u32 %v4979, 4294901760
    %4981 = vmatpush1.msra.mxu0 %v4980
    %4982 = vmatprep.subr.mxu0 0.0
    %v4983 = vand.u32 %v199, 4294901760
    %v4984 = vsub.f32 %v199, %v4983
    %v4985 = vand.u32 %v4984, 4294901760
    %4986 = vmatpush1.msra.mxu0 %v4985
    %4987 = vmatprep.subr.mxu0 0.0
    %v4988 = vand.u32 %v200, 4294901760
    %v4989 = vsub.f32 %v200, %v4988
    %v4990 = vand.u32 %v4989, 4294901760
    %4991 = vmatpush1.msra.mxu0 %v4990
    %4992 = vmatprep.subr.mxu0 0.0
    %v4993 = vand.u32 %v201, 4294901760
    %v4994 = vsub.f32 %v201, %v4993
    %v4995 = vand.u32 %v4994, 4294901760
    %4996 = vmatpush1.msra.mxu0 %v4995
    %4997 = vmatprep.subr.mxu0 0.0
    %v4998 = vand.u32 %v202, 4294901760
    %v4999 = vsub.f32 %v202, %v4998
    %v5000 = vand.u32 %v4999, 4294901760
    %5001 = vmatpush1.msra.mxu0 %v5000
    %5002 = vmatprep.subr.mxu0 0.0
    %v5003 = vand.u32 %v203, 4294901760
    %v5004 = vsub.f32 %v203, %v5003
    %v5005 = vand.u32 %v5004, 4294901760
    %5006 = vmatpush1.msra.mxu0 %v5005
    %5007 = vmatprep.subr.mxu0 0.0
    %v5008 = vand.u32 %v204, 4294901760
    %v5009 = vsub.f32 %v204, %v5008
    %v5010 = vand.u32 %v5009, 4294901760
    %5011 = vmatpush1.msra.mxu0 %v5010
    %5012 = vmatprep.subr.mxu0 0.0
    %v5013 = vand.u32 %v205, 4294901760
    %v5014 = vsub.f32 %v205, %v5013
    %v5015 = vand.u32 %v5014, 4294901760
    %5016 = vmatpush1.msra.mxu0 %v5015
    %5017 = vmatprep.subr.mxu0 0.0
    %v5018 = vand.u32 %v206, 4294901760
    %v5019 = vsub.f32 %v206, %v5018
    %v5020 = vand.u32 %v5019, 4294901760
    %5021 = vmatpush1.msra.mxu0 %v5020
    %5022 = vmatprep.subr.mxu0 0.0
    %5023 = vmatpush1.msra.mxu0 0.0
    %5024 = vmatprep.subr.mxu0 0.0
    %5025 = vmatpush1.msra.mxu0 0.0
    %5026 = vmatprep.subr.mxu0 0.0
    %5027 = vmatpush1.msra.mxu0 0.0
    %5028 = vmatprep.subr.mxu0 0.0
    %5029 = vmatpush1.msra.mxu0 0.0
    %5030 = vmatprep.subr.mxu0 0.0
    %5031 = vmatpush1.msra.mxu0 0.0
    %5032 = vmatprep.subr.mxu0 0.0
    %5033 = vmatpush1.msra.mxu0 0.0
    %5034 = vmatprep.subr.mxu0 0.0
    %5035 = vmatpush1.msra.mxu0 0.0
    %5036 = vmatprep.subr.mxu0 0.0
    %5037 = vmatpush1.msra.mxu0 0.0
    %5038 = vmatprep.subr.mxu0 0.0
    %5039 = vmatpush1.msra.mxu0 0.0
    %5040 = vmatprep.subr.mxu0 0.0
    %5041 = vmatpush1.msra.mxu0 0.0
    %5042 = vmatprep.subr.mxu0 0.0
    %5043 = vmatpush1.msra.mxu0 0.0
    %5044 = vmatprep.subr.mxu0 0.0
    %5045 = vmatpush1.msra.mxu0 0.0
    %5046 = vmatprep.subr.mxu0 0.0
    %5047 = vmatpush1.msra.mxu0 0.0
    %5048 = vmatprep.subr.mxu0 0.0
    %5049 = vmatpush1.msra.mxu0 0.0
    %5050 = vmatprep.subr.mxu0 0.0
    %5051 = vmatpush1.msra.mxu0 0.0
    %5052 = vmatprep.subr.mxu0 0.0
    %5053 = vmatpush1.msra.mxu0 0.0
    %5054 = vmatprep.subr.mxu0 0.0
    %5055 = vmatpush1.msra.mxu0 0.0
    %5056 = vmatprep.mubr.f32.mxu0 0.0
    %v5057 = vand.u32 %v209, 4294901760
    %5058 = vmatmul.mubr.f32.gmra.mrb[0].mxu0 %v5057
    %v5059 = vpop.f32.mrb[0].mxu0
    %v5060 = vadd.f32 %v4944, %v5059
    %v5061 = vpop.f32.mrb[0].mxu0
    %5062 = vdwg.mxu0
    %5063 = vmatprep.subr.mxu0 0.0
    %v5064 = vand.u32 %v192, 4294901760
    %5065 = vmatpush1.msra.mxu0 %v5064
    %5066 = vmatprep.subr.mxu0 0.0
    %v5067 = vand.u32 %v193, 4294901760
    %5068 = vmatpush1.msra.mxu0 %v5067
    %5069 = vmatprep.subr.mxu0 0.0
    %v5070 = vand.u32 %v194, 4294901760
    %5071 = vmatpush1.msra.mxu0 %v5070
    %5072 = vmatprep.subr.mxu0 0.0
    %v5073 = vand.u32 %v195, 4294901760
    %5074 = vmatpush1.msra.mxu0 %v5073
    %5075 = vmatprep.subr.mxu0 0.0
    %v5076 = vand.u32 %v196, 4294901760
    %5077 = vmatpush1.msra.mxu0 %v5076
    %5078 = vmatprep.subr.mxu0 0.0
    %v5079 = vand.u32 %v197, 4294901760
    %5080 = vmatpush1.msra.mxu0 %v5079
    %5081 = vmatprep.subr.mxu0 0.0
    %v5082 = vand.u32 %v198, 4294901760
    %5083 = vmatpush1.msra.mxu0 %v5082
    %5084 = vmatprep.subr.mxu0 0.0
    %v5085 = vand.u32 %v199, 4294901760
    %5086 = vmatpush1.msra.mxu0 %v5085
    %5087 = vmatprep.subr.mxu0 0.0
    %v5088 = vand.u32 %v200, 4294901760
    %5089 = vmatpush1.msra.mxu0 %v5088
    %5090 = vmatprep.subr.mxu0 0.0
    %v5091 = vand.u32 %v201, 4294901760
    %5092 = vmatpush1.msra.mxu0 %v5091
    %5093 = vmatprep.subr.mxu0 0.0
    %v5094 = vand.u32 %v202, 4294901760
    %5095 = vmatpush1.msra.mxu0 %v5094
    %5096 = vmatprep.subr.mxu0 0.0
    %v5097 = vand.u32 %v203, 4294901760
    %5098 = vmatpush1.msra.mxu0 %v5097
    %5099 = vmatprep.subr.mxu0 0.0
    %v5100 = vand.u32 %v204, 4294901760
    %5101 = vmatpush1.msra.mxu0 %v5100
    %5102 = vmatprep.subr.mxu0 0.0
    %v5103 = vand.u32 %v205, 4294901760
    %5104 = vmatpush1.msra.mxu0 %v5103
    %5105 = vmatprep.subr.mxu0 0.0
    %v5106 = vand.u32 %v206, 4294901760
    %5107 = vmatpush1.msra.mxu0 %v5106
    %5108 = vmatprep.subr.mxu0 0.0
    %5109 = vmatpush1.msra.mxu0 0.0
    %5110 = vmatprep.subr.mxu0 0.0
    %5111 = vmatpush1.msra.mxu0 0.0
    %5112 = vmatprep.subr.mxu0 0.0
    %5113 = vmatpush1.msra.mxu0 0.0
    %5114 = vmatprep.subr.mxu0 0.0
    %5115 = vmatpush1.msra.mxu0 0.0
    %5116 = vmatprep.subr.mxu0 0.0
    %5117 = vmatpush1.msra.mxu0 0.0
    %5118 = vmatprep.subr.mxu0 0.0
    %5119 = vmatpush1.msra.mxu0 0.0
    %5120 = vmatprep.subr.mxu0 0.0
    %5121 = vmatpush1.msra.mxu0 0.0
    %5122 = vmatprep.subr.mxu0 0.0
    %5123 = vmatpush1.msra.mxu0 0.0
    %5124 = vmatprep.subr.mxu0 0.0
    %5125 = vmatpush1.msra.mxu0 0.0
    %5126 = vmatprep.subr.mxu0 0.0
    %5127 = vmatpush1.msra.mxu0 0.0
    %5128 = vmatprep.subr.mxu0 0.0
    %5129 = vmatpush1.msra.mxu0 0.0
    %5130 = vmatprep.subr.mxu0 0.0
    %5131 = vmatpush1.msra.mxu0 0.0
    %5132 = vmatprep.subr.mxu0 0.0
    %5133 = vmatpush1.msra.mxu0 0.0
    %5134 = vmatprep.subr.mxu0 0.0
    %5135 = vmatpush1.msra.mxu0 0.0
    %5136 = vmatprep.subr.mxu0 0.0
    %5137 = vmatpush1.msra.mxu0 0.0
    %5138 = vmatprep.subr.mxu0 0.0
    %5139 = vmatpush1.msra.mxu0 0.0
    %5140 = vmatprep.subr.mxu0 0.0
    %5141 = vmatpush1.msra.mxu0 0.0
    %5142 = vmatprep.mubr.f32.mxu0 0.0
    %v5143 = vand.u32 %v209, 4294901760
    %5144 = vmatmul.mubr.f32.gmra.mrb[0].mxu0 %v5143
    %v5145 = vpop.f32.mrb[0].mxu0
    %v5146 = vadd.f32 %v5060, %v5145
    %v5147 = vpop.f32.mrb[0].mxu0
    %5148 = vdwg.mxu0
    %v5149 = vld [vmem:[%s2] sm:$0xff]
    %v5150 = vld [vmem:[%s2 + $0x8] sm:$0xff]
    %v5151 = vld [vmem:[%s2 + $0x10] sm:$0xff]
    %v5152 = vld [vmem:[%s2 + $0x18] sm:$0xff]
    %v5153 = vld [vmem:[%s2 + $0x20] sm:$0xff]
    %v5154 = vld [vmem:[%s2 + $0x28] sm:$0x7]
    %v5155 = vld [vmem:[%s3] sm:$0xff]
    %v5156 = vld [vmem:[%s3 + $0x8] sm:$0x7]
    %v5157 = vld [vmem:[%s4] sm:$0x1]
    %5159 = vrot.lane.b32.xlu0 %v5146, 127
    %v5160 = vpop.permute.xlu0 %5159
    %v5162 = vmax.f32 %v5146, %v5160
    %5163 = vrot.lane.b32.xlu0 %v5146, 126
    %v5164 = vpop.permute.xlu0 %5163
    %v5166 = vmax.f32 %v5162, %v5164
    %vm5167 = vcmask 351232
    %v5169 = vsel %vm5167, %v5166, 0
    %vm5171 = vcmask 1042432
    %v5173 = vsel %vm5171, %v5154, 0
    %5175 = vmatprep.subr.mxu0 0.0
    %v5176 = vand.u32 %v5149, 4294901760
    %5177 = vmatpush1.msra.mxu0 %v5176
    %5178 = vmatprep.subr.mxu0 0.0
    %v5179 = vand.u32 %v5150, 4294901760
    %5180 = vmatpush1.msra.mxu0 %v5179
    %5181 = vmatprep.subr.mxu0 0.0
    %v5182 = vand.u32 %v5151, 4294901760
    %5183 = vmatpush1.msra.mxu0 %v5182
    %5184 = vmatprep.subr.mxu0 0.0
    %v5185 = vand.u32 %v5152, 4294901760
    %5186 = vmatpush1.msra.mxu0 %v5185
    %5187 = vmatprep.subr.mxu0 0.0
    %v5188 = vand.u32 %v5153, 4294901760
    %5189 = vmatpush1.msra.mxu0 %v5188
    %5190 = vmatprep.subr.mxu0 0.0
    %v5191 = vand.u32 %v5173, 4294901760
    %5192 = vmatpush1.msra.mxu0 %v5191
    %5193 = vmatprep.subr.mxu0 0.0
    %5194 = vmatpush1.msra.mxu0 0.0
    %5195 = vmatprep.subr.mxu0 0.0
    %5196 = vmatpush1.msra.mxu0 0.0
    %5197 = vmatprep.subr.mxu0 0.0
    %5198 = vmatpush1.msra.mxu0 0.0
    %5199 = vmatprep.subr.mxu0 0.0
    %5200 = vmatpush1.msra.mxu0 0.0
    %5201 = vmatprep.subr.mxu0 0.0
    %5202 = vmatpush1.msra.mxu0 0.0
    %5203 = vmatprep.subr.mxu0 0.0
    %5204 = vmatpush1.msra.mxu0 0.0
    %5205 = vmatprep.subr.mxu0 0.0
    %5206 = vmatpush1.msra.mxu0 0.0
    %5207 = vmatprep.subr.mxu0 0.0
    %5208 = vmatpush1.msra.mxu0 0.0
    %5209 = vmatprep.subr.mxu0 0.0
    %5210 = vmatpush1.msra.mxu0 0.0
    %5211 = vmatprep.subr.mxu0 0.0
    %5212 = vmatpush1.msra.mxu0 0.0
    %5213 = vmatprep.subr.mxu0 0.0
    %5214 = vmatpush1.msra.mxu0 0.0
    %5215 = vmatprep.subr.mxu0 0.0
    %5216 = vmatpush1.msra.mxu0 0.0
    %5217 = vmatprep.subr.mxu0 0.0
    %5218 = vmatpush1.msra.mxu0 0.0
    %5219 = vmatprep.subr.mxu0 0.0
    %5220 = vmatpush1.msra.mxu0 0.0
    %5221 = vmatprep.subr.mxu0 0.0
    %5222 = vmatpush1.msra.mxu0 0.0
    %5223 = vmatprep.subr.mxu0 0.0
    %5224 = vmatpush1.msra.mxu0 0.0
    %5225 = vmatprep.subr.mxu0 0.0
    %5226 = vmatpush1.msra.mxu0 0.0
    %5227 = vmatprep.subr.mxu0 0.0
    %5228 = vmatpush1.msra.mxu0 0.0
    %5229 = vmatprep.subr.mxu0 0.0
    %5230 = vmatpush1.msra.mxu0 0.0
    %5231 = vmatprep.subr.mxu0 0.0
    %5232 = vmatpush1.msra.mxu0 0.0
    %5233 = vmatprep.subr.mxu0 0.0
    %5234 = vmatpush1.msra.mxu0 0.0
    %5235 = vmatprep.subr.mxu0 0.0
    %5236 = vmatpush1.msra.mxu0 0.0
    %5237 = vmatprep.subr.mxu0 0.0
    %5238 = vmatpush1.msra.mxu0 0.0
    %5239 = vmatprep.subr.mxu0 0.0
    %5240 = vmatpush1.msra.mxu0 0.0
    %5241 = vmatprep.subr.mxu0 0.0
    %5242 = vmatpush1.msra.mxu0 0.0
    %5243 = vmatprep.subr.mxu0 0.0
    %5244 = vmatpush1.msra.mxu0 0.0
    %5245 = vmatprep.mubr.f32.mxu0 0.0
    %v5246 = vand.u32 %v5169, 4294901760
    %v5247 = vsub.f32 %v5169, %v5246
    %v5248 = vand.u32 %v5247, 4294901760
    %v5249 = vsub.f32 %v5247, %v5248
    %v5250 = vand.u32 %v5249, 4294901760
    %5251 = vmatmul.mubr.f32.gmra.mrb[0].mxu0 %v5250
    %v5252 = vpop.f32.mrb[0].mxu0
    %v5253 = vadd.f32 0.0, %v5252
    %v5254 = vpop.f32.mrb[0].mxu0
    %5255 = vdwg.mxu0
    %5256 = vmatprep.subr.mxu0 0.0
    %v5257 = vand.u32 %v5149, 4294901760
    %v5258 = vsub.f32 %v5149, %v5257
    %v5259 = vand.u32 %v5258, 4294901760
    %v5260 = vsub.f32 %v5258, %v5259
    %v5261 = vand.u32 %v5260, 4294901760
    %5262 = vmatpush1.msra.mxu0 %v5261
    %5263 = vmatprep.subr.mxu0 0.0
    %v5264 = vand.u32 %v5150, 4294901760
    %v5265 = vsub.f32 %v5150, %v5264
    %v5266 = vand.u32 %v5265, 4294901760
    %v5267 = vsub.f32 %v5265, %v5266
    %v5268 = vand.u32 %v5267, 4294901760
    %5269 = vmatpush1.msra.mxu0 %v5268
    %5270 = vmatprep.subr.mxu0 0.0
    %v5271 = vand.u32 %v5151, 4294901760
    %v5272 = vsub.f32 %v5151, %v5271
    %v5273 = vand.u32 %v5272, 4294901760
    %v5274 = vsub.f32 %v5272, %v5273
    %v5275 = vand.u32 %v5274, 4294901760
    %5276 = vmatpush1.msra.mxu0 %v5275
    %5277 = vmatprep.subr.mxu0 0.0
    %v5278 = vand.u32 %v5152, 4294901760
    %v5279 = vsub.f32 %v5152, %v5278
    %v5280 = vand.u32 %v5279, 4294901760
    %v5281 = vsub.f32 %v5279, %v5280
    %v5282 = vand.u32 %v5281, 4294901760
    %5283 = vmatpush1.msra.mxu0 %v5282
    %5284 = vmatprep.subr.mxu0 0.0
    %v5285 = vand.u32 %v5153, 4294901760
    %v5286 = vsub.f32 %v5153, %v5285
    %v5287 = vand.u32 %v5286, 4294901760
    %v5288 = vsub.f32 %v5286, %v5287
    %v5289 = vand.u32 %v5288, 4294901760
    %5290 = vmatpush1.msra.mxu0 %v5289
    %5291 = vmatprep.subr.mxu0 0.0
    %v5292 = vand.u32 %v5173, 4294901760
    %v5293 = vsub.f32 %v5173, %v5292
    %v5294 = vand.u32 %v5293, 4294901760
    %v5295 = vsub.f32 %v5293, %v5294
    %v5296 = vand.u32 %v5295, 4294901760
    %5297 = vmatpush1.msra.mxu0 %v5296
    %5298 = vmatprep.subr.mxu0 0.0
    %5299 = vmatpush1.msra.mxu0 0.0
    %5300 = vmatprep.subr.mxu0 0.0
    %5301 = vmatpush1.msra.mxu0 0.0
    %5302 = vmatprep.subr.mxu0 0.0
    %5303 = vmatpush1.msra.mxu0 0.0
    %5304 = vmatprep.subr.mxu0 0.0
    %5305 = vmatpush1.msra.mxu0 0.0
    %5306 = vmatprep.subr.mxu0 0.0
    %5307 = vmatpush1.msra.mxu0 0.0
    %5308 = vmatprep.subr.mxu0 0.0
    %5309 = vmatpush1.msra.mxu0 0.0
    %5310 = vmatprep.subr.mxu0 0.0
    %5311 = vmatpush1.msra.mxu0 0.0
    %5312 = vmatprep.subr.mxu0 0.0
    %5313 = vmatpush1.msra.mxu0 0.0
    %5314 = vmatprep.subr.mxu0 0.0
    %5315 = vmatpush1.msra.mxu0 0.0
    %5316 = vmatprep.subr.mxu0 0.0
    %5317 = vmatpush1.msra.mxu0 0.0
    %5318 = vmatprep.subr.mxu0 0.0
    %5319 = vmatpush1.msra.mxu0 0.0
    %5320 = vmatprep.subr.mxu0 0.0
    %5321 = vmatpush1.msra.mxu0 0.0
    %5322 = vmatprep.subr.mxu0 0.0
    %5323 = vmatpush1.msra.mxu0 0.0
    %5324 = vmatprep.subr.mxu0 0.0
    %5325 = vmatpush1.msra.mxu0 0.0
    %5326 = vmatprep.subr.mxu0 0.0
    %5327 = vmatpush1.msra.mxu0 0.0
    %5328 = vmatprep.subr.mxu0 0.0
    %5329 = vmatpush1.msra.mxu0 0.0
    %5330 = vmatprep.subr.mxu0 0.0
    %5331 = vmatpush1.msra.mxu0 0.0
    %5332 = vmatprep.subr.mxu0 0.0
    %5333 = vmatpush1.msra.mxu0 0.0
    %5334 = vmatprep.subr.mxu0 0.0
    %5335 = vmatpush1.msra.mxu0 0.0
    %5336 = vmatprep.subr.mxu0 0.0
    %5337 = vmatpush1.msra.mxu0 0.0
    %5338 = vmatprep.subr.mxu0 0.0
    %5339 = vmatpush1.msra.mxu0 0.0
    %5340 = vmatprep.subr.mxu0 0.0
    %5341 = vmatpush1.msra.mxu0 0.0
    %5342 = vmatprep.subr.mxu0 0.0
    %5343 = vmatpush1.msra.mxu0 0.0
    %5344 = vmatprep.subr.mxu0 0.0
    %5345 = vmatpush1.msra.mxu0 0.0
    %5346 = vmatprep.subr.mxu0 0.0
    %5347 = vmatpush1.msra.mxu0 0.0
    %5348 = vmatprep.subr.mxu0 0.0
    %5349 = vmatpush1.msra.mxu0 0.0
    %5350 = vmatprep.mubr.f32.mxu0 0.0
    %v5351 = vand.u32 %v5169, 4294901760
    %5352 = vmatmul.mubr.f32.gmra.mrb[0].mxu0 %v5351
    %v5353 = vpop.f32.mrb[0].mxu0
    %v5354 = vadd.f32 %v5253, %v5353
    %v5355 = vpop.f32.mrb[0].mxu0
    %5356 = vdwg.mxu0
    %5357 = vmatprep.subr.mxu0 0.0
    %v5358 = vand.u32 %v5149, 4294901760
    %v5359 = vsub.f32 %v5149, %v5358
    %5360 = vmatpush1.msra.mxu0 %v5359
    %5361 = vmatprep.subr.mxu0 0.0
    %v5362 = vand.u32 %v5150, 4294901760
    %v5363 = vsub.f32 %v5150, %v5362
    %5364 = vmatpush1.msra.mxu0 %v5363
    %5365 = vmatprep.subr.mxu0 0.0
    %v5366 = vand.u32 %v5151, 4294901760
    %v5367 = vsub.f32 %v5151, %v5366
    %5368 = vmatpush1.msra.mxu0 %v5367
    %5369 = vmatprep.subr.mxu0 0.0
    %v5370 = vand.u32 %v5152, 4294901760
    %v5371 = vsub.f32 %v5152, %v5370
    %5372 = vmatpush1.msra.mxu0 %v5371
    %5373 = vmatprep.subr.mxu0 0.0
    %v5374 = vand.u32 %v5153, 4294901760
    %v5375 = vsub.f32 %v5153, %v5374
    %5376 = vmatpush1.msra.mxu0 %v5375
    %5377 = vmatprep.subr.mxu0 0.0
    %v5378 = vand.u32 %v5173, 4294901760
    %v5379 = vsub.f32 %v5173, %v5378
    %5380 = vmatpush1.msra.mxu0 %v5379
    %5381 = vmatprep.subr.mxu0 0.0
    %5382 = vmatpush1.msra.mxu0 0.0
    %5383 = vmatprep.subr.mxu0 0.0
    %5384 = vmatpush1.msra.mxu0 0.0
    %5385 = vmatprep.subr.mxu0 0.0
    %5386 = vmatpush1.msra.mxu0 0.0
    %5387 = vmatprep.subr.mxu0 0.0
    %5388 = vmatpush1.msra.mxu0 0.0
    %5389 = vmatprep.subr.mxu0 0.0
    %5390 = vmatpush1.msra.mxu0 0.0
    %5391 = vmatprep.subr.mxu0 0.0
    %5392 = vmatpush1.msra.mxu0 0.0
    %5393 = vmatprep.subr.mxu0 0.0
    %5394 = vmatpush1.msra.mxu0 0.0
    %5395 = vmatprep.subr.mxu0 0.0
    %5396 = vmatpush1.msra.mxu0 0.0
    %5397 = vmatprep.subr.mxu0 0.0
    %5398 = vmatpush1.msra.mxu0 0.0
    %5399 = vmatprep.subr.mxu0 0.0
    %5400 = vmatpush1.msra.mxu0 0.0
    %5401 = vmatprep.subr.mxu0 0.0
    %5402 = vmatpush1.msra.mxu0 0.0
    %5403 = vmatprep.subr.mxu0 0.0
    %5404 = vmatpush1.msra.mxu0 0.0
    %5405 = vmatprep.subr.mxu0 0.0
    %5406 = vmatpush1.msra.mxu0 0.0
    %5407 = vmatprep.subr.mxu0 0.0
    %5408 = vmatpush1.msra.mxu0 0.0
    %5409 = vmatprep.subr.mxu0 0.0
    %5410 = vmatpush1.msra.mxu0 0.0
    %5411 = vmatprep.subr.mxu0 0.0
    %5412 = vmatpush1.msra.mxu0 0.0
    %5413 = vmatprep.subr.mxu0 0.0
    %5414 = vmatpush1.msra.mxu0 0.0
    %5415 = vmatprep.subr.mxu0 0.0
    %5416 = vmatpush1.msra.mxu0 0.0
    %5417 = vmatprep.subr.mxu0 0.0
    %5418 = vmatpush1.msra.mxu0 0.0
    %5419 = vmatprep.subr.mxu0 0.0
    %5420 = vmatpush1.msra.mxu0 0.0
    %5421 = vmatprep.subr.mxu0 0.0
    %5422 = vmatpush1.msra.mxu0 0.0
    %5423 = vmatprep.subr.mxu0 0.0
    %5424 = vmatpush1.msra.mxu0 0.0
    %5425 = vmatprep.subr.mxu0 0.0
    %5426 = vmatpush1.msra.mxu0 0.0
    %5427 = vmatprep.subr.mxu0 0.0
    %5428 = vmatpush1.msra.mxu0 0.0
    %5429 = vmatprep.subr.mxu0 0.0
    %5430 = vmatpush1.msra.mxu0 0.0
    %5431 = vmatprep.subr.mxu0 0.0
    %5432 = vmatpush1.msra.mxu0 0.0
    %5433 = vmatprep.mubr.f32.mxu0 0.0
    %v5434 = vand.u32 %v5169, 4294901760
    %v5435 = vsub.f32 %v5169, %v5434
    %5436 = vmatmul.mubr.f32.gmra.mrb[0].mxu0 %v5435
    %v5437 = vpop.f32.mrb[0].mxu0
    %v5438 = vadd.f32 %v5354, %v5437
    %v5439 = vpop.f32.mrb[0].mxu0
    %5440 = vdwg.mxu0
    %5441 = vmatprep.subr.mxu0 0.0
    %v5442 = vand.u32 %v5149, 4294901760
    %5443 = vmatpush1.msra.mxu0 %v5442
    %5444 = vmatprep.subr.mxu0 0.0
    %v5445 = vand.u32 %v5150, 4294901760
    %5446 = vmatpush1.msra.mxu0 %v5445
    %5447 = vmatprep.subr.mxu0 0.0
    %v5448 = vand.u32 %v5151, 4294901760
    %5449 = vmatpush1.msra.mxu0 %v5448
    %5450 = vmatprep.subr.mxu0 0.0
    %v5451 = vand.u32 %v5152, 4294901760
    %5452 = vmatpush1.msra.mxu0 %v5451
    %5453 = vmatprep.subr.mxu0 0.0
    %v5454 = vand.u32 %v5153, 4294901760
    %5455 = vmatpush1.msra.mxu0 %v5454
    %5456 = vmatprep.subr.mxu0 0.0
    %v5457 = vand.u32 %v5173, 4294901760
    %5458 = vmatpush1.msra.mxu0 %v5457
    %5459 = vmatprep.subr.mxu0 0.0
    %5460 = vmatpush1.msra.mxu0 0.0
    %5461 = vmatprep.subr.mxu0 0.0
    %5462 = vmatpush1.msra.mxu0 0.0
    %5463 = vmatprep.subr.mxu0 0.0
    %5464 = vmatpush1.msra.mxu0 0.0
    %5465 = vmatprep.subr.mxu0 0.0
    %5466 = vmatpush1.msra.mxu0 0.0
    %5467 = vmatprep.subr.mxu0 0.0
    %5468 = vmatpush1.msra.mxu0 0.0
    %5469 = vmatprep.subr.mxu0 0.0
    %5470 = vmatpush1.msra.mxu0 0.0
    %5471 = vmatprep.subr.mxu0 0.0
    %5472 = vmatpush1.msra.mxu0 0.0
    %5473 = vmatprep.subr.mxu0 0.0
    %5474 = vmatpush1.msra.mxu0 0.0
    %5475 = vmatprep.subr.mxu0 0.0
    %5476 = vmatpush1.msra.mxu0 0.0
    %5477 = vmatprep.subr.mxu0 0.0
    %5478 = vmatpush1.msra.mxu0 0.0
    %5479 = vmatprep.subr.mxu0 0.0
    %5480 = vmatpush1.msra.mxu0 0.0
    %5481 = vmatprep.subr.mxu0 0.0
    %5482 = vmatpush1.msra.mxu0 0.0
    %5483 = vmatprep.subr.mxu0 0.0
    %5484 = vmatpush1.msra.mxu0 0.0
    %5485 = vmatprep.subr.mxu0 0.0
    %5486 = vmatpush1.msra.mxu0 0.0
    %5487 = vmatprep.subr.mxu0 0.0
    %5488 = vmatpush1.msra.mxu0 0.0
    %5489 = vmatprep.subr.mxu0 0.0
    %5490 = vmatpush1.msra.mxu0 0.0
    %5491 = vmatprep.subr.mxu0 0.0
    %5492 = vmatpush1.msra.mxu0 0.0
    %5493 = vmatprep.subr.mxu0 0.0
    %5494 = vmatpush1.msra.mxu0 0.0
    %5495 = vmatprep.subr.mxu0 0.0
    %5496 = vmatpush1.msra.mxu0 0.0
    %5497 = vmatprep.subr.mxu0 0.0
    %5498 = vmatpush1.msra.mxu0 0.0
    %5499 = vmatprep.subr.mxu0 0.0
    %5500 = vmatpush1.msra.mxu0 0.0
    %5501 = vmatprep.subr.mxu0 0.0
    %5502 = vmatpush1.msra.mxu0 0.0
    %5503 = vmatprep.subr.mxu0 0.0
    %5504 = vmatpush1.msra.mxu0 0.0
    %5505 = vmatprep.subr.mxu0 0.0
    %5506 = vmatpush1.msra.mxu0 0.0
    %5507 = vmatprep.subr.mxu0 0.0
    %5508 = vmatpush1.msra.mxu0 0.0
    %5509 = vmatprep.subr.mxu0 0.0
    %5510 = vmatpush1.msra.mxu0 0.0
    %5511 = vmatprep.mubr.f32.mxu0 0.0
    %v5512 = vand.u32 %v5169, 4294901760
    %v5513 = vsub.f32 %v5169, %v5512
    %v5514 = vand.u32 %v5513, 4294901760
    %5515 = vmatmul.mubr.f32.gmra.mrb[0].mxu0 %v5514
    %v5516 = vpop.f32.mrb[0].mxu0
    %v5517 = vadd.f32 %v5438, %v5516
    %v5518 = vpop.f32.mrb[0].mxu0
    %5519 = vdwg.mxu0
    %5520 = vmatprep.subr.mxu0 0.0
    %v5521 = vand.u32 %v5149, 4294901760
    %v5522 = vsub.f32 %v5149, %v5521
    %v5523 = vand.u32 %v5522, 4294901760
    %5524 = vmatpush1.msra.mxu0 %v5523
    %5525 = vmatprep.subr.mxu0 0.0
    %v5526 = vand.u32 %v5150, 4294901760
    %v5527 = vsub.f32 %v5150, %v5526
    %v5528 = vand.u32 %v5527, 4294901760
    %5529 = vmatpush1.msra.mxu0 %v5528
    %5530 = vmatprep.subr.mxu0 0.0
    %v5531 = vand.u32 %v5151, 4294901760
    %v5532 = vsub.f32 %v5151, %v5531
    %v5533 = vand.u32 %v5532, 4294901760
    %5534 = vmatpush1.msra.mxu0 %v5533
    %5535 = vmatprep.subr.mxu0 0.0
    %v5536 = vand.u32 %v5152, 4294901760
    %v5537 = vsub.f32 %v5152, %v5536
    %v5538 = vand.u32 %v5537, 4294901760
    %5539 = vmatpush1.msra.mxu0 %v5538
    %5540 = vmatprep.subr.mxu0 0.0
    %v5541 = vand.u32 %v5153, 4294901760
    %v5542 = vsub.f32 %v5153, %v5541
    %v5543 = vand.u32 %v5542, 4294901760
    %5544 = vmatpush1.msra.mxu0 %v5543
    %5545 = vmatprep.subr.mxu0 0.0
    %v5546 = vand.u32 %v5173, 4294901760
    %v5547 = vsub.f32 %v5173, %v5546
    %v5548 = vand.u32 %v5547, 4294901760
    %5549 = vmatpush1.msra.mxu0 %v5548
    %5550 = vmatprep.subr.mxu0 0.0
    %5551 = vmatpush1.msra.mxu0 0.0
    %5552 = vmatprep.subr.mxu0 0.0
    %5553 = vmatpush1.msra.mxu0 0.0
    %5554 = vmatprep.subr.mxu0 0.0
    %5555 = vmatpush1.msra.mxu0 0.0
    %5556 = vmatprep.subr.mxu0 0.0
    %5557 = vmatpush1.msra.mxu0 0.0
    %5558 = vmatprep.subr.mxu0 0.0
    %5559 = vmatpush1.msra.mxu0 0.0
    %5560 = vmatprep.subr.mxu0 0.0
    %5561 = vmatpush1.msra.mxu0 0.0
    %5562 = vmatprep.subr.mxu0 0.0
    %5563 = vmatpush1.msra.mxu0 0.0
    %5564 = vmatprep.subr.mxu0 0.0
    %5565 = vmatpush1.msra.mxu0 0.0
    %5566 = vmatprep.subr.mxu0 0.0
    %5567 = vmatpush1.msra.mxu0 0.0
    %5568 = vmatprep.subr.mxu0 0.0
    %5569 = vmatpush1.msra.mxu0 0.0
    %5570 = vmatprep.subr.mxu0 0.0
    %5571 = vmatpush1.msra.mxu0 0.0
    %5572 = vmatprep.subr.mxu0 0.0
    %5573 = vmatpush1.msra.mxu0 0.0
    %5574 = vmatprep.subr.mxu0 0.0
    %5575 = vmatpush1.msra.mxu0 0.0
    %5576 = vmatprep.subr.mxu0 0.0
    %5577 = vmatpush1.msra.mxu0 0.0
    %5578 = vmatprep.subr.mxu0 0.0
    %5579 = vmatpush1.msra.mxu0 0.0
    %5580 = vmatprep.subr.mxu0 0.0
    %5581 = vmatpush1.msra.mxu0 0.0
    %5582 = vmatprep.subr.mxu0 0.0
    %5583 = vmatpush1.msra.mxu0 0.0
    %5584 = vmatprep.subr.mxu0 0.0
    %5585 = vmatpush1.msra.mxu0 0.0
    %5586 = vmatprep.subr.mxu0 0.0
    %5587 = vmatpush1.msra.mxu0 0.0
    %5588 = vmatprep.subr.mxu0 0.0
    %5589 = vmatpush1.msra.mxu0 0.0
    %5590 = vmatprep.subr.mxu0 0.0
    %5591 = vmatpush1.msra.mxu0 0.0
    %5592 = vmatprep.subr.mxu0 0.0
    %5593 = vmatpush1.msra.mxu0 0.0
    %5594 = vmatprep.subr.mxu0 0.0
    %5595 = vmatpush1.msra.mxu0 0.0
    %5596 = vmatprep.subr.mxu0 0.0
    %5597 = vmatpush1.msra.mxu0 0.0
    %5598 = vmatprep.subr.mxu0 0.0
    %5599 = vmatpush1.msra.mxu0 0.0
    %5600 = vmatprep.subr.mxu0 0.0
    %5601 = vmatpush1.msra.mxu0 0.0
    %5602 = vmatprep.mubr.f32.mxu0 0.0
    %v5603 = vand.u32 %v5169, 4294901760
    %5604 = vmatmul.mubr.f32.gmra.mrb[0].mxu0 %v5603
    %v5605 = vpop.f32.mrb[0].mxu0
    %v5606 = vadd.f32 %v5517, %v5605
    %v5607 = vpop.f32.mrb[0].mxu0
    %5608 = vdwg.mxu0
    %5609 = vmatprep.subr.mxu0 0.0
    %v5610 = vand.u32 %v5149, 4294901760
    %5611 = vmatpush1.msra.mxu0 %v5610
    %5612 = vmatprep.subr.mxu0 0.0
    %v5613 = vand.u32 %v5150, 4294901760
    %5614 = vmatpush1.msra.mxu0 %v5613
    %5615 = vmatprep.subr.mxu0 0.0
    %v5616 = vand.u32 %v5151, 4294901760
    %5617 = vmatpush1.msra.mxu0 %v5616
    %5618 = vmatprep.subr.mxu0 0.0
    %v5619 = vand.u32 %v5152, 4294901760
    %5620 = vmatpush1.msra.mxu0 %v5619
    %5621 = vmatprep.subr.mxu0 0.0
    %v5622 = vand.u32 %v5153, 4294901760
    %5623 = vmatpush1.msra.mxu0 %v5622
    %5624 = vmatprep.subr.mxu0 0.0
    %v5625 = vand.u32 %v5173, 4294901760
    %5626 = vmatpush1.msra.mxu0 %v5625
    %5627 = vmatprep.subr.mxu0 0.0
    %5628 = vmatpush1.msra.mxu0 0.0
    %5629 = vmatprep.subr.mxu0 0.0
    %5630 = vmatpush1.msra.mxu0 0.0
    %5631 = vmatprep.subr.mxu0 0.0
    %5632 = vmatpush1.msra.mxu0 0.0
    %5633 = vmatprep.subr.mxu0 0.0
    %5634 = vmatpush1.msra.mxu0 0.0
    %5635 = vmatprep.subr.mxu0 0.0
    %5636 = vmatpush1.msra.mxu0 0.0
    %5637 = vmatprep.subr.mxu0 0.0
    %5638 = vmatpush1.msra.mxu0 0.0
    %5639 = vmatprep.subr.mxu0 0.0
    %5640 = vmatpush1.msra.mxu0 0.0
    %5641 = vmatprep.subr.mxu0 0.0
    %5642 = vmatpush1.msra.mxu0 0.0
    %5643 = vmatprep.subr.mxu0 0.0
    %5644 = vmatpush1.msra.mxu0 0.0
    %5645 = vmatprep.subr.mxu0 0.0
    %5646 = vmatpush1.msra.mxu0 0.0
    %5647 = vmatprep.subr.mxu0 0.0
    %5648 = vmatpush1.msra.mxu0 0.0
    %5649 = vmatprep.subr.mxu0 0.0
    %5650 = vmatpush1.msra.mxu0 0.0
    %5651 = vmatprep.subr.mxu0 0.0
    %5652 = vmatpush1.msra.mxu0 0.0
    %5653 = vmatprep.subr.mxu0 0.0
    %5654 = vmatpush1.msra.mxu0 0.0
    %5655 = vmatprep.subr.mxu0 0.0
    %5656 = vmatpush1.msra.mxu0 0.0
    %5657 = vmatprep.subr.mxu0 0.0
    %5658 = vmatpush1.msra.mxu0 0.0
    %5659 = vmatprep.subr.mxu0 0.0
    %5660 = vmatpush1.msra.mxu0 0.0
    %5661 = vmatprep.subr.mxu0 0.0
    %5662 = vmatpush1.msra.mxu0 0.0
    %5663 = vmatprep.subr.mxu0 0.0
    %5664 = vmatpush1.msra.mxu0 0.0
    %5665 = vmatprep.subr.mxu0 0.0
    %5666 = vmatpush1.msra.mxu0 0.0
    %5667 = vmatprep.subr.mxu0 0.0
    %5668 = vmatpush1.msra.mxu0 0.0
    %5669 = vmatprep.subr.mxu0 0.0
    %5670 = vmatpush1.msra.mxu0 0.0
    %5671 = vmatprep.subr.mxu0 0.0
    %5672 = vmatpush1.msra.mxu0 0.0
    %5673 = vmatprep.subr.mxu0 0.0
    %5674 = vmatpush1.msra.mxu0 0.0
    %5675 = vmatprep.subr.mxu0 0.0
    %5676 = vmatpush1.msra.mxu0 0.0
    %5677 = vmatprep.subr.mxu0 0.0
    %5678 = vmatpush1.msra.mxu0 0.0
    %5679 = vmatprep.mubr.f32.mxu0 0.0
    %v5680 = vand.u32 %v5169, 4294901760
    %5681 = vmatmul.mubr.f32.gmra.mrb[0].mxu0 %v5680
    %v5682 = vpop.f32.mrb[0].mxu0
    %v5683 = vadd.f32 %v5606, %v5682
    %v5684 = vpop.f32.mrb[0].mxu0
    %5685 = vdwg.mxu0
    %5687 = vrot.lane.b32.xlu0 %v5683, 127
    %v5688 = vpop.permute.xlu0 %5687
    %v5690 = vmax.f32 %v5683, %v5688
    %v5692 = vlaneseq
    %v5693 = vshrl.u32 %v5692, 7
    %v5694 = vsub.s32 0, %v5693
    %v5695 = vrot.slane %v5157, %v5694
    %vm5697 = vcmask 89088
    %v5699 = vsel %vm5697, %v5690, 0
    %v5702 = vsel %vm5171, %v5156, 0
    %5704 = vmatprep.subr.mxu0 0.0
    %v5705 = vand.u32 %v5155, 4294901760
    %5706 = vmatpush1.msra.mxu0 %v5705
    %5707 = vmatprep.subr.mxu0 0.0
    %v5708 = vand.u32 %v5702, 4294901760
    %5709 = vmatpush1.msra.mxu0 %v5708
    %5710 = vmatprep.subr.mxu0 0.0
    %5711 = vmatpush1.msra.mxu0 0.0
    %5712 = vmatprep.subr.mxu0 0.0
    %5713 = vmatpush1.msra.mxu0 0.0
    %5714 = vmatprep.subr.mxu0 0.0
    %5715 = vmatpush1.msra.mxu0 0.0
    %5716 = vmatprep.subr.mxu0 0.0
    %5717 = vmatpush1.msra.mxu0 0.0
    %5718 = vmatprep.subr.mxu0 0.0
    %5719 = vmatpush1.msra.mxu0 0.0
    %5720 = vmatprep.subr.mxu0 0.0
    %5721 = vmatpush1.msra.mxu0 0.0
    %5722 = vmatprep.subr.mxu0 0.0
    %5723 = vmatpush1.msra.mxu0 0.0
    %5724 = vmatprep.subr.mxu0 0.0
    %5725 = vmatpush1.msra.mxu0 0.0
    %5726 = vmatprep.subr.mxu0 0.0
    %5727 = vmatpush1.msra.mxu0 0.0
    %5728 = vmatprep.subr.mxu0 0.0
    %5729 = vmatpush1.msra.mxu0 0.0
    %5730 = vmatprep.subr.mxu0 0.0
    %5731 = vmatpush1.msra.mxu0 0.0
    %5732 = vmatprep.subr.mxu0 0.0
    %5733 = vmatpush1.msra.mxu0 0.0
    %5734 = vmatprep.subr.mxu0 0.0
    %5735 = vmatpush1.msra.mxu0 0.0
    %5736 = vmatprep.subr.mxu0 0.0
    %5737 = vmatpush1.msra.mxu0 0.0
    %5738 = vmatprep.subr.mxu0 0.0
    %5739 = vmatpush1.msra.mxu0 0.0
    %5740 = vmatprep.subr.mxu0 0.0
    %5741 = vmatpush1.msra.mxu0 0.0
    %5742 = vmatprep.subr.mxu0 0.0
    %5743 = vmatpush1.msra.mxu0 0.0
    %5744 = vmatprep.subr.mxu0 0.0
    %5745 = vmatpush1.msra.mxu0 0.0
    %5746 = vmatprep.subr.mxu0 0.0
    %5747 = vmatpush1.msra.mxu0 0.0
    %5748 = vmatprep.subr.mxu0 0.0
    %5749 = vmatpush1.msra.mxu0 0.0
    %5750 = vmatprep.subr.mxu0 0.0
    %5751 = vmatpush1.msra.mxu0 0.0
    %5752 = vmatprep.subr.mxu0 0.0
    %5753 = vmatpush1.msra.mxu0 0.0
    %5754 = vmatprep.subr.mxu0 0.0
    %5755 = vmatpush1.msra.mxu0 0.0
    %5756 = vmatprep.subr.mxu0 0.0
    %5757 = vmatpush1.msra.mxu0 0.0
    %5758 = vmatprep.subr.mxu0 0.0
    %5759 = vmatpush1.msra.mxu0 0.0
    %5760 = vmatprep.subr.mxu0 0.0
    %5761 = vmatpush1.msra.mxu0 0.0
    %5762 = vmatprep.subr.mxu0 0.0
    %5763 = vmatpush1.msra.mxu0 0.0
    %5764 = vmatprep.subr.mxu0 0.0
    %5765 = vmatpush1.msra.mxu0 0.0
    %5766 = vmatprep.subr.mxu0 0.0
    %5767 = vmatpush1.msra.mxu0 0.0
    %5768 = vmatprep.subr.mxu0 0.0
    %5769 = vmatpush1.msra.mxu0 0.0
    %5770 = vmatprep.mubr.f32.mxu0 0.0
    %v5771 = vand.u32 %v5699, 4294901760
    %v5772 = vsub.f32 %v5699, %v5771
    %v5773 = vand.u32 %v5772, 4294901760
    %v5774 = vsub.f32 %v5772, %v5773
    %v5775 = vand.u32 %v5774, 4294901760
    %5776 = vmatmul.mubr.f32.gmra.mrb[0].mxu0 %v5775
    %v5777 = vpop.f32.mrb[0].mxu0
    %v5778 = vadd.f32 %v5695, %v5777
    %v5779 = vpop.f32.mrb[0].mxu0
    %5780 = vdwg.mxu0
    %5781 = vmatprep.subr.mxu0 0.0
    %v5782 = vand.u32 %v5155, 4294901760
    %v5783 = vsub.f32 %v5155, %v5782
    %v5784 = vand.u32 %v5783, 4294901760
    %v5785 = vsub.f32 %v5783, %v5784
    %v5786 = vand.u32 %v5785, 4294901760
    %5787 = vmatpush1.msra.mxu0 %v5786
    %5788 = vmatprep.subr.mxu0 0.0
    %v5789 = vand.u32 %v5702, 4294901760
    %v5790 = vsub.f32 %v5702, %v5789
    %v5791 = vand.u32 %v5790, 4294901760
    %v5792 = vsub.f32 %v5790, %v5791
    %v5793 = vand.u32 %v5792, 4294901760
    %5794 = vmatpush1.msra.mxu0 %v5793
    %5795 = vmatprep.subr.mxu0 0.0
    %5796 = vmatpush1.msra.mxu0 0.0
    %5797 = vmatprep.subr.mxu0 0.0
    %5798 = vmatpush1.msra.mxu0 0.0
    %5799 = vmatprep.subr.mxu0 0.0
    %5800 = vmatpush1.msra.mxu0 0.0
    %5801 = vmatprep.subr.mxu0 0.0
    %5802 = vmatpush1.msra.mxu0 0.0
    %5803 = vmatprep.subr.mxu0 0.0
    %5804 = vmatpush1.msra.mxu0 0.0
    %5805 = vmatprep.subr.mxu0 0.0
    %5806 = vmatpush1.msra.mxu0 0.0
    %5807 = vmatprep.subr.mxu0 0.0
    %5808 = vmatpush1.msra.mxu0 0.0
    %5809 = vmatprep.subr.mxu0 0.0
    %5810 = vmatpush1.msra.mxu0 0.0
    %5811 = vmatprep.subr.mxu0 0.0
    %5812 = vmatpush1.msra.mxu0 0.0
    %5813 = vmatprep.subr.mxu0 0.0
    %5814 = vmatpush1.msra.mxu0 0.0
    %5815 = vmatprep.subr.mxu0 0.0
    %5816 = vmatpush1.msra.mxu0 0.0
    %5817 = vmatprep.subr.mxu0 0.0
    %5818 = vmatpush1.msra.mxu0 0.0
    %5819 = vmatprep.subr.mxu0 0.0
    %5820 = vmatpush1.msra.mxu0 0.0
    %5821 = vmatprep.subr.mxu0 0.0
    %5822 = vmatpush1.msra.mxu0 0.0
    %5823 = vmatprep.subr.mxu0 0.0
    %5824 = vmatpush1.msra.mxu0 0.0
    %5825 = vmatprep.subr.mxu0 0.0
    %5826 = vmatpush1.msra.mxu0 0.0
    %5827 = vmatprep.subr.mxu0 0.0
    %5828 = vmatpush1.msra.mxu0 0.0
    %5829 = vmatprep.subr.mxu0 0.0
    %5830 = vmatpush1.msra.mxu0 0.0
    %5831 = vmatprep.subr.mxu0 0.0
    %5832 = vmatpush1.msra.mxu0 0.0
    %5833 = vmatprep.subr.mxu0 0.0
    %5834 = vmatpush1.msra.mxu0 0.0
    %5835 = vmatprep.subr.mxu0 0.0
    %5836 = vmatpush1.msra.mxu0 0.0
    %5837 = vmatprep.subr.mxu0 0.0
    %5838 = vmatpush1.msra.mxu0 0.0
    %5839 = vmatprep.subr.mxu0 0.0
    %5840 = vmatpush1.msra.mxu0 0.0
    %5841 = vmatprep.subr.mxu0 0.0
    %5842 = vmatpush1.msra.mxu0 0.0
    %5843 = vmatprep.subr.mxu0 0.0
    %5844 = vmatpush1.msra.mxu0 0.0
    %5845 = vmatprep.subr.mxu0 0.0
    %5846 = vmatpush1.msra.mxu0 0.0
    %5847 = vmatprep.subr.mxu0 0.0
    %5848 = vmatpush1.msra.mxu0 0.0
    %5849 = vmatprep.subr.mxu0 0.0
    %5850 = vmatpush1.msra.mxu0 0.0
    %5851 = vmatprep.subr.mxu0 0.0
    %5852 = vmatpush1.msra.mxu0 0.0
    %5853 = vmatprep.subr.mxu0 0.0
    %5854 = vmatpush1.msra.mxu0 0.0
    %5855 = vmatprep.mubr.f32.mxu0 0.0
    %v5856 = vand.u32 %v5699, 4294901760
    %5857 = vmatmul.mubr.f32.gmra.mrb[0].mxu0 %v5856
    %v5858 = vpop.f32.mrb[0].mxu0
    %v5859 = vadd.f32 %v5778, %v5858
    %v5860 = vpop.f32.mrb[0].mxu0
    %5861 = vdwg.mxu0
    %5862 = vmatprep.subr.mxu0 0.0
    %v5863 = vand.u32 %v5155, 4294901760
    %v5864 = vsub.f32 %v5155, %v5863
    %5865 = vmatpush1.msra.mxu0 %v5864
    %5866 = vmatprep.subr.mxu0 0.0
    %v5867 = vand.u32 %v5702, 4294901760
    %v5868 = vsub.f32 %v5702, %v5867
    %5869 = vmatpush1.msra.mxu0 %v5868
    %5870 = vmatprep.subr.mxu0 0.0
    %5871 = vmatpush1.msra.mxu0 0.0
    %5872 = vmatprep.subr.mxu0 0.0
    %5873 = vmatpush1.msra.mxu0 0.0
    %5874 = vmatprep.subr.mxu0 0.0
    %5875 = vmatpush1.msra.mxu0 0.0
    %5876 = vmatprep.subr.mxu0 0.0
    %5877 = vmatpush1.msra.mxu0 0.0
    %5878 = vmatprep.subr.mxu0 0.0
    %5879 = vmatpush1.msra.mxu0 0.0
    %5880 = vmatprep.subr.mxu0 0.0
    %5881 = vmatpush1.msra.mxu0 0.0
    %5882 = vmatprep.subr.mxu0 0.0
    %5883 = vmatpush1.msra.mxu0 0.0
    %5884 = vmatprep.subr.mxu0 0.0
    %5885 = vmatpush1.msra.mxu0 0.0
    %5886 = vmatprep.subr.mxu0 0.0
    %5887 = vmatpush1.msra.mxu0 0.0
    %5888 = vmatprep.subr.mxu0 0.0
    %5889 = vmatpush1.msra.mxu0 0.0
    %5890 = vmatprep.subr.mxu0 0.0
    %5891 = vmatpush1.msra.mxu0 0.0
    %5892 = vmatprep.subr.mxu0 0.0
    %5893 = vmatpush1.msra.mxu0 0.0
    %5894 = vmatprep.subr.mxu0 0.0
    %5895 = vmatpush1.msra.mxu0 0.0
    %5896 = vmatprep.subr.mxu0 0.0
    %5897 = vmatpush1.msra.mxu0 0.0
    %5898 = vmatprep.subr.mxu0 0.0
    %5899 = vmatpush1.msra.mxu0 0.0
    %5900 = vmatprep.subr.mxu0 0.0
    %5901 = vmatpush1.msra.mxu0 0.0
    %5902 = vmatprep.subr.mxu0 0.0
    %5903 = vmatpush1.msra.mxu0 0.0
    %5904 = vmatprep.subr.mxu0 0.0
    %5905 = vmatpush1.msra.mxu0 0.0
    %5906 = vmatprep.subr.mxu0 0.0
    %5907 = vmatpush1.msra.mxu0 0.0
    %5908 = vmatprep.subr.mxu0 0.0
    %5909 = vmatpush1.msra.mxu0 0.0
    %5910 = vmatprep.subr.mxu0 0.0
    %5911 = vmatpush1.msra.mxu0 0.0
    %5912 = vmatprep.subr.mxu0 0.0
    %5913 = vmatpush1.msra.mxu0 0.0
    %5914 = vmatprep.subr.mxu0 0.0
    %5915 = vmatpush1.msra.mxu0 0.0
    %5916 = vmatprep.subr.mxu0 0.0
    %5917 = vmatpush1.msra.mxu0 0.0
    %5918 = vmatprep.subr.mxu0 0.0
    %5919 = vmatpush1.msra.mxu0 0.0
    %5920 = vmatprep.subr.mxu0 0.0
    %5921 = vmatpush1.msra.mxu0 0.0
    %5922 = vmatprep.subr.mxu0 0.0
    %5923 = vmatpush1.msra.mxu0 0.0
    %5924 = vmatprep.subr.mxu0 0.0
    %5925 = vmatpush1.msra.mxu0 0.0
    %5926 = vmatprep.subr.mxu0 0.0
    %5927 = vmatpush1.msra.mxu0 0.0
    %5928 = vmatprep.subr.mxu0 0.0
    %5929 = vmatpush1.msra.mxu0 0.0
    %5930 = vmatprep.mubr.f32.mxu0 0.0
    %v5931 = vand.u32 %v5699, 4294901760
    %v5932 = vsub.f32 %v5699, %v5931
    %5933 = vmatmul.mubr.f32.gmra.mrb[0].mxu0 %v5932
    %v5934 = vpop.f32.mrb[0].mxu0
    %v5935 = vadd.f32 %v5859, %v5934
    %v5936 = vpop.f32.mrb[0].mxu0
    %5937 = vdwg.mxu0
    %5938 = vmatprep.subr.mxu0 0.0
    %v5939 = vand.u32 %v5155, 4294901760
    %5940 = vmatpush1.msra.mxu0 %v5939
    %5941 = vmatprep.subr.mxu0 0.0
    %v5942 = vand.u32 %v5702, 4294901760
    %5943 = vmatpush1.msra.mxu0 %v5942
    %5944 = vmatprep.subr.mxu0 0.0
    %5945 = vmatpush1.msra.mxu0 0.0
    %5946 = vmatprep.subr.mxu0 0.0
    %5947 = vmatpush1.msra.mxu0 0.0
    %5948 = vmatprep.subr.mxu0 0.0
    %5949 = vmatpush1.msra.mxu0 0.0
    %5950 = vmatprep.subr.mxu0 0.0
    %5951 = vmatpush1.msra.mxu0 0.0
    %5952 = vmatprep.subr.mxu0 0.0
    %5953 = vmatpush1.msra.mxu0 0.0
    %5954 = vmatprep.subr.mxu0 0.0
    %5955 = vmatpush1.msra.mxu0 0.0
    %5956 = vmatprep.subr.mxu0 0.0
    %5957 = vmatpush1.msra.mxu0 0.0
    %5958 = vmatprep.subr.mxu0 0.0
    %5959 = vmatpush1.msra.mxu0 0.0
    %5960 = vmatprep.subr.mxu0 0.0
    %5961 = vmatpush1.msra.mxu0 0.0
    %5962 = vmatprep.subr.mxu0 0.0
    %5963 = vmatpush1.msra.mxu0 0.0
    %5964 = vmatprep.subr.mxu0 0.0
    %5965 = vmatpush1.msra.mxu0 0.0
    %5966 = vmatprep.subr.mxu0 0.0
    %5967 = vmatpush1.msra.mxu0 0.0
    %5968 = vmatprep.subr.mxu0 0.0
    %5969 = vmatpush1.msra.mxu0 0.0
    %5970 = vmatprep.subr.mxu0 0.0
    %5971 = vmatpush1.msra.mxu0 0.0
    %5972 = vmatprep.subr.mxu0 0.0
    %5973 = vmatpush1.msra.mxu0 0.0
    %5974 = vmatprep.subr.mxu0 0.0
    %5975 = vmatpush1.msra.mxu0 0.0
    %5976 = vmatprep.subr.mxu0 0.0
    %5977 = vmatpush1.msra.mxu0 0.0
    %5978 = vmatprep.subr.mxu0 0.0
    %5979 = vmatpush1.msra.mxu0 0.0
    %5980 = vmatprep.subr.mxu0 0.0
    %5981 = vmatpush1.msra.mxu0 0.0
    %5982 = vmatprep.subr.mxu0 0.0
    %5983 = vmatpush1.msra.mxu0 0.0
    %5984 = vmatprep.subr.mxu0 0.0
    %5985 = vmatpush1.msra.mxu0 0.0
    %5986 = vmatprep.subr.mxu0 0.0
    %5987 = vmatpush1.msra.mxu0 0.0
    %5988 = vmatprep.subr.mxu0 0.0
    %5989 = vmatpush1.msra.mxu0 0.0
    %5990 = vmatprep.subr.mxu0 0.0
    %5991 = vmatpush1.msra.mxu0 0.0
    %5992 = vmatprep.subr.mxu0 0.0
    %5993 = vmatpush1.msra.mxu0 0.0
    %5994 = vmatprep.subr.mxu0 0.0
    %5995 = vmatpush1.msra.mxu0 0.0
    %5996 = vmatprep.subr.mxu0 0.0
    %5997 = vmatpush1.msra.mxu0 0.0
    %5998 = vmatprep.subr.mxu0 0.0
    %5999 = vmatpush1.msra.mxu0 0.0
    %6000 = vmatprep.subr.mxu0 0.0
    %6001 = vmatpush1.msra.mxu0 0.0
    %6002 = vmatprep.subr.mxu0 0.0
    %6003 = vmatpush1.msra.mxu0 0.0
    %6004 = vmatprep.mubr.f32.mxu0 0.0
    %v6005 = vand.u32 %v5699, 4294901760
    %v6006 = vsub.f32 %v5699, %v6005
    %v6007 = vand.u32 %v6006, 4294901760
    %6008 = vmatmul.mubr.f32.gmra.mrb[0].mxu0 %v6007
    %v6009 = vpop.f32.mrb[0].mxu0
    %v6010 = vadd.f32 %v5935, %v6009
    %v6011 = vpop.f32.mrb[0].mxu0
    %6012 = vdwg.mxu0
    %6013 = vmatprep.subr.mxu0 0.0
    %v6014 = vand.u32 %v5155, 4294901760
    %v6015 = vsub.f32 %v5155, %v6014
    %v6016 = vand.u32 %v6015, 4294901760
    %6017 = vmatpush1.msra.mxu0 %v6016
    %6018 = vmatprep.subr.mxu0 0.0
    %v6019 = vand.u32 %v5702, 4294901760
    %v6020 = vsub.f32 %v5702, %v6019
    %v6021 = vand.u32 %v6020, 4294901760
    %6022 = vmatpush1.msra.mxu0 %v6021
    %6023 = vmatprep.subr.mxu0 0.0
    %6024 = vmatpush1.msra.mxu0 0.0
    %6025 = vmatprep.subr.mxu0 0.0
    %6026 = vmatpush1.msra.mxu0 0.0
    %6027 = vmatprep.subr.mxu0 0.0
    %6028 = vmatpush1.msra.mxu0 0.0
    %6029 = vmatprep.subr.mxu0 0.0
    %6030 = vmatpush1.msra.mxu0 0.0
    %6031 = vmatprep.subr.mxu0 0.0
    %6032 = vmatpush1.msra.mxu0 0.0
    %6033 = vmatprep.subr.mxu0 0.0
    %6034 = vmatpush1.msra.mxu0 0.0
    %6035 = vmatprep.subr.mxu0 0.0
    %6036 = vmatpush1.msra.mxu0 0.0
    %6037 = vmatprep.subr.mxu0 0.0
    %6038 = vmatpush1.msra.mxu0 0.0
    %6039 = vmatprep.subr.mxu0 0.0
    %6040 = vmatpush1.msra.mxu0 0.0
    %6041 = vmatprep.subr.mxu0 0.0
    %6042 = vmatpush1.msra.mxu0 0.0
    %6043 = vmatprep.subr.mxu0 0.0
    %6044 = vmatpush1.msra.mxu0 0.0
    %6045 = vmatprep.subr.mxu0 0.0
    %6046 = vmatpush1.msra.mxu0 0.0
    %6047 = vmatprep.subr.mxu0 0.0
    %6048 = vmatpush1.msra.mxu0 0.0
    %6049 = vmatprep.subr.mxu0 0.0
    %6050 = vmatpush1.msra.mxu0 0.0
    %6051 = vmatprep.subr.mxu0 0.0
    %6052 = vmatpush1.msra.mxu0 0.0
    %6053 = vmatprep.subr.mxu0 0.0
    %6054 = vmatpush1.msra.mxu0 0.0
    %6055 = vmatprep.subr.mxu0 0.0
    %6056 = vmatpush1.msra.mxu0 0.0
    %6057 = vmatprep.subr.mxu0 0.0
    %6058 = vmatpush1.msra.mxu0 0.0
    %6059 = vmatprep.subr.mxu0 0.0
    %6060 = vmatpush1.msra.mxu0 0.0
    %6061 = vmatprep.subr.mxu0 0.0
    %6062 = vmatpush1.msra.mxu0 0.0
    %6063 = vmatprep.subr.mxu0 0.0
    %6064 = vmatpush1.msra.mxu0 0.0
    %6065 = vmatprep.subr.mxu0 0.0
    %6066 = vmatpush1.msra.mxu0 0.0
    %6067 = vmatprep.subr.mxu0 0.0
    %6068 = vmatpush1.msra.mxu0 0.0
    %6069 = vmatprep.subr.mxu0 0.0
    %6070 = vmatpush1.msra.mxu0 0.0
    %6071 = vmatprep.subr.mxu0 0.0
    %6072 = vmatpush1.msra.mxu0 0.0
    %6073 = vmatprep.subr.mxu0 0.0
    %6074 = vmatpush1.msra.mxu0 0.0
    %6075 = vmatprep.subr.mxu0 0.0
    %6076 = vmatpush1.msra.mxu0 0.0
    %6077 = vmatprep.subr.mxu0 0.0
    %6078 = vmatpush1.msra.mxu0 0.0
    %6079 = vmatprep.subr.mxu0 0.0
    %6080 = vmatpush1.msra.mxu0 0.0
    %6081 = vmatprep.subr.mxu0 0.0
    %6082 = vmatpush1.msra.mxu0 0.0
    %6083 = vmatprep.mubr.f32.mxu0 0.0
    %v6084 = vand.u32 %v5699, 4294901760
    %6085 = vmatmul.mubr.f32.gmra.mrb[0].mxu0 %v6084
    %v6086 = vpop.f32.mrb[0].mxu0
    %v6087 = vadd.f32 %v6010, %v6086
    %v6088 = vpop.f32.mrb[0].mxu0
    %6089 = vdwg.mxu0
    %6090 = vmatprep.subr.mxu0 0.0
    %v6091 = vand.u32 %v5155, 4294901760
    %6092 = vmatpush1.msra.mxu0 %v6091
    %6093 = vmatprep.subr.mxu0 0.0
    %v6094 = vand.u32 %v5702, 4294901760
    %6095 = vmatpush1.msra.mxu0 %v6094
    %6096 = vmatprep.subr.mxu0 0.0
    %6097 = vmatpush1.msra.mxu0 0.0
    %6098 = vmatprep.subr.mxu0 0.0
    %6099 = vmatpush1.msra.mxu0 0.0
    %6100 = vmatprep.subr.mxu0 0.0
    %6101 = vmatpush1.msra.mxu0 0.0
    %6102 = vmatprep.subr.mxu0 0.0
    %6103 = vmatpush1.msra.mxu0 0.0
    %6104 = vmatprep.subr.mxu0 0.0
    %6105 = vmatpush1.msra.mxu0 0.0
    %6106 = vmatprep.subr.mxu0 0.0
    %6107 = vmatpush1.msra.mxu0 0.0
    %6108 = vmatprep.subr.mxu0 0.0
    %6109 = vmatpush1.msra.mxu0 0.0
    %6110 = vmatprep.subr.mxu0 0.0
    %6111 = vmatpush1.msra.mxu0 0.0
    %6112 = vmatprep.subr.mxu0 0.0
    %6113 = vmatpush1.msra.mxu0 0.0
    %6114 = vmatprep.subr.mxu0 0.0
    %6115 = vmatpush1.msra.mxu0 0.0
    %6116 = vmatprep.subr.mxu0 0.0
    %6117 = vmatpush1.msra.mxu0 0.0
    %6118 = vmatprep.subr.mxu0 0.0
    %6119 = vmatpush1.msra.mxu0 0.0
    %6120 = vmatprep.subr.mxu0 0.0
    %6121 = vmatpush1.msra.mxu0 0.0
    %6122 = vmatprep.subr.mxu0 0.0
    %6123 = vmatpush1.msra.mxu0 0.0
    %6124 = vmatprep.subr.mxu0 0.0
    %6125 = vmatpush1.msra.mxu0 0.0
    %6126 = vmatprep.subr.mxu0 0.0
    %6127 = vmatpush1.msra.mxu0 0.0
    %6128 = vmatprep.subr.mxu0 0.0
    %6129 = vmatpush1.msra.mxu0 0.0
    %6130 = vmatprep.subr.mxu0 0.0
    %6131 = vmatpush1.msra.mxu0 0.0
    %6132 = vmatprep.subr.mxu0 0.0
    %6133 = vmatpush1.msra.mxu0 0.0
    %6134 = vmatprep.subr.mxu0 0.0
    %6135 = vmatpush1.msra.mxu0 0.0
    %6136 = vmatprep.subr.mxu0 0.0
    %6137 = vmatpush1.msra.mxu0 0.0
    %6138 = vmatprep.subr.mxu0 0.0
    %6139 = vmatpush1.msra.mxu0 0.0
    %6140 = vmatprep.subr.mxu0 0.0
    %6141 = vmatpush1.msra.mxu0 0.0
    %6142 = vmatprep.subr.mxu0 0.0
    %6143 = vmatpush1.msra.mxu0 0.0
    %6144 = vmatprep.subr.mxu0 0.0
    %6145 = vmatpush1.msra.mxu0 0.0
    %6146 = vmatprep.subr.mxu0 0.0
    %6147 = vmatpush1.msra.mxu0 0.0
    %6148 = vmatprep.subr.mxu0 0.0
    %6149 = vmatpush1.msra.mxu0 0.0
    %6150 = vmatprep.subr.mxu0 0.0
    %6151 = vmatpush1.msra.mxu0 0.0
    %6152 = vmatprep.subr.mxu0 0.0
    %6153 = vmatpush1.msra.mxu0 0.0
    %6154 = vmatprep.subr.mxu0 0.0
    %6155 = vmatpush1.msra.mxu0 0.0
    %6156 = vmatprep.mubr.f32.mxu0 0.0
    %v6157 = vand.u32 %v5699, 4294901760
    %6158 = vmatmul.mubr.f32.gmra.mrb[0].mxu0 %v6157
    %v6159 = vpop.f32.mrb[0].mxu0
    %v6160 = vadd.f32 %v6087, %v6159
    %v6161 = vpop.f32.mrb[0].mxu0
    %6162 = vdwg.mxu0
    %6163 = vst [vmem:[#allocation2] sm:$0xff] %v6160
    // Predicated region
    $region22: #{tpu_custom_call.1} parent=1 // pred_check
      _
    $region23: #{tpu_custom_call.1} parent=1 // pred_check_branch
      %6165 = sbr.rel (0) target = $region25
    $region24: #{tpu_custom_call.1} parent=1 // pred_region
      %s6167 = ssub.s32 128, 128
      %6168 = vsyncadd [#allocation3], %s6167
      %s6170 = sshll.u32 [#allocation2], 4
      %s6171 = int_to_ptr.vmem [resolvable:$true] %s6170
      %6173 = dma.vmem_to_hbm [thread:$0]  %s6171, 128, %s5, [#allocation3]
    $region25: #{tpu_custom_call.1} parent=1 // pred_fallthru
      _
    // Predicated region
    $region26: #{tpu_custom_call.1} parent=1 // pred_check
      _
    $region27: #{tpu_custom_call.1} parent=1 // pred_check_branch
      %6175 = sbr.rel (0) target = $region29
    $region28: #{tpu_custom_call.1} parent=1 // pred_region
      %6176 = dma.done [#allocation3], 128
    $region29: #{tpu_custom_call.1} parent=1 // pred_fallthru
      _
    %6177 = vsyncpa [#allocation3], 1

</llo_original>
